<compile_context>
chip_gen: v5e
topology: v5e:2x2
jax: 0.10.0
libtpu: 0.0.40
codegen_flags: <defaults>
</compile_context>

<pallas_src>
import jax
import jax.numpy as jnp
from jax.experimental import pallas as pl
from jax.experimental.pallas import tpu as pltpu


def _make_kernel(h, w, P, R):
    """Kernel for one (1, C, R*P, W) strip of R patch rows (all channels)."""
    # Patch-grid columns strictly inside the middle third. The float condition
    # j > w/3 and j < 2w/3 is exactly 3j > w and 3j < 2w for integers.
    inner_cols = [j for j in range(w) if (3 * j > w) and (3 * j < 2 * w)]
    outer_cols = [j for j in range(w) if j not in inner_cols]
    c0 = inner_cols[0] if inner_cols else 0
    c1 = inner_cols[-1] + 1 if inner_cols else 0   # contiguous [c0, c1)

    def kernel(x_ref, o_ref):
        # x_ref / o_ref: (1, C, R*P, W)
        i_blk = pl.program_id(1)                   # which block of R patch rows

        for r in range(R):                         # static unrolled loop
            hk = i_blk * R + r                     # patch-grid row index (traced)
            row_inner = jnp.logical_and(3 * hk > h, 3 * hk < 2 * h)
            rs = slice(r * P, (r + 1) * P)         # intra-block row span

            def transpose_col(wj):
                cs = slice(wj * P, (wj + 1) * P)
                patch = x_ref[0, :, rs, cs]                        # (C, P, P)
                o_ref[0, :, rs, cs] = jnp.swapaxes(patch, -1, -2)  # minor-most

            @pl.when(jnp.logical_not(row_inner))
            def _():
                # Outer patch row: every patch in the strip is transposed.
                for wj in range(w):
                    transpose_col(wj)

            @pl.when(row_inner)
            def _():
                # Inner patch row: middle-third columns pass through untouched
                # with one contiguous lane-dense copy; only the outer columns
                # need the transpose (skips XLU work for inner patches).
                if inner_cols:
                    cs = slice(c0 * P, c1 * P)
                    o_ref[0, :, rs, cs] = x_ref[0, :, rs, cs]
                for wj in outer_cols:
                    transpose_col(wj)

    return kernel


def patch_embed_outer_rotate(x, patch_size, *, target_block_bytes=2 * 1024 * 1024):
    """x: (B, C, H, W), H % patch_size == 0, W % patch_size == 0."""
    B, C, H, W = x.shape
    P = patch_size
    assert H % P == 0 and W % P == 0
    h, w = H // P, W // P

    # Rows-per-block: largest divisor of h whose (1, C, R*P, W) strip stays
    # under ~2 MiB, so in+out double-buffered blocks fit comfortably inside
    # the scoped VMEM budget on every TPU generation (incl. v7x's 64 MiB).
    itemsize = jnp.dtype(x.dtype).itemsize
    row_bytes = C * P * W * itemsize
    R = 1
    for d in range(1, h + 1):
        if h % d == 0 and d * row_bytes <= target_block_bytes:
            R = d

    spec = pl.BlockSpec((1, C, R * P, W), lambda b, i: (b, 0, i, 0))
    return pl.pallas_call(
        _make_kernel(h, w, P, R),
        out_shape=jax.ShapeDtypeStruct((B, C, H, W), x.dtype),
        grid=(B, h // R),
        in_specs=[spec],
        out_specs=spec,
        compiler_params=pltpu.CompilerParams(
            dimension_semantics=("parallel", "parallel"),
            vmem_limit_bytes=32 * 1024 * 1024,
        ),
    )(x)


def _reference(x, P):
    """Pure-JAX reference matching the PyTorch forward exactly."""
    B, C, H, W = x.shape
    h, w = H // P, W // P
    x6 = x.reshape(B, C, h, P, w, P)
    xt6 = jnp.swapaxes(x6, 3, 5)                   # intra-patch transpose
    ii = jnp.arange(h)[:, None]
    jj = jnp.arange(w)[None, :]
    inner = ((3 * ii > h) & (3 * ii < 2 * h) &
             (3 * jj > w) & (3 * jj < 2 * w))      # (h, w)
    mask = inner[None, None, :, None, :, None]
    return jnp.where(mask, x6, xt6).reshape(B, C, H, W)


if __name__ == "__main__":
    key = jax.random.PRNGKey(0)
    B, C, img, P = 2, 4, 32, 8                     # 4x4 grid of 8x8 patches
    x = jax.random.normal(key, (B, C, img, img), dtype=jnp.float32)

    # Default tiling: whole image per batch element in one block.
    out = patch_embed_outer_rotate(x, P)
    out = jax.block_until_ready(out)
    ref = _reference(x, P)
    assert out.shape == x.shape and out.dtype == x.dtype
    assert jnp.allclose(out, ref), "Pallas kernel mismatch vs reference"

    # Force R=1 to also exercise the multi-block row indexing path.
    out2 = patch_embed_outer_rotate(x, P, target_block_bytes=1)
    out2 = jax.block_until_ready(out2)
    assert jnp.allclose(out2, ref), "Pallas kernel (R=1 tiling) mismatch vs reference"

    print("KERNEL_OK")
</pallas_src>

<mosaic_0001>
module attributes {stable_mosaic.version = 11 : i64} {
  func.func @kernel(%arg0: i32, %arg1: i32, %arg2: memref<1x4x32x32xf32, #tpu.memory_space<vmem>>, %arg3: memref<1x4x32x32xf32, #tpu.memory_space<vmem>>) attributes {dimension_semantics = [#tpu.dimension_semantics<parallel>, #tpu.dimension_semantics<parallel>], iteration_bounds = array<i64: 2, 1>, scalar_prefetch = 0 : i64, scratch_operands = 0 : i64, tpu.core_type = #tpu.core_type<tc>, window_params = [{transform_indices = @transform_0, window_bounds = array<i64: 1, 4, 32, 32>}, {transform_indices = @transform_1, window_bounds = array<i64: 1, 4, 32, 32>}]} {
    %c4_i32 = arith.constant 4 : i32
    %0 = arith.muli %arg1, %c4_i32 : i32
    %c0_i32 = arith.constant 0 : i32
    %1 = arith.addi %0, %c0_i32 : i32
    %c3_i32 = arith.constant 3 : i32
    %2 = arith.muli %c3_i32, %1 : i32
    %c4_i32_0 = arith.constant 4 : i32
    %3 = arith.cmpi sgt, %2, %c4_i32_0 : i32
    %c3_i32_1 = arith.constant 3 : i32
    %4 = arith.muli %c3_i32_1, %1 : i32
    %c8_i32 = arith.constant 8 : i32
    %5 = arith.cmpi slt, %4, %c8_i32 : i32
    %6 = arith.andi %3, %5 : i1
    %true = arith.constant true
    %7 = arith.xori %6, %true : i1
    %8 = arith.extui %7 : i1 to i32
    %c0_i32_2 = arith.constant 0 : i32
    %9 = arith.cmpi ne, %8, %c0_i32_2 : i32
    scf.if %9 {
      %c0 = arith.constant 0 : index
      %c0_29 = arith.constant 0 : index
      %c0_30 = arith.constant 0 : index
      %c0_31 = arith.constant 0 : index
      %48 = vector.load %arg2[%c0, %c0_29, %c0_30, %c0_31] : memref<1x4x32x32xf32, #tpu.memory_space<vmem>>, vector<1x4x8x8xf32>
      %49 = vector.shape_cast %48 : vector<1x4x8x8xf32> to vector<4x8x8xf32>
      %50 = tpu.transpose %49, [0, 2, 1] : vector<4x8x8xf32> -> vector<4x8x8xf32>
      %c0_32 = arith.constant 0 : index
      %c0_33 = arith.constant 0 : index
      %c0_34 = arith.constant 0 : index
      %c0_35 = arith.constant 0 : index
      %51 = vector.load %arg3[%c0_32, %c0_33, %c0_34, %c0_35] : memref<1x4x32x32xf32, #tpu.memory_space<vmem>>, vector<1x4x8x8xf32>
      %52 = vector.shape_cast %51 : vector<1x4x8x8xf32> to vector<4x8x8xf32>
      %53 = vector.shape_cast %50 : vector<4x8x8xf32> to vector<1x4x8x8xf32>
      tpu.vector_store %arg3[%c0_32, %c0_33, %c0_34, %c0_35], %53 {strides = array<i32>} : memref<1x4x32x32xf32, #tpu.memory_space<vmem>>, vector<1x4x8x8xf32>,
      %c0_36 = arith.constant 0 : index
      %c0_37 = arith.constant 0 : index
      %c0_38 = arith.constant 0 : index
      %c8 = arith.constant 8 : index
      %54 = vector.load %arg2[%c0_36, %c0_37, %c0_38, %c8] : memref<1x4x32x32xf32, #tpu.memory_space<vmem>>, vector<1x4x8x8xf32>
      %55 = vector.shape_cast %54 : vector<1x4x8x8xf32> to vector<4x8x8xf32>
      %56 = tpu.transpose %55, [0, 2, 1] : vector<4x8x8xf32> -> vector<4x8x8xf32>
      %c0_39 = arith.constant 0 : index
      %c0_40 = arith.constant 0 : index
      %c0_41 = arith.constant 0 : index
      %c8_42 = arith.constant 8 : index
      %57 = vector.load %arg3[%c0_39, %c0_40, %c0_41, %c8_42] : memref<1x4x32x32xf32, #tpu.memory_space<vmem>>, vector<1x4x8x8xf32>
      %58 = vector.shape_cast %57 : vector<1x4x8x8xf32> to vector<4x8x8xf32>
      %59 = vector.shape_cast %56 : vector<4x8x8xf32> to vector<1x4x8x8xf32>
      tpu.vector_store %arg3[%c0_39, %c0_40, %c0_41, %c8_42], %59 {strides = array<i32>} : memref<1x4x32x32xf32, #tpu.memory_space<vmem>>, vector<1x4x8x8xf32>,
      %c0_43 = arith.constant 0 : index
      %c0_44 = arith.constant 0 : index
      %c0_45 = arith.constant 0 : index
      %c16 = arith.constant 16 : index
      %60 = vector.load %arg2[%c0_43, %c0_44, %c0_45, %c16] : memref<1x4x32x32xf32, #tpu.memory_space<vmem>>, vector<1x4x8x8xf32>
      %61 = vector.shape_cast %60 : vector<1x4x8x8xf32> to vector<4x8x8xf32>
      %62 = tpu.transpose %61, [0, 2, 1] : vector<4x8x8xf32> -> vector<4x8x8xf32>
      %c0_46 = arith.constant 0 : index
      %c0_47 = arith.constant 0 : index
      %c0_48 = arith.constant 0 : index
      %c16_49 = arith.constant 16 : index
      %63 = vector.load %arg3[%c0_46, %c0_47, %c0_48, %c16_49] : memref<1x4x32x32xf32, #tpu.memory_space<vmem>>, vector<1x4x8x8xf32>
      %64 = vector.shape_cast %63 : vector<1x4x8x8xf32> to vector<4x8x8xf32>
      %65 = vector.shape_cast %62 : vector<4x8x8xf32> to vector<1x4x8x8xf32>
      tpu.vector_store %arg3[%c0_46, %c0_47, %c0_48, %c16_49], %65 {strides = array<i32>} : memref<1x4x32x32xf32, #tpu.memory_space<vmem>>, vector<1x4x8x8xf32>,
      %c0_50 = arith.constant 0 : index
      %c0_51 = arith.constant 0 : index
      %c0_52 = arith.constant 0 : index
      %c24 = arith.constant 24 : index
      %66 = vector.load %arg2[%c0_50, %c0_51, %c0_52, %c24] : memref<1x4x32x32xf32, #tpu.memory_space<vmem>>, vector<1x4x8x8xf32>
      %67 = vector.shape_cast %66 : vector<1x4x8x8xf32> to vector<4x8x8xf32>
      %68 = tpu.transpose %67, [0, 2, 1] : vector<4x8x8xf32> -> vector<4x8x8xf32>
      %c0_53 = arith.constant 0 : index
      %c0_54 = arith.constant 0 : index
      %c0_55 = arith.constant 0 : index
      %c24_56 = arith.constant 24 : index
      %69 = vector.load %arg3[%c0_53, %c0_54, %c0_55, %c24_56] : memref<1x4x32x32xf32, #tpu.memory_space<vmem>>, vector<1x4x8x8xf32>
      %70 = vector.shape_cast %69 : vector<1x4x8x8xf32> to vector<4x8x8xf32>
      %71 = vector.shape_cast %68 : vector<4x8x8xf32> to vector<1x4x8x8xf32>
      tpu.vector_store %arg3[%c0_53, %c0_54, %c0_55, %c24_56], %71 {strides = array<i32>} : memref<1x4x32x32xf32, #tpu.memory_space<vmem>>, vector<1x4x8x8xf32>,
    } else {
    }
    %10 = arith.extui %6 : i1 to i32
    %c0_i32_3 = arith.constant 0 : i32
    %11 = arith.cmpi ne, %10, %c0_i32_3 : i32
    scf.if %11 {
      %c0 = arith.constant 0 : index
      %c0_29 = arith.constant 0 : index
      %c0_30 = arith.constant 0 : index
      %c16 = arith.constant 16 : index
      %48 = vector.load %arg2[%c0, %c0_29, %c0_30, %c16] : memref<1x4x32x32xf32, #tpu.memory_space<vmem>>, vector<1x4x8x8xf32>
      %49 = vector.shape_cast %48 : vector<1x4x8x8xf32> to vector<4x8x8xf32>
      %c0_31 = arith.constant 0 : index
      %c0_32 = arith.constant 0 : index
      %c0_33 = arith.constant 0 : index
      %c16_34 = arith.constant 16 : index
      %50 = vector.load %arg3[%c0_31, %c0_32, %c0_33, %c16_34] : memref<1x4x32x32xf32, #tpu.memory_space<vmem>>, vector<1x4x8x8xf32>
      %51 = vector.shape_cast %50 : vector<1x4x8x8xf32> to vector<4x8x8xf32>
      %52 = vector.shape_cast %49 : vector<4x8x8xf32> to vector<1x4x8x8xf32>
      tpu.vector_store %arg3[%c0_31, %c0_32, %c0_33, %c16_34], %52 {strides = array<i32>} : memref<1x4x32x32xf32, #tpu.memory_space<vmem>>, vector<1x4x8x8xf32>,
      %c0_35 = arith.constant 0 : index
      %c0_36 = arith.constant 0 : index
      %c0_37 = arith.constant 0 : index
      %c0_38 = arith.constant 0 : index
      %53 = vector.load %arg2[%c0_35, %c0_36, %c0_37, %c0_38] : memref<1x4x32x32xf32, #tpu.memory_space<vmem>>, vector<1x4x8x8xf32>
      %54 = vector.shape_cast %53 : vector<1x4x8x8xf32> to vector<4x8x8xf32>
      %55 = tpu.transpose %54, [0, 2, 1] : vector<4x8x8xf32> -> vector<4x8x8xf32>
      %c0_39 = arith.constant 0 : index
      %c0_40 = arith.constant 0 : index
      %c0_41 = arith.constant 0 : index
      %c0_42 = arith.constant 0 : index
      %56 = vector.load %arg3[%c0_39, %c0_40, %c0_41, %c0_42] : memref<1x4x32x32xf32, #tpu.memory_space<vmem>>, vector<1x4x8x8xf32>
      %57 = vector.shape_cast %56 : vector<1x4x8x8xf32> to vector<4x8x8xf32>
      %58 = vector.shape_cast %55 : vector<4x8x8xf32> to vector<1x4x8x8xf32>
      tpu.vector_store %arg3[%c0_39, %c0_40, %c0_41, %c0_42], %58 {strides = array<i32>} : memref<1x4x32x32xf32, #tpu.memory_space<vmem>>, vector<1x4x8x8xf32>,
      %c0_43 = arith.constant 0 : index
      %c0_44 = arith.constant 0 : index
      %c0_45 = arith.constant 0 : index
      %c8 = arith.constant 8 : index
      %59 = vector.load %arg2[%c0_43, %c0_44, %c0_45, %c8] : memref<1x4x32x32xf32, #tpu.memory_space<vmem>>, vector<1x4x8x8xf32>
      %60 = vector.shape_cast %59 : vector<1x4x8x8xf32> to vector<4x8x8xf32>
      %61 = tpu.transpose %60, [0, 2, 1] : vector<4x8x8xf32> -> vector<4x8x8xf32>
      %c0_46 = arith.constant 0 : index
      %c0_47 = arith.constant 0 : index
      %c0_48 = arith.constant 0 : index
      %c8_49 = arith.constant 8 : index
      %62 = vector.load %arg3[%c0_46, %c0_47, %c0_48, %c8_49] : memref<1x4x32x32xf32, #tpu.memory_space<vmem>>, vector<1x4x8x8xf32>
      %63 = vector.shape_cast %62 : vector<1x4x8x8xf32> to vector<4x8x8xf32>
      %64 = vector.shape_cast %61 : vector<4x8x8xf32> to vector<1x4x8x8xf32>
      tpu.vector_store %arg3[%c0_46, %c0_47, %c0_48, %c8_49], %64 {strides = array<i32>} : memref<1x4x32x32xf32, #tpu.memory_space<vmem>>, vector<1x4x8x8xf32>,
      %c0_50 = arith.constant 0 : index
      %c0_51 = arith.constant 0 : index
      %c0_52 = arith.constant 0 : index
      %c24 = arith.constant 24 : index
      %65 = vector.load %arg2[%c0_50, %c0_51, %c0_52, %c24] : memref<1x4x32x32xf32, #tpu.memory_space<vmem>>, vector<1x4x8x8xf32>
      %66 = vector.shape_cast %65 : vector<1x4x8x8xf32> to vector<4x8x8xf32>
      %67 = tpu.transpose %66, [0, 2, 1] : vector<4x8x8xf32> -> vector<4x8x8xf32>
      %c0_53 = arith.constant 0 : index
      %c0_54 = arith.constant 0 : index
      %c0_55 = arith.constant 0 : index
      %c24_56 = arith.constant 24 : index
      %68 = vector.load %arg3[%c0_53, %c0_54, %c0_55, %c24_56] : memref<1x4x32x32xf32, #tpu.memory_space<vmem>>, vector<1x4x8x8xf32>
      %69 = vector.shape_cast %68 : vector<1x4x8x8xf32> to vector<4x8x8xf32>
      %70 = vector.shape_cast %67 : vector<4x8x8xf32> to vector<1x4x8x8xf32>
      tpu.vector_store %arg3[%c0_53, %c0_54, %c0_55, %c24_56], %70 {strides = array<i32>} : memref<1x4x32x32xf32, #tpu.memory_space<vmem>>, vector<1x4x8x8xf32>,
    } else {
    }
    %c4_i32_4 = arith.constant 4 : i32
    %12 = arith.muli %arg1, %c4_i32_4 : i32
    %c1_i32 = arith.constant 1 : i32
    %13 = arith.addi %12, %c1_i32 : i32
    %c3_i32_5 = arith.constant 3 : i32
    %14 = arith.muli %c3_i32_5, %13 : i32
    %c4_i32_6 = arith.constant 4 : i32
    %15 = arith.cmpi sgt, %14, %c4_i32_6 : i32
    %c3_i32_7 = arith.constant 3 : i32
    %16 = arith.muli %c3_i32_7, %13 : i32
    %c8_i32_8 = arith.constant 8 : i32
    %17 = arith.cmpi slt, %16, %c8_i32_8 : i32
    %18 = arith.andi %15, %17 : i1
    %true_9 = arith.constant true
    %19 = arith.xori %18, %true_9 : i1
    %20 = arith.extui %19 : i1 to i32
    %c0_i32_10 = arith.constant 0 : i32
    %21 = arith.cmpi ne, %20, %c0_i32_10 : i32
    scf.if %21 {
      %c0 = arith.constant 0 : index
      %c0_29 = arith.constant 0 : index
      %c8 = arith.constant 8 : index
      %c0_30 = arith.constant 0 : index
      %48 = vector.load %arg2[%c0, %c0_29, %c8, %c0_30] : memref<1x4x32x32xf32, #tpu.memory_space<vmem>>, vector<1x4x8x8xf32>
      %49 = vector.shape_cast %48 : vector<1x4x8x8xf32> to vector<4x8x8xf32>
      %50 = tpu.transpose %49, [0, 2, 1] : vector<4x8x8xf32> -> vector<4x8x8xf32>
      %c0_31 = arith.constant 0 : index
      %c0_32 = arith.constant 0 : index
      %c8_33 = arith.constant 8 : index
      %c0_34 = arith.constant 0 : index
      %51 = vector.load %arg3[%c0_31, %c0_32, %c8_33, %c0_34] : memref<1x4x32x32xf32, #tpu.memory_space<vmem>>, vector<1x4x8x8xf32>
      %52 = vector.shape_cast %51 : vector<1x4x8x8xf32> to vector<4x8x8xf32>
      %53 = vector.shape_cast %50 : vector<4x8x8xf32> to vector<1x4x8x8xf32>
      tpu.vector_store %arg3[%c0_31, %c0_32, %c8_33, %c0_34], %53 {strides = array<i32>} : memref<1x4x32x32xf32, #tpu.memory_space<vmem>>, vector<1x4x8x8xf32>,
      %c0_35 = arith.constant 0 : index
      %c0_36 = arith.constant 0 : index
      %c8_37 = arith.constant 8 : index
      %c8_38 = arith.constant 8 : index
      %54 = vector.load %arg2[%c0_35, %c0_36, %c8_37, %c8_38] : memref<1x4x32x32xf32, #tpu.memory_space<vmem>>, vector<1x4x8x8xf32>
      %55 = vector.shape_cast %54 : vector<1x4x8x8xf32> to vector<4x8x8xf32>
      %56 = tpu.transpose %55, [0, 2, 1] : vector<4x8x8xf32> -> vector<4x8x8xf32>
      %c0_39 = arith.constant 0 : index
      %c0_40 = arith.constant 0 : index
      %c8_41 = arith.constant 8 : index
      %c8_42 = arith.constant 8 : index
      %57 = vector.load %arg3[%c0_39, %c0_40, %c8_41, %c8_42] : memref<1x4x32x32xf32, #tpu.memory_space<vmem>>, vector<1x4x8x8xf32>
      %58 = vector.shape_cast %57 : vector<1x4x8x8xf32> to vector<4x8x8xf32>
      %59 = vector.shape_cast %56 : vector<4x8x8xf32> to vector<1x4x8x8xf32>
      tpu.vector_store %arg3[%c0_39, %c0_40, %c8_41, %c8_42], %59 {strides = array<i32>} : memref<1x4x32x32xf32, #tpu.memory_space<vmem>>, vector<1x4x8x8xf32>,
      %c0_43 = arith.constant 0 : index
      %c0_44 = arith.constant 0 : index
      %c8_45 = arith.constant 8 : index
      %c16 = arith.constant 16 : index
      %60 = vector.load %arg2[%c0_43, %c0_44, %c8_45, %c16] : memref<1x4x32x32xf32, #tpu.memory_space<vmem>>, vector<1x4x8x8xf32>
      %61 = vector.shape_cast %60 : vector<1x4x8x8xf32> to vector<4x8x8xf32>
      %62 = tpu.transpose %61, [0, 2, 1] : vector<4x8x8xf32> -> vector<4x8x8xf32>
      %c0_46 = arith.constant 0 : index
      %c0_47 = arith.constant 0 : index
      %c8_48 = arith.constant 8 : index
      %c16_49 = arith.constant 16 : index
      %63 = vector.load %arg3[%c0_46, %c0_47, %c8_48, %c16_49] : memref<1x4x32x32xf32, #tpu.memory_space<vmem>>, vector<1x4x8x8xf32>
      %64 = vector.shape_cast %63 : vector<1x4x8x8xf32> to vector<4x8x8xf32>
      %65 = vector.shape_cast %62 : vector<4x8x8xf32> to vector<1x4x8x8xf32>
      tpu.vector_store %arg3[%c0_46, %c0_47, %c8_48, %c16_49], %65 {strides = array<i32>} : memref<1x4x32x32xf32, #tpu.memory_space<vmem>>, vector<1x4x8x8xf32>,
      %c0_50 = arith.constant 0 : index
      %c0_51 = arith.constant 0 : index
      %c8_52 = arith.constant 8 : index
      %c24 = arith.constant 24 : index
      %66 = vector.load %arg2[%c0_50, %c0_51, %c8_52, %c24] : memref<1x4x32x32xf32, #tpu.memory_space<vmem>>, vector<1x4x8x8xf32>
      %67 = vector.shape_cast %66 : vector<1x4x8x8xf32> to vector<4x8x8xf32>
      %68 = tpu.transpose %67, [0, 2, 1] : vector<4x8x8xf32> -> vector<4x8x8xf32>
      %c0_53 = arith.constant 0 : index
      %c0_54 = arith.constant 0 : index
      %c8_55 = arith.constant 8 : index
      %c24_56 = arith.constant 24 : index
      %69 = vector.load %arg3[%c0_53, %c0_54, %c8_55, %c24_56] : memref<1x4x32x32xf32, #tpu.memory_space<vmem>>, vector<1x4x8x8xf32>
      %70 = vector.shape_cast %69 : vector<1x4x8x8xf32> to vector<4x8x8xf32>
      %71 = vector.shape_cast %68 : vector<4x8x8xf32> to vector<1x4x8x8xf32>
      tpu.vector_store %arg3[%c0_53, %c0_54, %c8_55, %c24_56], %71 {strides = array<i32>} : memref<1x4x32x32xf32, #tpu.memory_space<vmem>>, vector<1x4x8x8xf32>,
    } else {
    }
    %22 = arith.extui %18 : i1 to i32
    %c0_i32_11 = arith.constant 0 : i32
    %23 = arith.cmpi ne, %22, %c0_i32_11 : i32
    scf.if %23 {
      %c0 = arith.constant 0 : index
      %c0_29 = arith.constant 0 : index
      %c8 = arith.constant 8 : index
      %c16 = arith.constant 16 : index
      %48 = vector.load %arg2[%c0, %c0_29, %c8, %c16] : memref<1x4x32x32xf32, #tpu.memory_space<vmem>>, vector<1x4x8x8xf32>
      %49 = vector.shape_cast %48 : vector<1x4x8x8xf32> to vector<4x8x8xf32>
      %c0_30 = arith.constant 0 : index
      %c0_31 = arith.constant 0 : index
      %c8_32 = arith.constant 8 : index
      %c16_33 = arith.constant 16 : index
      %50 = vector.load %arg3[%c0_30, %c0_31, %c8_32, %c16_33] : memref<1x4x32x32xf32, #tpu.memory_space<vmem>>, vector<1x4x8x8xf32>
      %51 = vector.shape_cast %50 : vector<1x4x8x8xf32> to vector<4x8x8xf32>
      %52 = vector.shape_cast %49 : vector<4x8x8xf32> to vector<1x4x8x8xf32>
      tpu.vector_store %arg3[%c0_30, %c0_31, %c8_32, %c16_33], %52 {strides = array<i32>} : memref<1x4x32x32xf32, #tpu.memory_space<vmem>>, vector<1x4x8x8xf32>,
      %c0_34 = arith.constant 0 : index
      %c0_35 = arith.constant 0 : index
      %c8_36 = arith.constant 8 : index
      %c0_37 = arith.constant 0 : index
      %53 = vector.load %arg2[%c0_34, %c0_35, %c8_36, %c0_37] : memref<1x4x32x32xf32, #tpu.memory_space<vmem>>, vector<1x4x8x8xf32>
      %54 = vector.shape_cast %53 : vector<1x4x8x8xf32> to vector<4x8x8xf32>
      %55 = tpu.transpose %54, [0, 2, 1] : vector<4x8x8xf32> -> vector<4x8x8xf32>
      %c0_38 = arith.constant 0 : index
      %c0_39 = arith.constant 0 : index
      %c8_40 = arith.constant 8 : index
      %c0_41 = arith.constant 0 : index
      %56 = vector.load %arg3[%c0_38, %c0_39, %c8_40, %c0_41] : memref<1x4x32x32xf32, #tpu.memory_space<vmem>>, vector<1x4x8x8xf32>
      %57 = vector.shape_cast %56 : vector<1x4x8x8xf32> to vector<4x8x8xf32>
      %58 = vector.shape_cast %55 : vector<4x8x8xf32> to vector<1x4x8x8xf32>
      tpu.vector_store %arg3[%c0_38, %c0_39, %c8_40, %c0_41], %58 {strides = array<i32>} : memref<1x4x32x32xf32, #tpu.memory_space<vmem>>, vector<1x4x8x8xf32>,
      %c0_42 = arith.constant 0 : index
      %c0_43 = arith.constant 0 : index
      %c8_44 = arith.constant 8 : index
      %c8_45 = arith.constant 8 : index
      %59 = vector.load %arg2[%c0_42, %c0_43, %c8_44, %c8_45] : memref<1x4x32x32xf32, #tpu.memory_space<vmem>>, vector<1x4x8x8xf32>
      %60 = vector.shape_cast %59 : vector<1x4x8x8xf32> to vector<4x8x8xf32>
      %61 = tpu.transpose %60, [0, 2, 1] : vector<4x8x8xf32> -> vector<4x8x8xf32>
      %c0_46 = arith.constant 0 : index
      %c0_47 = arith.constant 0 : index
      %c8_48 = arith.constant 8 : index
      %c8_49 = arith.constant 8 : index
      %62 = vector.load %arg3[%c0_46, %c0_47, %c8_48, %c8_49] : memref<1x4x32x32xf32, #tpu.memory_space<vmem>>, vector<1x4x8x8xf32>
      %63 = vector.shape_cast %62 : vector<1x4x8x8xf32> to vector<4x8x8xf32>
      %64 = vector.shape_cast %61 : vector<4x8x8xf32> to vector<1x4x8x8xf32>
      tpu.vector_store %arg3[%c0_46, %c0_47, %c8_48, %c8_49], %64 {strides = array<i32>} : memref<1x4x32x32xf32, #tpu.memory_space<vmem>>, vector<1x4x8x8xf32>,
      %c0_50 = arith.constant 0 : index
      %c0_51 = arith.constant 0 : index
      %c8_52 = arith.constant 8 : index
      %c24 = arith.constant 24 : index
      %65 = vector.load %arg2[%c0_50, %c0_51, %c8_52, %c24] : memref<1x4x32x32xf32, #tpu.memory_space<vmem>>, vector<1x4x8x8xf32>
      %66 = vector.shape_cast %65 : vector<1x4x8x8xf32> to vector<4x8x8xf32>
      %67 = tpu.transpose %66, [0, 2, 1] : vector<4x8x8xf32> -> vector<4x8x8xf32>
      %c0_53 = arith.constant 0 : index
      %c0_54 = arith.constant 0 : index
      %c8_55 = arith.constant 8 : index
      %c24_56 = arith.constant 24 : index
      %68 = vector.load %arg3[%c0_53, %c0_54, %c8_55, %c24_56] : memref<1x4x32x32xf32, #tpu.memory_space<vmem>>, vector<1x4x8x8xf32>
      %69 = vector.shape_cast %68 : vector<1x4x8x8xf32> to vector<4x8x8xf32>
      %70 = vector.shape_cast %67 : vector<4x8x8xf32> to vector<1x4x8x8xf32>
      tpu.vector_store %arg3[%c0_53, %c0_54, %c8_55, %c24_56], %70 {strides = array<i32>} : memref<1x4x32x32xf32, #tpu.memory_space<vmem>>, vector<1x4x8x8xf32>,
    } else {
    }
    %c4_i32_12 = arith.constant 4 : i32
    %24 = arith.muli %arg1, %c4_i32_12 : i32
    %c2_i32 = arith.constant 2 : i32
    %25 = arith.addi %24, %c2_i32 : i32
    %c3_i32_13 = arith.constant 3 : i32
    %26 = arith.muli %c3_i32_13, %25 : i32
    %c4_i32_14 = arith.constant 4 : i32
    %27 = arith.cmpi sgt, %26, %c4_i32_14 : i32
    %c3_i32_15 = arith.constant 3 : i32
    %28 = arith.muli %c3_i32_15, %25 : i32
    %c8_i32_16 = arith.constant 8 : i32
    %29 = arith.cmpi slt, %28, %c8_i32_16 : i32
    %30 = arith.andi %27, %29 : i1
    %true_17 = arith.constant true
    %31 = arith.xori %30, %true_17 : i1
    %32 = arith.extui %31 : i1 to i32
    %c0_i32_18 = arith.constant 0 : i32
    %33 = arith.cmpi ne, %32, %c0_i32_18 : i32
    scf.if %33 {
      %c0 = arith.constant 0 : index
      %c0_29 = arith.constant 0 : index
      %c16 = arith.constant 16 : index
      %c0_30 = arith.constant 0 : index
      %48 = vector.load %arg2[%c0, %c0_29, %c16, %c0_30] : memref<1x4x32x32xf32, #tpu.memory_space<vmem>>, vector<1x4x8x8xf32>
      %49 = vector.shape_cast %48 : vector<1x4x8x8xf32> to vector<4x8x8xf32>
      %50 = tpu.transpose %49, [0, 2, 1] : vector<4x8x8xf32> -> vector<4x8x8xf32>
      %c0_31 = arith.constant 0 : index
      %c0_32 = arith.constant 0 : index
      %c16_33 = arith.constant 16 : index
      %c0_34 = arith.constant 0 : index
      %51 = vector.load %arg3[%c0_31, %c0_32, %c16_33, %c0_34] : memref<1x4x32x32xf32, #tpu.memory_space<vmem>>, vector<1x4x8x8xf32>
      %52 = vector.shape_cast %51 : vector<1x4x8x8xf32> to vector<4x8x8xf32>
      %53 = vector.shape_cast %50 : vector<4x8x8xf32> to vector<1x4x8x8xf32>
      tpu.vector_store %arg3[%c0_31, %c0_32, %c16_33, %c0_34], %53 {strides = array<i32>} : memref<1x4x32x32xf32, #tpu.memory_space<vmem>>, vector<1x4x8x8xf32>,
      %c0_35 = arith.constant 0 : index
      %c0_36 = arith.constant 0 : index
      %c16_37 = arith.constant 16 : index
      %c8 = arith.constant 8 : index
      %54 = vector.load %arg2[%c0_35, %c0_36, %c16_37, %c8] : memref<1x4x32x32xf32, #tpu.memory_space<vmem>>, vector<1x4x8x8xf32>
      %55 = vector.shape_cast %54 : vector<1x4x8x8xf32> to vector<4x8x8xf32>
      %56 = tpu.transpose %55, [0, 2, 1] : vector<4x8x8xf32> -> vector<4x8x8xf32>
      %c0_38 = arith.constant 0 : index
      %c0_39 = arith.constant 0 : index
      %c16_40 = arith.constant 16 : index
      %c8_41 = arith.constant 8 : index
      %57 = vector.load %arg3[%c0_38, %c0_39, %c16_40, %c8_41] : memref<1x4x32x32xf32, #tpu.memory_space<vmem>>, vector<1x4x8x8xf32>
      %58 = vector.shape_cast %57 : vector<1x4x8x8xf32> to vector<4x8x8xf32>
      %59 = vector.shape_cast %56 : vector<4x8x8xf32> to vector<1x4x8x8xf32>
      tpu.vector_store %arg3[%c0_38, %c0_39, %c16_40, %c8_41], %59 {strides = array<i32>} : memref<1x4x32x32xf32, #tpu.memory_space<vmem>>, vector<1x4x8x8xf32>,
      %c0_42 = arith.constant 0 : index
      %c0_43 = arith.constant 0 : index
      %c16_44 = arith.constant 16 : index
      %c16_45 = arith.constant 16 : index
      %60 = vector.load %arg2[%c0_42, %c0_43, %c16_44, %c16_45] : memref<1x4x32x32xf32, #tpu.memory_space<vmem>>, vector<1x4x8x8xf32>
      %61 = vector.shape_cast %60 : vector<1x4x8x8xf32> to vector<4x8x8xf32>
      %62 = tpu.transpose %61, [0, 2, 1] : vector<4x8x8xf32> -> vector<4x8x8xf32>
      %c0_46 = arith.constant 0 : index
      %c0_47 = arith.constant 0 : index
      %c16_48 = arith.constant 16 : index
      %c16_49 = arith.constant 16 : index
      %63 = vector.load %arg3[%c0_46, %c0_47, %c16_48, %c16_49] : memref<1x4x32x32xf32, #tpu.memory_space<vmem>>, vector<1x4x8x8xf32>
      %64 = vector.shape_cast %63 : vector<1x4x8x8xf32> to vector<4x8x8xf32>
      %65 = vector.shape_cast %62 : vector<4x8x8xf32> to vector<1x4x8x8xf32>
      tpu.vector_store %arg3[%c0_46, %c0_47, %c16_48, %c16_49], %65 {strides = array<i32>} : memref<1x4x32x32xf32, #tpu.memory_space<vmem>>, vector<1x4x8x8xf32>,
      %c0_50 = arith.constant 0 : index
      %c0_51 = arith.constant 0 : index
      %c16_52 = arith.constant 16 : index
      %c24 = arith.constant 24 : index
      %66 = vector.load %arg2[%c0_50, %c0_51, %c16_52, %c24] : memref<1x4x32x32xf32, #tpu.memory_space<vmem>>, vector<1x4x8x8xf32>
      %67 = vector.shape_cast %66 : vector<1x4x8x8xf32> to vector<4x8x8xf32>
      %68 = tpu.transpose %67, [0, 2, 1] : vector<4x8x8xf32> -> vector<4x8x8xf32>
      %c0_53 = arith.constant 0 : index
      %c0_54 = arith.constant 0 : index
      %c16_55 = arith.constant 16 : index
      %c24_56 = arith.constant 24 : index
      %69 = vector.load %arg3[%c0_53, %c0_54, %c16_55, %c24_56] : memref<1x4x32x32xf32, #tpu.memory_space<vmem>>, vector<1x4x8x8xf32>
      %70 = vector.shape_cast %69 : vector<1x4x8x8xf32> to vector<4x8x8xf32>
      %71 = vector.shape_cast %68 : vector<4x8x8xf32> to vector<1x4x8x8xf32>
      tpu.vector_store %arg3[%c0_53, %c0_54, %c16_55, %c24_56], %71 {strides = array<i32>} : memref<1x4x32x32xf32, #tpu.memory_space<vmem>>, vector<1x4x8x8xf32>,
    } else {
    }
    %34 = arith.extui %30 : i1 to i32
    %c0_i32_19 = arith.constant 0 : i32
    %35 = arith.cmpi ne, %34, %c0_i32_19 : i32
    scf.if %35 {
      %c0 = arith.constant 0 : index
      %c0_29 = arith.constant 0 : index
      %c16 = arith.constant 16 : index
      %c16_30 = arith.constant 16 : index
      %48 = vector.load %arg2[%c0, %c0_29, %c16, %c16_30] : memref<1x4x32x32xf32, #tpu.memory_space<vmem>>, vector<1x4x8x8xf32>
      %49 = vector.shape_cast %48 : vector<1x4x8x8xf32> to vector<4x8x8xf32>
      %c0_31 = arith.constant 0 : index
      %c0_32 = arith.constant 0 : index
      %c16_33 = arith.constant 16 : index
      %c16_34 = arith.constant 16 : index
      %50 = vector.load %arg3[%c0_31, %c0_32, %c16_33, %c16_34] : memref<1x4x32x32xf32, #tpu.memory_space<vmem>>, vector<1x4x8x8xf32>
      %51 = vector.shape_cast %50 : vector<1x4x8x8xf32> to vector<4x8x8xf32>
      %52 = vector.shape_cast %49 : vector<4x8x8xf32> to vector<1x4x8x8xf32>
      tpu.vector_store %arg3[%c0_31, %c0_32, %c16_33, %c16_34], %52 {strides = array<i32>} : memref<1x4x32x32xf32, #tpu.memory_space<vmem>>, vector<1x4x8x8xf32>,
      %c0_35 = arith.constant 0 : index
      %c0_36 = arith.constant 0 : index
      %c16_37 = arith.constant 16 : index
      %c0_38 = arith.constant 0 : index
      %53 = vector.load %arg2[%c0_35, %c0_36, %c16_37, %c0_38] : memref<1x4x32x32xf32, #tpu.memory_space<vmem>>, vector<1x4x8x8xf32>
      %54 = vector.shape_cast %53 : vector<1x4x8x8xf32> to vector<4x8x8xf32>
      %55 = tpu.transpose %54, [0, 2, 1] : vector<4x8x8xf32> -> vector<4x8x8xf32>
      %c0_39 = arith.constant 0 : index
      %c0_40 = arith.constant 0 : index
      %c16_41 = arith.constant 16 : index
      %c0_42 = arith.constant 0 : index
      %56 = vector.load %arg3[%c0_39, %c0_40, %c16_41, %c0_42] : memref<1x4x32x32xf32, #tpu.memory_space<vmem>>, vector<1x4x8x8xf32>
      %57 = vector.shape_cast %56 : vector<1x4x8x8xf32> to vector<4x8x8xf32>
      %58 = vector.shape_cast %55 : vector<4x8x8xf32> to vector<1x4x8x8xf32>
      tpu.vector_store %arg3[%c0_39, %c0_40, %c16_41, %c0_42], %58 {strides = array<i32>} : memref<1x4x32x32xf32, #tpu.memory_space<vmem>>, vector<1x4x8x8xf32>,
      %c0_43 = arith.constant 0 : index
      %c0_44 = arith.constant 0 : index
      %c16_45 = arith.constant 16 : index
      %c8 = arith.constant 8 : index
      %59 = vector.load %arg2[%c0_43, %c0_44, %c16_45, %c8] : memref<1x4x32x32xf32, #tpu.memory_space<vmem>>, vector<1x4x8x8xf32>
      %60 = vector.shape_cast %59 : vector<1x4x8x8xf32> to vector<4x8x8xf32>
      %61 = tpu.transpose %60, [0, 2, 1] : vector<4x8x8xf32> -> vector<4x8x8xf32>
      %c0_46 = arith.constant 0 : index
      %c0_47 = arith.constant 0 : index
      %c16_48 = arith.constant 16 : index
      %c8_49 = arith.constant 8 : index
      %62 = vector.load %arg3[%c0_46, %c0_47, %c16_48, %c8_49] : memref<1x4x32x32xf32, #tpu.memory_space<vmem>>, vector<1x4x8x8xf32>
      %63 = vector.shape_cast %62 : vector<1x4x8x8xf32> to vector<4x8x8xf32>
      %64 = vector.shape_cast %61 : vector<4x8x8xf32> to vector<1x4x8x8xf32>
      tpu.vector_store %arg3[%c0_46, %c0_47, %c16_48, %c8_49], %64 {strides = array<i32>} : memref<1x4x32x32xf32, #tpu.memory_space<vmem>>, vector<1x4x8x8xf32>,
      %c0_50 = arith.constant 0 : index
      %c0_51 = arith.constant 0 : index
      %c16_52 = arith.constant 16 : index
      %c24 = arith.constant 24 : index
      %65 = vector.load %arg2[%c0_50, %c0_51, %c16_52, %c24] : memref<1x4x32x32xf32, #tpu.memory_space<vmem>>, vector<1x4x8x8xf32>
      %66 = vector.shape_cast %65 : vector<1x4x8x8xf32> to vector<4x8x8xf32>
      %67 = tpu.transpose %66, [0, 2, 1] : vector<4x8x8xf32> -> vector<4x8x8xf32>
      %c0_53 = arith.constant 0 : index
      %c0_54 = arith.constant 0 : index
      %c16_55 = arith.constant 16 : index
      %c24_56 = arith.constant 24 : index
      %68 = vector.load %arg3[%c0_53, %c0_54, %c16_55, %c24_56] : memref<1x4x32x32xf32, #tpu.memory_space<vmem>>, vector<1x4x8x8xf32>
      %69 = vector.shape_cast %68 : vector<1x4x8x8xf32> to vector<4x8x8xf32>
      %70 = vector.shape_cast %67 : vector<4x8x8xf32> to vector<1x4x8x8xf32>
      tpu.vector_store %arg3[%c0_53, %c0_54, %c16_55, %c24_56], %70 {strides = array<i32>} : memref<1x4x32x32xf32, #tpu.memory_space<vmem>>, vector<1x4x8x8xf32>,
    } else {
    }
    %c4_i32_20 = arith.constant 4 : i32
    %36 = arith.muli %arg1, %c4_i32_20 : i32
    %c3_i32_21 = arith.constant 3 : i32
    %37 = arith.addi %36, %c3_i32_21 : i32
    %c3_i32_22 = arith.constant 3 : i32
    %38 = arith.muli %c3_i32_22, %37 : i32
    %c4_i32_23 = arith.constant 4 : i32
    %39 = arith.cmpi sgt, %38, %c4_i32_23 : i32
    %c3_i32_24 = arith.constant 3 : i32
    %40 = arith.muli %c3_i32_24, %37 : i32
    %c8_i32_25 = arith.constant 8 : i32
    %41 = arith.cmpi slt, %40, %c8_i32_25 : i32
    %42 = arith.andi %39, %41 : i1
    %true_26 = arith.constant true
    %43 = arith.xori %42, %true_26 : i1
    %44 = arith.extui %43 : i1 to i32
    %c0_i32_27 = arith.constant 0 : i32
    %45 = arith.cmpi ne, %44, %c0_i32_27 : i32
    scf.if %45 {
      %c0 = arith.constant 0 : index
      %c0_29 = arith.constant 0 : index
      %c24 = arith.constant 24 : index
      %c0_30 = arith.constant 0 : index
      %48 = vector.load %arg2[%c0, %c0_29, %c24, %c0_30] : memref<1x4x32x32xf32, #tpu.memory_space<vmem>>, vector<1x4x8x8xf32>
      %49 = vector.shape_cast %48 : vector<1x4x8x8xf32> to vector<4x8x8xf32>
      %50 = tpu.transpose %49, [0, 2, 1] : vector<4x8x8xf32> -> vector<4x8x8xf32>
      %c0_31 = arith.constant 0 : index
      %c0_32 = arith.constant 0 : index
      %c24_33 = arith.constant 24 : index
      %c0_34 = arith.constant 0 : index
      %51 = vector.load %arg3[%c0_31, %c0_32, %c24_33, %c0_34] : memref<1x4x32x32xf32, #tpu.memory_space<vmem>>, vector<1x4x8x8xf32>
      %52 = vector.shape_cast %51 : vector<1x4x8x8xf32> to vector<4x8x8xf32>
      %53 = vector.shape_cast %50 : vector<4x8x8xf32> to vector<1x4x8x8xf32>
      tpu.vector_store %arg3[%c0_31, %c0_32, %c24_33, %c0_34], %53 {strides = array<i32>} : memref<1x4x32x32xf32, #tpu.memory_space<vmem>>, vector<1x4x8x8xf32>,
      %c0_35 = arith.constant 0 : index
      %c0_36 = arith.constant 0 : index
      %c24_37 = arith.constant 24 : index
      %c8 = arith.constant 8 : index
      %54 = vector.load %arg2[%c0_35, %c0_36, %c24_37, %c8] : memref<1x4x32x32xf32, #tpu.memory_space<vmem>>, vector<1x4x8x8xf32>
      %55 = vector.shape_cast %54 : vector<1x4x8x8xf32> to vector<4x8x8xf32>
      %56 = tpu.transpose %55, [0, 2, 1] : vector<4x8x8xf32> -> vector<4x8x8xf32>
      %c0_38 = arith.constant 0 : index
      %c0_39 = arith.constant 0 : index
      %c24_40 = arith.constant 24 : index
      %c8_41 = arith.constant 8 : index
      %57 = vector.load %arg3[%c0_38, %c0_39, %c24_40, %c8_41] : memref<1x4x32x32xf32, #tpu.memory_space<vmem>>, vector<1x4x8x8xf32>
      %58 = vector.shape_cast %57 : vector<1x4x8x8xf32> to vector<4x8x8xf32>
      %59 = vector.shape_cast %56 : vector<4x8x8xf32> to vector<1x4x8x8xf32>
      tpu.vector_store %arg3[%c0_38, %c0_39, %c24_40, %c8_41], %59 {strides = array<i32>} : memref<1x4x32x32xf32, #tpu.memory_space<vmem>>, vector<1x4x8x8xf32>,
      %c0_42 = arith.constant 0 : index
      %c0_43 = arith.constant 0 : index
      %c24_44 = arith.constant 24 : index
      %c16 = arith.constant 16 : index
      %60 = vector.load %arg2[%c0_42, %c0_43, %c24_44, %c16] : memref<1x4x32x32xf32, #tpu.memory_space<vmem>>, vector<1x4x8x8xf32>
      %61 = vector.shape_cast %60 : vector<1x4x8x8xf32> to vector<4x8x8xf32>
      %62 = tpu.transpose %61, [0, 2, 1] : vector<4x8x8xf32> -> vector<4x8x8xf32>
      %c0_45 = arith.constant 0 : index
      %c0_46 = arith.constant 0 : index
      %c24_47 = arith.constant 24 : index
      %c16_48 = arith.constant 16 : index
      %63 = vector.load %arg3[%c0_45, %c0_46, %c24_47, %c16_48] : memref<1x4x32x32xf32, #tpu.memory_space<vmem>>, vector<1x4x8x8xf32>
      %64 = vector.shape_cast %63 : vector<1x4x8x8xf32> to vector<4x8x8xf32>
      %65 = vector.shape_cast %62 : vector<4x8x8xf32> to vector<1x4x8x8xf32>
      tpu.vector_store %arg3[%c0_45, %c0_46, %c24_47, %c16_48], %65 {strides = array<i32>} : memref<1x4x32x32xf32, #tpu.memory_space<vmem>>, vector<1x4x8x8xf32>,
      %c0_49 = arith.constant 0 : index
      %c0_50 = arith.constant 0 : index
      %c24_51 = arith.constant 24 : index
      %c24_52 = arith.constant 24 : index
      %66 = vector.load %arg2[%c0_49, %c0_50, %c24_51, %c24_52] : memref<1x4x32x32xf32, #tpu.memory_space<vmem>>, vector<1x4x8x8xf32>
      %67 = vector.shape_cast %66 : vector<1x4x8x8xf32> to vector<4x8x8xf32>
      %68 = tpu.transpose %67, [0, 2, 1] : vector<4x8x8xf32> -> vector<4x8x8xf32>
      %c0_53 = arith.constant 0 : index
      %c0_54 = arith.constant 0 : index
      %c24_55 = arith.constant 24 : index
      %c24_56 = arith.constant 24 : index
      %69 = vector.load %arg3[%c0_53, %c0_54, %c24_55, %c24_56] : memref<1x4x32x32xf32, #tpu.memory_space<vmem>>, vector<1x4x8x8xf32>
      %70 = vector.shape_cast %69 : vector<1x4x8x8xf32> to vector<4x8x8xf32>
      %71 = vector.shape_cast %68 : vector<4x8x8xf32> to vector<1x4x8x8xf32>
      tpu.vector_store %arg3[%c0_53, %c0_54, %c24_55, %c24_56], %71 {strides = array<i32>} : memref<1x4x32x32xf32, #tpu.memory_space<vmem>>, vector<1x4x8x8xf32>,
    } else {
    }
    %46 = arith.extui %42 : i1 to i32
    %c0_i32_28 = arith.constant 0 : i32
    %47 = arith.cmpi ne, %46, %c0_i32_28 : i32
    scf.if %47 {
      %c0 = arith.constant 0 : index
      %c0_29 = arith.constant 0 : index
      %c24 = arith.constant 24 : index
      %c16 = arith.constant 16 : index
      %48 = vector.load %arg2[%c0, %c0_29, %c24, %c16] : memref<1x4x32x32xf32, #tpu.memory_space<vmem>>, vector<1x4x8x8xf32>
      %49 = vector.shape_cast %48 : vector<1x4x8x8xf32> to vector<4x8x8xf32>
      %c0_30 = arith.constant 0 : index
      %c0_31 = arith.constant 0 : index
      %c24_32 = arith.constant 24 : index
      %c16_33 = arith.constant 16 : index
      %50 = vector.load %arg3[%c0_30, %c0_31, %c24_32, %c16_33] : memref<1x4x32x32xf32, #tpu.memory_space<vmem>>, vector<1x4x8x8xf32>
      %51 = vector.shape_cast %50 : vector<1x4x8x8xf32> to vector<4x8x8xf32>
      %52 = vector.shape_cast %49 : vector<4x8x8xf32> to vector<1x4x8x8xf32>
      tpu.vector_store %arg3[%c0_30, %c0_31, %c24_32, %c16_33], %52 {strides = array<i32>} : memref<1x4x32x32xf32, #tpu.memory_space<vmem>>, vector<1x4x8x8xf32>,
      %c0_34 = arith.constant 0 : index
      %c0_35 = arith.constant 0 : index
      %c24_36 = arith.constant 24 : index
      %c0_37 = arith.constant 0 : index
      %53 = vector.load %arg2[%c0_34, %c0_35, %c24_36, %c0_37] : memref<1x4x32x32xf32, #tpu.memory_space<vmem>>, vector<1x4x8x8xf32>
      %54 = vector.shape_cast %53 : vector<1x4x8x8xf32> to vector<4x8x8xf32>
      %55 = tpu.transpose %54, [0, 2, 1] : vector<4x8x8xf32> -> vector<4x8x8xf32>
      %c0_38 = arith.constant 0 : index
      %c0_39 = arith.constant 0 : index
      %c24_40 = arith.constant 24 : index
      %c0_41 = arith.constant 0 : index
      %56 = vector.load %arg3[%c0_38, %c0_39, %c24_40, %c0_41] : memref<1x4x32x32xf32, #tpu.memory_space<vmem>>, vector<1x4x8x8xf32>
      %57 = vector.shape_cast %56 : vector<1x4x8x8xf32> to vector<4x8x8xf32>
      %58 = vector.shape_cast %55 : vector<4x8x8xf32> to vector<1x4x8x8xf32>
      tpu.vector_store %arg3[%c0_38, %c0_39, %c24_40, %c0_41], %58 {strides = array<i32>} : memref<1x4x32x32xf32, #tpu.memory_space<vmem>>, vector<1x4x8x8xf32>,
      %c0_42 = arith.constant 0 : index
      %c0_43 = arith.constant 0 : index
      %c24_44 = arith.constant 24 : index
      %c8 = arith.constant 8 : index
      %59 = vector.load %arg2[%c0_42, %c0_43, %c24_44, %c8] : memref<1x4x32x32xf32, #tpu.memory_space<vmem>>, vector<1x4x8x8xf32>
      %60 = vector.shape_cast %59 : vector<1x4x8x8xf32> to vector<4x8x8xf32>
      %61 = tpu.transpose %60, [0, 2, 1] : vector<4x8x8xf32> -> vector<4x8x8xf32>
      %c0_45 = arith.constant 0 : index
      %c0_46 = arith.constant 0 : index
      %c24_47 = arith.constant 24 : index
      %c8_48 = arith.constant 8 : index
      %62 = vector.load %arg3[%c0_45, %c0_46, %c24_47, %c8_48] : memref<1x4x32x32xf32, #tpu.memory_space<vmem>>, vector<1x4x8x8xf32>
      %63 = vector.shape_cast %62 : vector<1x4x8x8xf32> to vector<4x8x8xf32>
      %64 = vector.shape_cast %61 : vector<4x8x8xf32> to vector<1x4x8x8xf32>
      tpu.vector_store %arg3[%c0_45, %c0_46, %c24_47, %c8_48], %64 {strides = array<i32>} : memref<1x4x32x32xf32, #tpu.memory_space<vmem>>, vector<1x4x8x8xf32>,
      %c0_49 = arith.constant 0 : index
      %c0_50 = arith.constant 0 : index
      %c24_51 = arith.constant 24 : index
      %c24_52 = arith.constant 24 : index
      %65 = vector.load %arg2[%c0_49, %c0_50, %c24_51, %c24_52] : memref<1x4x32x32xf32, #tpu.memory_space<vmem>>, vector<1x4x8x8xf32>
      %66 = vector.shape_cast %65 : vector<1x4x8x8xf32> to vector<4x8x8xf32>
      %67 = tpu.transpose %66, [0, 2, 1] : vector<4x8x8xf32> -> vector<4x8x8xf32>
      %c0_53 = arith.constant 0 : index
      %c0_54 = arith.constant 0 : index
      %c24_55 = arith.constant 24 : index
      %c24_56 = arith.constant 24 : index
      %68 = vector.load %arg3[%c0_53, %c0_54, %c24_55, %c24_56] : memref<1x4x32x32xf32, #tpu.memory_space<vmem>>, vector<1x4x8x8xf32>
      %69 = vector.shape_cast %68 : vector<1x4x8x8xf32> to vector<4x8x8xf32>
      %70 = vector.shape_cast %67 : vector<4x8x8xf32> to vector<1x4x8x8xf32>
      tpu.vector_store %arg3[%c0_53, %c0_54, %c24_55, %c24_56], %70 {strides = array<i32>} : memref<1x4x32x32xf32, #tpu.memory_space<vmem>>, vector<1x4x8x8xf32>,
    } else {
    }
    return
  }
  func.func @transform_0(%arg0: i32, %arg1: i32) -> (i32, i32, i32, i32) {
    %c0_i32 = arith.constant 0 : i32
    %c0_i32_0 = arith.constant 0 : i32
    %c0_i32_1 = arith.constant 0 : i32
    return %arg0, %c0_i32, %arg1, %c0_i32_0 : i32, i32, i32, i32
  }
  func.func @transform_1(%arg0: i32, %arg1: i32) -> (i32, i32, i32, i32) {
    %c0_i32 = arith.constant 0 : i32
    %c0_i32_0 = arith.constant 0 : i32
    %c0_i32_1 = arith.constant 0 : i32
    return %arg0, %c0_i32, %arg1, %c0_i32_0 : i32, i32, i32, i32
  }
}

</mosaic_0001>

<llo_original>
// kernel: tpu_custom_call.1
$region0: #{tpu_custom_call.1}
  #allocation0 [shape = 'u32[]', space=smem, size = 0x4, offset = 0x4, fixed_abs, tag = 'smem constant byte address 0x4 - core index']
  #allocation1 [shape = 'u32[72,128]{1,0:T(1,128)}', space=vmem, size = 0x9000, scoped, tag = 'internal scratch']
  %s0 = inlined_call_operand.hbm [shape: f32[2,4,32,32], index: 0, kind: input, shape index: {}]
  %s1 = inlined_call_operand.hbm [shape: f32[2,4,32,32], index: 1, kind: output, shape index: {}]
  %s2 = sld [smem:[#allocation0]]
  $region73: #{tpu_custom_call.1} parent=0
    _
  %s4 = ssub.s32 1, %s2
  %s5 = scalar_select 0, %s4, %s2
  $region1: #{tpu_custom_call.1} parent=0
    #allocation2 [shape = 'u8[131072]{0}', space=vmem, size = 0x20000, scoped, tag = 'input window, operand 0']
    #allocation3 [shape = 's32[2]{0}', space=sflag, size = 0x8, scoped, tag = 'scoped memory for tpu_custom_call.1']
    #allocation4 [shape = 's32[2]{0}', space=sflag, size = 0x8, scoped, tag = 'scoped memory for tpu_custom_call.1']
    #allocation5 [shape = 'u8[131072]{0}', space=vmem, size = 0x20000, scoped, tag = 'output window, operand 0']
    %6 = vsyncpa [#allocation3], 0
    %s7 = scalar_lea.sflag [#allocation3], 1
    %8 = vsyncpa %s7, 0
    %9 = vsyncpa [#allocation4], 0
    %s10 = scalar_lea.sflag [#allocation4], 1
    %11 = vsyncpa %s10, 0
    loop: start=0, step=1, limit=4
    $region2: #{tpu_custom_call.1} parent=1 // loop_pre_header
      _
    $region3: #{tpu_custom_call.1} parent=1 // loop_header
      %s13 = sphi 0, %s17
      %p14 = scmp.ge.s32.totalorder %s13, 4
      %s20 = sphi 0, %s32
      %s21 = sphi 0, %s28
      %s22 = sphi 0, %s20
      %s23 = sphi 0, %s21
      %s24 = sphi 0, %s22
      %s25 = sphi 0, %s23
      %s37 = sphi 0, %s39
      %s40 = sphi 0, %s37
      %s41 = sphi 0, %s40
      %s57 = sphi 0, %s41
      %s65 = sphi 0, %s67
      %s68 = sphi 0, %s65
      %s69 = sphi 0, %s68
      %s85 = sphi 0, %s69
    $region4: #{tpu_custom_call.1} parent=1 // loop_header_branch
      %16 = sbr.rel (%p14) target = $region8
    $region5: #{tpu_custom_call.1} parent=1 // loop_body
      %s18 = ssub.s32 %s13, 1
      %s19 = ssub.s32 %s13, 2
      %s26 = sadd.s32 1, %s21
      %p27 = scmp.ge.s32.totalorder %s26, 1
      %s28 = scalar_select %p27, 0, %s26
      %s29 = sadd.s32 1, %s20
      %s30 = scalar_select %p27, %s29, %s20
      %p31 = scmp.ge.s32.totalorder %s30, 2
      %s32 = scalar_select %p31, 0, %s30
      %s33 = ssub.s32 %s20, %s32
      %s34 = ssub.s32 %s21, %s28
      %s35 = sor.u32 %s33, %s34
      %p36 = scmp.eq.s32.totalorder %s35, 0
      %s38 = sadd.s32 %s37, 1
      %s39 = scalar_select %p36, %s37, %s38
      %p42 = pneg %p36
      %p43 = scmp.eq.s32.totalorder %s13, 1
      %p44 = por %p42, %p43
      %p45 = scmp.ne.s32.totalorder %s37, %s40
      %p46 = scmp.eq.s32.totalorder %s13, 0
      %p47 = por %p45, %p46
      %p48 = scmp.ne.s32.totalorder %s37, %s40
      %p49 = scmp.eq.s32.totalorder %s18, 1
      %p50 = por %p48, %p49
      %p51 = scmp.ne.s32.totalorder %s40, %s41
      %p52 = scmp.eq.s32.totalorder %s18, 0
      %p53 = por %p51, %p52
      %p54 = scmp.ne.s32.totalorder %s40, %s41
      %p55 = scmp.eq.s32.totalorder %s19, 1
      %p56 = por %p54, %p55
      %p58 = scmp.ne.s32.totalorder %s41, %s57
      %p59 = scmp.eq.s32.totalorder %s19, 0
      %p60 = por %p58, %p59
      %s61 = ssub.s32 %s20, %s32
      %s62 = ssub.s32 %s21, %s28
      %s63 = sor.u32 %s61, %s62
      %p64 = scmp.eq.s32.totalorder %s63, 0
      %s66 = sadd.s32 %s65, 1
      %s67 = scalar_select %p64, %s65, %s66
      %p70 = pneg %p64
      %p71 = scmp.eq.s32.totalorder %s13, 1
      %p72 = por %p70, %p71
      %p73 = scmp.ne.s32.totalorder %s65, %s68
      %p74 = scmp.eq.s32.totalorder %s13, 0
      %p75 = por %p73, %p74
      %p76 = scmp.ne.s32.totalorder %s65, %s68
      %p77 = scmp.eq.s32.totalorder %s18, 1
      %p78 = por %p76, %p77
      %p79 = scmp.ne.s32.totalorder %s68, %s69
      %p80 = scmp.eq.s32.totalorder %s18, 0
      %p81 = por %p79, %p80
      %p82 = scmp.ne.s32.totalorder %s68, %s69
      %p83 = scmp.eq.s32.totalorder %s19, 1
      %p84 = por %p82, %p83
      %p86 = scmp.ne.s32.totalorder %s69, %s85
      %p87 = scmp.eq.s32.totalorder %s19, 0
      %p88 = por %p86, %p87
      %p89 = scmp.le.s32.totalorder 1, %s13
      %p90 = scmp.lt.s32.totalorder %s13, 3
      %p91 = pnand %p89, %p90
      %p92 = pneg %p91
      // Predicated region
      $region9: #{tpu_custom_call.1} parent=5 // pred_check
        _
      $region10: #{tpu_custom_call.1} parent=5 // pred_check_branch
        %94 = sbr.rel (%p91) target = $region12
      $region11: #{tpu_custom_call.1} parent=5 // pred_region
        %s95 = ssub.s32 %s13, 1
      $region12: #{tpu_custom_call.1} parent=5 // pred_fallthru
        _
      %p96 = scmp.lt.s32.totalorder %s13, 2
      // Predicated region
      $region13: #{tpu_custom_call.1} parent=5 // pred_check
        %p97 = pneg %p96
      $region14: #{tpu_custom_call.1} parent=5 // pred_check_branch
        %99 = sbr.rel (%p97) target = $region16
      $region15: #{tpu_custom_call.1} parent=5 // pred_region
        // Predicated region
        $region17: #{tpu_custom_call.1} parent=15 // pred_check
          %p100 = pneg %p47
        $region18: #{tpu_custom_call.1} parent=15 // pred_check_branch
          %102 = sbr.rel (%p100) target = $region20
        $region19: #{tpu_custom_call.1} parent=15 // pred_region
          %s103 = sand.u32 %s37, 1
          %s104 = scalar_lea.sflag [#allocation3], %s103
          %s105 = sand.u32 %s37, 1
          %s106 = smul.addr %s105, 128
          %s107 = scalar_lea.vmem [#allocation2], %s106
          %s108 = smul.u32 4, %s21
          %110 = vsyncadd %s104, 0
          %s111 = smul.addr %s20, 16
          %s112 = sadd.s32 %s108, %s111
          %s113 = smul.addr %s112, 8
          %s114 = scalar_lea.hbm %s0, %s113
          %s115 = sshll.u32 %s114, 4
          %s116 = int_to_ptr.hbm [resolvable:$true] %s115
          %s117 = sshll.u32 %s107, 4
          %s118 = int_to_ptr.vmem [resolvable:$true] %s117
          %123 = dma.hbm_to_vmem [thread:$0]  %s116, 2048, %s118, %s104, 128, 128, 8
        $region20: #{tpu_custom_call.1} parent=15 // pred_fallthru
          _
      $region16: #{tpu_custom_call.1} parent=5 // pred_fallthru
        _
      %p124 = scmp.le.s32.totalorder 1, %s13
      %p125 = scmp.lt.s32.totalorder %s13, 3
      %p126 = pnand %p124, %p125
      %p127 = pneg %p126
      // Predicated region
      $region21: #{tpu_custom_call.1} parent=5 // pred_check
        _
      $region22: #{tpu_custom_call.1} parent=5 // pred_check_branch
        %129 = sbr.rel (%p126) target = $region24
      $region23: #{tpu_custom_call.1} parent=5 // pred_region
        %s130 = ssub.s32 %s13, 1
        %s131 = sand.u32 %s40, 1
        %s132 = scalar_lea.sflag [#allocation3], %s131
        %s133 = sand.u32 %s40, 1
        %s134 = smul.addr %s133, 128
        %s135 = scalar_lea.vmem [#allocation2], %s134
        // Predicated region
        $region25: #{tpu_custom_call.1} parent=23 // pred_check
          %p136 = pneg %p53
        $region26: #{tpu_custom_call.1} parent=23 // pred_check_branch
          %138 = sbr.rel (%p136) target = $region28
        $region27: #{tpu_custom_call.1} parent=23 // pred_region
          %140 = dma.done %s132, 2048
        $region28: #{tpu_custom_call.1} parent=23 // pred_fallthru
          _
        %s141 = sand.u32 %s40, 1
        %s142 = scalar_lea.sflag [#allocation3], %s141
        %s143 = sand.u32 %s40, 1
        %s144 = smul.addr %s143, 128
        %s145 = scalar_lea.vmem [#allocation2], %s144
        %p146 = pneg %p53
        %p147 = pneg %p50
        %p148 = pneg %p81
        %p149 = pneg %p78
        %s150 = sand.u32 %s68, 1
        %s151 = scalar_lea.sflag [#allocation4], %s150
        %s152 = sand.u32 %s68, 1
        %s153 = smul.addr %s152, 128
        %s154 = scalar_lea.vmem [#allocation5], %s153
        %s155 = smul.u32 4, %s23
        %s156 = smul.u32 4, %s23
        %s157 = smul.u32 %s23, 12
        %p158 = scmp.gt.s32.totalorder %s157, 4
        %p159 = scmp.lt.s32.totalorder %s157, 8
        %p160 = pnand %p158, %p159
        %p161 = pneg %p160
        // Predicated region
        $region29: #{tpu_custom_call.1} parent=23 // pred_check
          _
        $region30: #{tpu_custom_call.1} parent=23 // pred_check_branch
          %163 = sbr.rel (%p160) target = $region32
        $region31: #{tpu_custom_call.1} parent=23 // pred_region
          %v164 = vld [vmem:[%s135] sm:$0xff]
          %v165 = vld [vmem:[%s135 + $0x20] sm:$0xff]
          %v166 = vld [vmem:[%s135 + $0x40] sm:$0xff]
          %v167 = vld [vmem:[%s135 + $0x60] sm:$0xff]
          %vm168 = vcmask 195712
          %169 = vst.msk [vmem:[%s154] sm:$0xff] %vm168, %v164
          %170 = vst.msk [vmem:[%s154 + $0x20] sm:$0xff] %vm168, %v165
          %171 = vst.msk [vmem:[%s154 + $0x40] sm:$0xff] %vm168, %v166
          %172 = vst.msk [vmem:[%s154 + $0x60] sm:$0xff] %vm168, %v167
          %v173 = vld [vmem:[%s135] sm:$0xff]
          %v174 = vld [vmem:[%s135 + $0x20] sm:$0xff]
          %v175 = vld [vmem:[%s135 + $0x40] sm:$0xff]
          %v176 = vld [vmem:[%s135 + $0x60] sm:$0xff]
          %177 = vxpose.xlu0.b32.start [1/16] %v173, 128
          %178 = vxpose.xlu0.b32.cont [2/16] 0.0, 128
          %179 = vxpose.xlu0.b32.cont [3/16] 0.0, 128
          %180 = vxpose.xlu0.b32.cont [4/16] 0.0, 128
          %181 = vxpose.xlu0.b32.cont [5/16] 0.0, 128
          %182 = vxpose.xlu0.b32.cont [6/16] 0.0, 128
          %183 = vxpose.xlu0.b32.cont [7/16] 0.0, 128
          %184 = vxpose.xlu0.b32.cont [8/16] 0.0, 128
          %185 = vxpose.xlu0.b32.cont [9/16] 0.0, 128
          %186 = vxpose.xlu0.b32.cont [10/16] 0.0, 128
          %187 = vxpose.xlu0.b32.cont [11/16] 0.0, 128
          %188 = vxpose.xlu0.b32.cont [12/16] 0.0, 128
          %189 = vxpose.xlu0.b32.cont [13/16] 0.0, 128
          %190 = vxpose.xlu0.b32.cont [14/16] 0.0, 128
          %191 = vxpose.xlu0.b32.cont [15/16] 0.0, 128
          %192 = vxpose.xlu0.b32.end [16/16] 0.0, 128
          %v193 = vpop.trf.xlu0
          %v194 = vpop.trf.xlu0
          %v195 = vpop.trf.xlu0
          %v196 = vpop.trf.xlu0
          %v197 = vpop.trf.xlu0
          %v198 = vpop.trf.xlu0
          %v199 = vpop.trf.xlu0
          %v200 = vpop.trf.xlu0
          %v201 = vpop.trf.xlu0
          %v202 = vpop.trf.xlu0
          %v203 = vpop.trf.xlu0
          %v204 = vpop.trf.xlu0
          %v205 = vpop.trf.xlu0
          %v206 = vpop.trf.xlu0
          %v207 = vpop.trf.xlu0
          %v208 = vpop.trf.xlu0
          %209 = vxpose.xlu0.b32.start [1/16] %v174, 128
          %210 = vxpose.xlu0.b32.cont [2/16] 0.0, 128
          %211 = vxpose.xlu0.b32.cont [3/16] 0.0, 128
          %212 = vxpose.xlu0.b32.cont [4/16] 0.0, 128
          %213 = vxpose.xlu0.b32.cont [5/16] 0.0, 128
          %214 = vxpose.xlu0.b32.cont [6/16] 0.0, 128
          %215 = vxpose.xlu0.b32.cont [7/16] 0.0, 128
          %216 = vxpose.xlu0.b32.cont [8/16] 0.0, 128
          %217 = vxpose.xlu0.b32.cont [9/16] 0.0, 128
          %218 = vxpose.xlu0.b32.cont [10/16] 0.0, 128
          %219 = vxpose.xlu0.b32.cont [11/16] 0.0, 128
          %220 = vxpose.xlu0.b32.cont [12/16] 0.0, 128
          %221 = vxpose.xlu0.b32.cont [13/16] 0.0, 128
          %222 = vxpose.xlu0.b32.cont [14/16] 0.0, 128
          %223 = vxpose.xlu0.b32.cont [15/16] 0.0, 128
          %224 = vxpose.xlu0.b32.end [16/16] 0.0, 128
          %v225 = vpop.trf.xlu0
          %v226 = vpop.trf.xlu0
          %v227 = vpop.trf.xlu0
          %v228 = vpop.trf.xlu0
          %v229 = vpop.trf.xlu0
          %v230 = vpop.trf.xlu0
          %v231 = vpop.trf.xlu0
          %v232 = vpop.trf.xlu0
          %v233 = vpop.trf.xlu0
          %v234 = vpop.trf.xlu0
          %v235 = vpop.trf.xlu0
          %v236 = vpop.trf.xlu0
          %v237 = vpop.trf.xlu0
          %v238 = vpop.trf.xlu0
          %v239 = vpop.trf.xlu0
          %v240 = vpop.trf.xlu0
          %241 = vxpose.xlu0.b32.start [1/16] %v175, 128
          %242 = vxpose.xlu0.b32.cont [2/16] 0.0, 128
          %243 = vxpose.xlu0.b32.cont [3/16] 0.0, 128
          %244 = vxpose.xlu0.b32.cont [4/16] 0.0, 128
          %245 = vxpose.xlu0.b32.cont [5/16] 0.0, 128
          %246 = vxpose.xlu0.b32.cont [6/16] 0.0, 128
          %247 = vxpose.xlu0.b32.cont [7/16] 0.0, 128
          %248 = vxpose.xlu0.b32.cont [8/16] 0.0, 128
          %249 = vxpose.xlu0.b32.cont [9/16] 0.0, 128
          %250 = vxpose.xlu0.b32.cont [10/16] 0.0, 128
          %251 = vxpose.xlu0.b32.cont [11/16] 0.0, 128
          %252 = vxpose.xlu0.b32.cont [12/16] 0.0, 128
          %253 = vxpose.xlu0.b32.cont [13/16] 0.0, 128
          %254 = vxpose.xlu0.b32.cont [14/16] 0.0, 128
          %255 = vxpose.xlu0.b32.cont [15/16] 0.0, 128
          %256 = vxpose.xlu0.b32.end [16/16] 0.0, 128
          %v257 = vpop.trf.xlu0
          %v258 = vpop.trf.xlu0
          %v259 = vpop.trf.xlu0
          %v260 = vpop.trf.xlu0
          %v261 = vpop.trf.xlu0
          %v262 = vpop.trf.xlu0
          %v263 = vpop.trf.xlu0
          %v264 = vpop.trf.xlu0
          %v265 = vpop.trf.xlu0
          %v266 = vpop.trf.xlu0
          %v267 = vpop.trf.xlu0
          %v268 = vpop.trf.xlu0
          %v269 = vpop.trf.xlu0
          %v270 = vpop.trf.xlu0
          %v271 = vpop.trf.xlu0
          %v272 = vpop.trf.xlu0
          %273 = vxpose.xlu0.b32.start [1/16] %v176, 128
          %274 = vxpose.xlu0.b32.cont [2/16] 0.0, 128
          %275 = vxpose.xlu0.b32.cont [3/16] 0.0, 128
          %276 = vxpose.xlu0.b32.cont [4/16] 0.0, 128
          %277 = vxpose.xlu0.b32.cont [5/16] 0.0, 128
          %278 = vxpose.xlu0.b32.cont [6/16] 0.0, 128
          %279 = vxpose.xlu0.b32.cont [7/16] 0.0, 128
          %280 = vxpose.xlu0.b32.cont [8/16] 0.0, 128
          %281 = vxpose.xlu0.b32.cont [9/16] 0.0, 128
          %282 = vxpose.xlu0.b32.cont [10/16] 0.0, 128
          %283 = vxpose.xlu0.b32.cont [11/16] 0.0, 128
          %284 = vxpose.xlu0.b32.cont [12/16] 0.0, 128
          %285 = vxpose.xlu0.b32.cont [13/16] 0.0, 128
          %286 = vxpose.xlu0.b32.cont [14/16] 0.0, 128
          %287 = vxpose.xlu0.b32.cont [15/16] 0.0, 128
          %288 = vxpose.xlu0.b32.end [16/16] 0.0, 128
          %v289 = vpop.trf.xlu0
          %v290 = vpop.trf.xlu0
          %v291 = vpop.trf.xlu0
          %v292 = vpop.trf.xlu0
          %v293 = vpop.trf.xlu0
          %v294 = vpop.trf.xlu0
          %v295 = vpop.trf.xlu0
          %v296 = vpop.trf.xlu0
          %v297 = vpop.trf.xlu0
          %v298 = vpop.trf.xlu0
          %v299 = vpop.trf.xlu0
          %v300 = vpop.trf.xlu0
          %v301 = vpop.trf.xlu0
          %v302 = vpop.trf.xlu0
          %v303 = vpop.trf.xlu0
          %v304 = vpop.trf.xlu0
          %vm305 = vcmask 64512
          %306 = vst.msk [vmem:[%s154] sm:$0xff] %vm305, %v193
          %307 = vst.msk [vmem:[%s154 + $0x20] sm:$0xff] %vm305, %v225
          %308 = vst.msk [vmem:[%s154 + $0x40] sm:$0xff] %vm305, %v257
          %309 = vst.msk [vmem:[%s154 + $0x60] sm:$0xff] %vm305, %v289
          %v310 = vld [vmem:[%s135] sm:$0xff]
          %v311 = vld [vmem:[%s135 + $0x20] sm:$0xff]
          %v312 = vld [vmem:[%s135 + $0x40] sm:$0xff]
          %v313 = vld [vmem:[%s135 + $0x60] sm:$0xff]
          %318 = vrot.lane.b32.xlu0 %v310, 120
          %v319 = vpop.permute.xlu0 %318
          %320 = vrot.lane.b32.xlu0 %v311, 120
          %v321 = vpop.permute.xlu0 %320
          %322 = vrot.lane.b32.xlu0 %v312, 120
          %v323 = vpop.permute.xlu0 %322
          %324 = vrot.lane.b32.xlu0 %v313, 120
          %v325 = vpop.permute.xlu0 %324
          %330 = vxpose.xlu0.b32.start [1/16] %v319, 128
          %331 = vxpose.xlu0.b32.cont [2/16] 0.0, 128
          %332 = vxpose.xlu0.b32.cont [3/16] 0.0, 128
          %333 = vxpose.xlu0.b32.cont [4/16] 0.0, 128
          %334 = vxpose.xlu0.b32.cont [5/16] 0.0, 128
          %335 = vxpose.xlu0.b32.cont [6/16] 0.0, 128
          %336 = vxpose.xlu0.b32.cont [7/16] 0.0, 128
          %337 = vxpose.xlu0.b32.cont [8/16] 0.0, 128
          %338 = vxpose.xlu0.b32.cont [9/16] 0.0, 128
          %339 = vxpose.xlu0.b32.cont [10/16] 0.0, 128
          %340 = vxpose.xlu0.b32.cont [11/16] 0.0, 128
          %341 = vxpose.xlu0.b32.cont [12/16] 0.0, 128
          %342 = vxpose.xlu0.b32.cont [13/16] 0.0, 128
          %343 = vxpose.xlu0.b32.cont [14/16] 0.0, 128
          %344 = vxpose.xlu0.b32.cont [15/16] 0.0, 128
          %345 = vxpose.xlu0.b32.end [16/16] 0.0, 128
          %v346 = vpop.trf.xlu0
          %v347 = vpop.trf.xlu0
          %v348 = vpop.trf.xlu0
          %v349 = vpop.trf.xlu0
          %v350 = vpop.trf.xlu0
          %v351 = vpop.trf.xlu0
          %v352 = vpop.trf.xlu0
          %v353 = vpop.trf.xlu0
          %v354 = vpop.trf.xlu0
          %v355 = vpop.trf.xlu0
          %v356 = vpop.trf.xlu0
          %v357 = vpop.trf.xlu0
          %v358 = vpop.trf.xlu0
          %v359 = vpop.trf.xlu0
          %v360 = vpop.trf.xlu0
          %v361 = vpop.trf.xlu0
          %362 = vxpose.xlu0.b32.start [1/16] %v321, 128
          %363 = vxpose.xlu0.b32.cont [2/16] 0.0, 128
          %364 = vxpose.xlu0.b32.cont [3/16] 0.0, 128
          %365 = vxpose.xlu0.b32.cont [4/16] 0.0, 128
          %366 = vxpose.xlu0.b32.cont [5/16] 0.0, 128
          %367 = vxpose.xlu0.b32.cont [6/16] 0.0, 128
          %368 = vxpose.xlu0.b32.cont [7/16] 0.0, 128
          %369 = vxpose.xlu0.b32.cont [8/16] 0.0, 128
          %370 = vxpose.xlu0.b32.cont [9/16] 0.0, 128
          %371 = vxpose.xlu0.b32.cont [10/16] 0.0, 128
          %372 = vxpose.xlu0.b32.cont [11/16] 0.0, 128
          %373 = vxpose.xlu0.b32.cont [12/16] 0.0, 128
          %374 = vxpose.xlu0.b32.cont [13/16] 0.0, 128
          %375 = vxpose.xlu0.b32.cont [14/16] 0.0, 128
          %376 = vxpose.xlu0.b32.cont [15/16] 0.0, 128
          %377 = vxpose.xlu0.b32.end [16/16] 0.0, 128
          %v378 = vpop.trf.xlu0
          %v379 = vpop.trf.xlu0
          %v380 = vpop.trf.xlu0
          %v381 = vpop.trf.xlu0
          %v382 = vpop.trf.xlu0
          %v383 = vpop.trf.xlu0
          %v384 = vpop.trf.xlu0
          %v385 = vpop.trf.xlu0
          %v386 = vpop.trf.xlu0
          %v387 = vpop.trf.xlu0
          %v388 = vpop.trf.xlu0
          %v389 = vpop.trf.xlu0
          %v390 = vpop.trf.xlu0
          %v391 = vpop.trf.xlu0
          %v392 = vpop.trf.xlu0
          %v393 = vpop.trf.xlu0
          %394 = vxpose.xlu0.b32.start [1/16] %v323, 128
          %395 = vxpose.xlu0.b32.cont [2/16] 0.0, 128
          %396 = vxpose.xlu0.b32.cont [3/16] 0.0, 128
          %397 = vxpose.xlu0.b32.cont [4/16] 0.0, 128
          %398 = vxpose.xlu0.b32.cont [5/16] 0.0, 128
          %399 = vxpose.xlu0.b32.cont [6/16] 0.0, 128
          %400 = vxpose.xlu0.b32.cont [7/16] 0.0, 128
          %401 = vxpose.xlu0.b32.cont [8/16] 0.0, 128
          %402 = vxpose.xlu0.b32.cont [9/16] 0.0, 128
          %403 = vxpose.xlu0.b32.cont [10/16] 0.0, 128
          %404 = vxpose.xlu0.b32.cont [11/16] 0.0, 128
          %405 = vxpose.xlu0.b32.cont [12/16] 0.0, 128
          %406 = vxpose.xlu0.b32.cont [13/16] 0.0, 128
          %407 = vxpose.xlu0.b32.cont [14/16] 0.0, 128
          %408 = vxpose.xlu0.b32.cont [15/16] 0.0, 128
          %409 = vxpose.xlu0.b32.end [16/16] 0.0, 128
          %v410 = vpop.trf.xlu0
          %v411 = vpop.trf.xlu0
          %v412 = vpop.trf.xlu0
          %v413 = vpop.trf.xlu0
          %v414 = vpop.trf.xlu0
          %v415 = vpop.trf.xlu0
          %v416 = vpop.trf.xlu0
          %v417 = vpop.trf.xlu0
          %v418 = vpop.trf.xlu0
          %v419 = vpop.trf.xlu0
          %v420 = vpop.trf.xlu0
          %v421 = vpop.trf.xlu0
          %v422 = vpop.trf.xlu0
          %v423 = vpop.trf.xlu0
          %v424 = vpop.trf.xlu0
          %v425 = vpop.trf.xlu0
          %426 = vxpose.xlu0.b32.start [1/16] %v325, 128
          %427 = vxpose.xlu0.b32.cont [2/16] 0.0, 128
          %428 = vxpose.xlu0.b32.cont [3/16] 0.0, 128
          %429 = vxpose.xlu0.b32.cont [4/16] 0.0, 128
          %430 = vxpose.xlu0.b32.cont [5/16] 0.0, 128
          %431 = vxpose.xlu0.b32.cont [6/16] 0.0, 128
          %432 = vxpose.xlu0.b32.cont [7/16] 0.0, 128
          %433 = vxpose.xlu0.b32.cont [8/16] 0.0, 128
          %434 = vxpose.xlu0.b32.cont [9/16] 0.0, 128
          %435 = vxpose.xlu0.b32.cont [10/16] 0.0, 128
          %436 = vxpose.xlu0.b32.cont [11/16] 0.0, 128
          %437 = vxpose.xlu0.b32.cont [12/16] 0.0, 128
          %438 = vxpose.xlu0.b32.cont [13/16] 0.0, 128
          %439 = vxpose.xlu0.b32.cont [14/16] 0.0, 128
          %440 = vxpose.xlu0.b32.cont [15/16] 0.0, 128
          %441 = vxpose.xlu0.b32.end [16/16] 0.0, 128
          %v442 = vpop.trf.xlu0
          %v443 = vpop.trf.xlu0
          %v444 = vpop.trf.xlu0
          %v445 = vpop.trf.xlu0
          %v446 = vpop.trf.xlu0
          %v447 = vpop.trf.xlu0
          %v448 = vpop.trf.xlu0
          %v449 = vpop.trf.xlu0
          %v450 = vpop.trf.xlu0
          %v451 = vpop.trf.xlu0
          %v452 = vpop.trf.xlu0
          %v453 = vpop.trf.xlu0
          %v454 = vpop.trf.xlu0
          %v455 = vpop.trf.xlu0
          %v456 = vpop.trf.xlu0
          %v457 = vpop.trf.xlu0
          %462 = vrot.lane.b32.xlu0 %v346, 8
          %v463 = vpop.permute.xlu0 %462
          %464 = vrot.lane.b32.xlu0 %v378, 8
          %v465 = vpop.permute.xlu0 %464
          %466 = vrot.lane.b32.xlu0 %v410, 8
          %v467 = vpop.permute.xlu0 %466
          %468 = vrot.lane.b32.xlu0 %v442, 8
          %v469 = vpop.permute.xlu0 %468
          %vm474 = vcmask 130112
          %475 = vst.msk [vmem:[%s154] sm:$0xff] %vm474, %v463
          %476 = vst.msk [vmem:[%s154 + $0x20] sm:$0xff] %vm474, %v465
          %477 = vst.msk [vmem:[%s154 + $0x40] sm:$0xff] %vm474, %v467
          %478 = vst.msk [vmem:[%s154 + $0x60] sm:$0xff] %vm474, %v469
          %v479 = vld [vmem:[%s135] sm:$0xff]
          %v480 = vld [vmem:[%s135 + $0x20] sm:$0xff]
          %v481 = vld [vmem:[%s135 + $0x40] sm:$0xff]
          %v482 = vld [vmem:[%s135 + $0x60] sm:$0xff]
          %487 = vrot.lane.b32.xlu0 %v479, 104
          %v488 = vpop.permute.xlu0 %487
          %489 = vrot.lane.b32.xlu0 %v480, 104
          %v490 = vpop.permute.xlu0 %489
          %491 = vrot.lane.b32.xlu0 %v481, 104
          %v492 = vpop.permute.xlu0 %491
          %493 = vrot.lane.b32.xlu0 %v482, 104
          %v494 = vpop.permute.xlu0 %493
          %499 = vxpose.xlu0.b32.start [1/16] %v488, 128
          %500 = vxpose.xlu0.b32.cont [2/16] 0.0, 128
          %501 = vxpose.xlu0.b32.cont [3/16] 0.0, 128
          %502 = vxpose.xlu0.b32.cont [4/16] 0.0, 128
          %503 = vxpose.xlu0.b32.cont [5/16] 0.0, 128
          %504 = vxpose.xlu0.b32.cont [6/16] 0.0, 128
          %505 = vxpose.xlu0.b32.cont [7/16] 0.0, 128
          %506 = vxpose.xlu0.b32.cont [8/16] 0.0, 128
          %507 = vxpose.xlu0.b32.cont [9/16] 0.0, 128
          %508 = vxpose.xlu0.b32.cont [10/16] 0.0, 128
          %509 = vxpose.xlu0.b32.cont [11/16] 0.0, 128
          %510 = vxpose.xlu0.b32.cont [12/16] 0.0, 128
          %511 = vxpose.xlu0.b32.cont [13/16] 0.0, 128
          %512 = vxpose.xlu0.b32.cont [14/16] 0.0, 128
          %513 = vxpose.xlu0.b32.cont [15/16] 0.0, 128
          %514 = vxpose.xlu0.b32.end [16/16] 0.0, 128
          %v515 = vpop.trf.xlu0
          %v516 = vpop.trf.xlu0
          %v517 = vpop.trf.xlu0
          %v518 = vpop.trf.xlu0
          %v519 = vpop.trf.xlu0
          %v520 = vpop.trf.xlu0
          %v521 = vpop.trf.xlu0
          %v522 = vpop.trf.xlu0
          %v523 = vpop.trf.xlu0
          %v524 = vpop.trf.xlu0
          %v525 = vpop.trf.xlu0
          %v526 = vpop.trf.xlu0
          %v527 = vpop.trf.xlu0
          %v528 = vpop.trf.xlu0
          %v529 = vpop.trf.xlu0
          %v530 = vpop.trf.xlu0
          %531 = vxpose.xlu0.b32.start [1/16] %v490, 128
          %532 = vxpose.xlu0.b32.cont [2/16] 0.0, 128
          %533 = vxpose.xlu0.b32.cont [3/16] 0.0, 128
          %534 = vxpose.xlu0.b32.cont [4/16] 0.0, 128
          %535 = vxpose.xlu0.b32.cont [5/16] 0.0, 128
          %536 = vxpose.xlu0.b32.cont [6/16] 0.0, 128
          %537 = vxpose.xlu0.b32.cont [7/16] 0.0, 128
          %538 = vxpose.xlu0.b32.cont [8/16] 0.0, 128
          %539 = vxpose.xlu0.b32.cont [9/16] 0.0, 128
          %540 = vxpose.xlu0.b32.cont [10/16] 0.0, 128
          %541 = vxpose.xlu0.b32.cont [11/16] 0.0, 128
          %542 = vxpose.xlu0.b32.cont [12/16] 0.0, 128
          %543 = vxpose.xlu0.b32.cont [13/16] 0.0, 128
          %544 = vxpose.xlu0.b32.cont [14/16] 0.0, 128
          %545 = vxpose.xlu0.b32.cont [15/16] 0.0, 128
          %546 = vxpose.xlu0.b32.end [16/16] 0.0, 128
          %v547 = vpop.trf.xlu0
          %v548 = vpop.trf.xlu0
          %v549 = vpop.trf.xlu0
          %v550 = vpop.trf.xlu0
          %v551 = vpop.trf.xlu0
          %v552 = vpop.trf.xlu0
          %v553 = vpop.trf.xlu0
          %v554 = vpop.trf.xlu0
          %v555 = vpop.trf.xlu0
          %v556 = vpop.trf.xlu0
          %v557 = vpop.trf.xlu0
          %v558 = vpop.trf.xlu0
          %v559 = vpop.trf.xlu0
          %v560 = vpop.trf.xlu0
          %v561 = vpop.trf.xlu0
          %v562 = vpop.trf.xlu0
          %563 = vxpose.xlu0.b32.start [1/16] %v492, 128
          %564 = vxpose.xlu0.b32.cont [2/16] 0.0, 128
          %565 = vxpose.xlu0.b32.cont [3/16] 0.0, 128
          %566 = vxpose.xlu0.b32.cont [4/16] 0.0, 128
          %567 = vxpose.xlu0.b32.cont [5/16] 0.0, 128
          %568 = vxpose.xlu0.b32.cont [6/16] 0.0, 128
          %569 = vxpose.xlu0.b32.cont [7/16] 0.0, 128
          %570 = vxpose.xlu0.b32.cont [8/16] 0.0, 128
          %571 = vxpose.xlu0.b32.cont [9/16] 0.0, 128
          %572 = vxpose.xlu0.b32.cont [10/16] 0.0, 128
          %573 = vxpose.xlu0.b32.cont [11/16] 0.0, 128
          %574 = vxpose.xlu0.b32.cont [12/16] 0.0, 128
          %575 = vxpose.xlu0.b32.cont [13/16] 0.0, 128
          %576 = vxpose.xlu0.b32.cont [14/16] 0.0, 128
          %577 = vxpose.xlu0.b32.cont [15/16] 0.0, 128
          %578 = vxpose.xlu0.b32.end [16/16] 0.0, 128
          %v579 = vpop.trf.xlu0
          %v580 = vpop.trf.xlu0
          %v581 = vpop.trf.xlu0
          %v582 = vpop.trf.xlu0
          %v583 = vpop.trf.xlu0
          %v584 = vpop.trf.xlu0
          %v585 = vpop.trf.xlu0
          %v586 = vpop.trf.xlu0
          %v587 = vpop.trf.xlu0
          %v588 = vpop.trf.xlu0
          %v589 = vpop.trf.xlu0
          %v590 = vpop.trf.xlu0
          %v591 = vpop.trf.xlu0
          %v592 = vpop.trf.xlu0
          %v593 = vpop.trf.xlu0
          %v594 = vpop.trf.xlu0
          %595 = vxpose.xlu0.b32.start [1/16] %v494, 128
          %596 = vxpose.xlu0.b32.cont [2/16] 0.0, 128
          %597 = vxpose.xlu0.b32.cont [3/16] 0.0, 128
          %598 = vxpose.xlu0.b32.cont [4/16] 0.0, 128
          %599 = vxpose.xlu0.b32.cont [5/16] 0.0, 128
          %600 = vxpose.xlu0.b32.cont [6/16] 0.0, 128
          %601 = vxpose.xlu0.b32.cont [7/16] 0.0, 128
          %602 = vxpose.xlu0.b32.cont [8/16] 0.0, 128
          %603 = vxpose.xlu0.b32.cont [9/16] 0.0, 128
          %604 = vxpose.xlu0.b32.cont [10/16] 0.0, 128
          %605 = vxpose.xlu0.b32.cont [11/16] 0.0, 128
          %606 = vxpose.xlu0.b32.cont [12/16] 0.0, 128
          %607 = vxpose.xlu0.b32.cont [13/16] 0.0, 128
          %608 = vxpose.xlu0.b32.cont [14/16] 0.0, 128
          %609 = vxpose.xlu0.b32.cont [15/16] 0.0, 128
          %610 = vxpose.xlu0.b32.end [16/16] 0.0, 128
          %v611 = vpop.trf.xlu0
          %v612 = vpop.trf.xlu0
          %v613 = vpop.trf.xlu0
          %v614 = vpop.trf.xlu0
          %v615 = vpop.trf.xlu0
          %v616 = vpop.trf.xlu0
          %v617 = vpop.trf.xlu0
          %v618 = vpop.trf.xlu0
          %v619 = vpop.trf.xlu0
          %v620 = vpop.trf.xlu0
          %v621 = vpop.trf.xlu0
          %v622 = vpop.trf.xlu0
          %v623 = vpop.trf.xlu0
          %v624 = vpop.trf.xlu0
          %v625 = vpop.trf.xlu0
          %v626 = vpop.trf.xlu0
          %631 = vrot.lane.b32.xlu0 %v515, 24
          %v632 = vpop.permute.xlu0 %631
          %633 = vrot.lane.b32.xlu0 %v547, 24
          %v634 = vpop.permute.xlu0 %633
          %635 = vrot.lane.b32.xlu0 %v579, 24
          %v636 = vpop.permute.xlu0 %635
          %637 = vrot.lane.b32.xlu0 %v611, 24
          %v638 = vpop.permute.xlu0 %637
          %vm643 = vcmask 261312
          %644 = vst.msk [vmem:[%s154] sm:$0xff] %vm643, %v632
          %645 = vst.msk [vmem:[%s154 + $0x20] sm:$0xff] %vm643, %v634
          %646 = vst.msk [vmem:[%s154 + $0x40] sm:$0xff] %vm643, %v636
          %647 = vst.msk [vmem:[%s154 + $0x60] sm:$0xff] %vm643, %v638
        $region32: #{tpu_custom_call.1} parent=23 // pred_fallthru
          _
        // Predicated region
        $region33: #{tpu_custom_call.1} parent=23 // pred_check
          %p648 = pneg %p160
        $region34: #{tpu_custom_call.1} parent=23 // pred_check_branch
          %650 = sbr.rel (%p648) target = $region36
        $region35: #{tpu_custom_call.1} parent=23 // pred_region
          %v651 = vld [vmem:[%s135] sm:$0xff]
          %v652 = vld [vmem:[%s135 + $0x20] sm:$0xff]
          %v653 = vld [vmem:[%s135 + $0x40] sm:$0xff]
          %v654 = vld [vmem:[%s135 + $0x60] sm:$0xff]
          %655 = vxpose.xlu0.b32.start [1/16] %v651, 128
          %656 = vxpose.xlu0.b32.cont [2/16] 0.0, 128
          %657 = vxpose.xlu0.b32.cont [3/16] 0.0, 128
          %658 = vxpose.xlu0.b32.cont [4/16] 0.0, 128
          %659 = vxpose.xlu0.b32.cont [5/16] 0.0, 128
          %660 = vxpose.xlu0.b32.cont [6/16] 0.0, 128
          %661 = vxpose.xlu0.b32.cont [7/16] 0.0, 128
          %662 = vxpose.xlu0.b32.cont [8/16] 0.0, 128
          %663 = vxpose.xlu0.b32.cont [9/16] 0.0, 128
          %664 = vxpose.xlu0.b32.cont [10/16] 0.0, 128
          %665 = vxpose.xlu0.b32.cont [11/16] 0.0, 128
          %666 = vxpose.xlu0.b32.cont [12/16] 0.0, 128
          %667 = vxpose.xlu0.b32.cont [13/16] 0.0, 128
          %668 = vxpose.xlu0.b32.cont [14/16] 0.0, 128
          %669 = vxpose.xlu0.b32.cont [15/16] 0.0, 128
          %670 = vxpose.xlu0.b32.end [16/16] 0.0, 128
          %v671 = vpop.trf.xlu0
          %v672 = vpop.trf.xlu0
          %v673 = vpop.trf.xlu0
          %v674 = vpop.trf.xlu0
          %v675 = vpop.trf.xlu0
          %v676 = vpop.trf.xlu0
          %v677 = vpop.trf.xlu0
          %v678 = vpop.trf.xlu0
          %v679 = vpop.trf.xlu0
          %v680 = vpop.trf.xlu0
          %v681 = vpop.trf.xlu0
          %v682 = vpop.trf.xlu0
          %v683 = vpop.trf.xlu0
          %v684 = vpop.trf.xlu0
          %v685 = vpop.trf.xlu0
          %v686 = vpop.trf.xlu0
          %687 = vxpose.xlu0.b32.start [1/16] %v652, 128
          %688 = vxpose.xlu0.b32.cont [2/16] 0.0, 128
          %689 = vxpose.xlu0.b32.cont [3/16] 0.0, 128
          %690 = vxpose.xlu0.b32.cont [4/16] 0.0, 128
          %691 = vxpose.xlu0.b32.cont [5/16] 0.0, 128
          %692 = vxpose.xlu0.b32.cont [6/16] 0.0, 128
          %693 = vxpose.xlu0.b32.cont [7/16] 0.0, 128
          %694 = vxpose.xlu0.b32.cont [8/16] 0.0, 128
          %695 = vxpose.xlu0.b32.cont [9/16] 0.0, 128
          %696 = vxpose.xlu0.b32.cont [10/16] 0.0, 128
          %697 = vxpose.xlu0.b32.cont [11/16] 0.0, 128
          %698 = vxpose.xlu0.b32.cont [12/16] 0.0, 128
          %699 = vxpose.xlu0.b32.cont [13/16] 0.0, 128
          %700 = vxpose.xlu0.b32.cont [14/16] 0.0, 128
          %701 = vxpose.xlu0.b32.cont [15/16] 0.0, 128
          %702 = vxpose.xlu0.b32.end [16/16] 0.0, 128
          %v703 = vpop.trf.xlu0
          %v704 = vpop.trf.xlu0
          %v705 = vpop.trf.xlu0
          %v706 = vpop.trf.xlu0
          %v707 = vpop.trf.xlu0
          %v708 = vpop.trf.xlu0
          %v709 = vpop.trf.xlu0
          %v710 = vpop.trf.xlu0
          %v711 = vpop.trf.xlu0
          %v712 = vpop.trf.xlu0
          %v713 = vpop.trf.xlu0
          %v714 = vpop.trf.xlu0
          %v715 = vpop.trf.xlu0
          %v716 = vpop.trf.xlu0
          %v717 = vpop.trf.xlu0
          %v718 = vpop.trf.xlu0
          %719 = vxpose.xlu0.b32.start [1/16] %v653, 128
          %720 = vxpose.xlu0.b32.cont [2/16] 0.0, 128
          %721 = vxpose.xlu0.b32.cont [3/16] 0.0, 128
          %722 = vxpose.xlu0.b32.cont [4/16] 0.0, 128
          %723 = vxpose.xlu0.b32.cont [5/16] 0.0, 128
          %724 = vxpose.xlu0.b32.cont [6/16] 0.0, 128
          %725 = vxpose.xlu0.b32.cont [7/16] 0.0, 128
          %726 = vxpose.xlu0.b32.cont [8/16] 0.0, 128
          %727 = vxpose.xlu0.b32.cont [9/16] 0.0, 128
          %728 = vxpose.xlu0.b32.cont [10/16] 0.0, 128
          %729 = vxpose.xlu0.b32.cont [11/16] 0.0, 128
          %730 = vxpose.xlu0.b32.cont [12/16] 0.0, 128
          %731 = vxpose.xlu0.b32.cont [13/16] 0.0, 128
          %732 = vxpose.xlu0.b32.cont [14/16] 0.0, 128
          %733 = vxpose.xlu0.b32.cont [15/16] 0.0, 128
          %734 = vxpose.xlu0.b32.end [16/16] 0.0, 128
          %v735 = vpop.trf.xlu0
          %v736 = vpop.trf.xlu0
          %v737 = vpop.trf.xlu0
          %v738 = vpop.trf.xlu0
          %v739 = vpop.trf.xlu0
          %v740 = vpop.trf.xlu0
          %v741 = vpop.trf.xlu0
          %v742 = vpop.trf.xlu0
          %v743 = vpop.trf.xlu0
          %v744 = vpop.trf.xlu0
          %v745 = vpop.trf.xlu0
          %v746 = vpop.trf.xlu0
          %v747 = vpop.trf.xlu0
          %v748 = vpop.trf.xlu0
          %v749 = vpop.trf.xlu0
          %v750 = vpop.trf.xlu0
          %751 = vxpose.xlu0.b32.start [1/16] %v654, 128
          %752 = vxpose.xlu0.b32.cont [2/16] 0.0, 128
          %753 = vxpose.xlu0.b32.cont [3/16] 0.0, 128
          %754 = vxpose.xlu0.b32.cont [4/16] 0.0, 128
          %755 = vxpose.xlu0.b32.cont [5/16] 0.0, 128
          %756 = vxpose.xlu0.b32.cont [6/16] 0.0, 128
          %757 = vxpose.xlu0.b32.cont [7/16] 0.0, 128
          %758 = vxpose.xlu0.b32.cont [8/16] 0.0, 128
          %759 = vxpose.xlu0.b32.cont [9/16] 0.0, 128
          %760 = vxpose.xlu0.b32.cont [10/16] 0.0, 128
          %761 = vxpose.xlu0.b32.cont [11/16] 0.0, 128
          %762 = vxpose.xlu0.b32.cont [12/16] 0.0, 128
          %763 = vxpose.xlu0.b32.cont [13/16] 0.0, 128
          %764 = vxpose.xlu0.b32.cont [14/16] 0.0, 128
          %765 = vxpose.xlu0.b32.cont [15/16] 0.0, 128
          %766 = vxpose.xlu0.b32.end [16/16] 0.0, 128
          %v767 = vpop.trf.xlu0
          %v768 = vpop.trf.xlu0
          %v769 = vpop.trf.xlu0
          %v770 = vpop.trf.xlu0
          %v771 = vpop.trf.xlu0
          %v772 = vpop.trf.xlu0
          %v773 = vpop.trf.xlu0
          %v774 = vpop.trf.xlu0
          %v775 = vpop.trf.xlu0
          %v776 = vpop.trf.xlu0
          %v777 = vpop.trf.xlu0
          %v778 = vpop.trf.xlu0
          %v779 = vpop.trf.xlu0
          %v780 = vpop.trf.xlu0
          %v781 = vpop.trf.xlu0
          %v782 = vpop.trf.xlu0
          %vm783 = vcmask 64512
          %784 = vst.msk [vmem:[%s154] sm:$0xff] %vm783, %v671
          %785 = vst.msk [vmem:[%s154 + $0x20] sm:$0xff] %vm783, %v703
          %786 = vst.msk [vmem:[%s154 + $0x40] sm:$0xff] %vm783, %v735
          %787 = vst.msk [vmem:[%s154 + $0x60] sm:$0xff] %vm783, %v767
          %v788 = vld [vmem:[%s135] sm:$0xff]
          %v789 = vld [vmem:[%s135 + $0x20] sm:$0xff]
          %v790 = vld [vmem:[%s135 + $0x40] sm:$0xff]
          %v791 = vld [vmem:[%s135 + $0x60] sm:$0xff]
          %796 = vrot.lane.b32.xlu0 %v788, 120
          %v797 = vpop.permute.xlu0 %796
          %798 = vrot.lane.b32.xlu0 %v789, 120
          %v799 = vpop.permute.xlu0 %798
          %800 = vrot.lane.b32.xlu0 %v790, 120
          %v801 = vpop.permute.xlu0 %800
          %802 = vrot.lane.b32.xlu0 %v791, 120
          %v803 = vpop.permute.xlu0 %802
          %808 = vxpose.xlu0.b32.start [1/16] %v797, 128
          %809 = vxpose.xlu0.b32.cont [2/16] 0.0, 128
          %810 = vxpose.xlu0.b32.cont [3/16] 0.0, 128
          %811 = vxpose.xlu0.b32.cont [4/16] 0.0, 128
          %812 = vxpose.xlu0.b32.cont [5/16] 0.0, 128
          %813 = vxpose.xlu0.b32.cont [6/16] 0.0, 128
          %814 = vxpose.xlu0.b32.cont [7/16] 0.0, 128
          %815 = vxpose.xlu0.b32.cont [8/16] 0.0, 128
          %816 = vxpose.xlu0.b32.cont [9/16] 0.0, 128
          %817 = vxpose.xlu0.b32.cont [10/16] 0.0, 128
          %818 = vxpose.xlu0.b32.cont [11/16] 0.0, 128
          %819 = vxpose.xlu0.b32.cont [12/16] 0.0, 128
          %820 = vxpose.xlu0.b32.cont [13/16] 0.0, 128
          %821 = vxpose.xlu0.b32.cont [14/16] 0.0, 128
          %822 = vxpose.xlu0.b32.cont [15/16] 0.0, 128
          %823 = vxpose.xlu0.b32.end [16/16] 0.0, 128
          %v824 = vpop.trf.xlu0
          %v825 = vpop.trf.xlu0
          %v826 = vpop.trf.xlu0
          %v827 = vpop.trf.xlu0
          %v828 = vpop.trf.xlu0
          %v829 = vpop.trf.xlu0
          %v830 = vpop.trf.xlu0
          %v831 = vpop.trf.xlu0
          %v832 = vpop.trf.xlu0
          %v833 = vpop.trf.xlu0
          %v834 = vpop.trf.xlu0
          %v835 = vpop.trf.xlu0
          %v836 = vpop.trf.xlu0
          %v837 = vpop.trf.xlu0
          %v838 = vpop.trf.xlu0
          %v839 = vpop.trf.xlu0
          %840 = vxpose.xlu0.b32.start [1/16] %v799, 128
          %841 = vxpose.xlu0.b32.cont [2/16] 0.0, 128
          %842 = vxpose.xlu0.b32.cont [3/16] 0.0, 128
          %843 = vxpose.xlu0.b32.cont [4/16] 0.0, 128
          %844 = vxpose.xlu0.b32.cont [5/16] 0.0, 128
          %845 = vxpose.xlu0.b32.cont [6/16] 0.0, 128
          %846 = vxpose.xlu0.b32.cont [7/16] 0.0, 128
          %847 = vxpose.xlu0.b32.cont [8/16] 0.0, 128
          %848 = vxpose.xlu0.b32.cont [9/16] 0.0, 128
          %849 = vxpose.xlu0.b32.cont [10/16] 0.0, 128
          %850 = vxpose.xlu0.b32.cont [11/16] 0.0, 128
          %851 = vxpose.xlu0.b32.cont [12/16] 0.0, 128
          %852 = vxpose.xlu0.b32.cont [13/16] 0.0, 128
          %853 = vxpose.xlu0.b32.cont [14/16] 0.0, 128
          %854 = vxpose.xlu0.b32.cont [15/16] 0.0, 128
          %855 = vxpose.xlu0.b32.end [16/16] 0.0, 128
          %v856 = vpop.trf.xlu0
          %v857 = vpop.trf.xlu0
          %v858 = vpop.trf.xlu0
          %v859 = vpop.trf.xlu0
          %v860 = vpop.trf.xlu0
          %v861 = vpop.trf.xlu0
          %v862 = vpop.trf.xlu0
          %v863 = vpop.trf.xlu0
          %v864 = vpop.trf.xlu0
          %v865 = vpop.trf.xlu0
          %v866 = vpop.trf.xlu0
          %v867 = vpop.trf.xlu0
          %v868 = vpop.trf.xlu0
          %v869 = vpop.trf.xlu0
          %v870 = vpop.trf.xlu0
          %v871 = vpop.trf.xlu0
          %872 = vxpose.xlu0.b32.start [1/16] %v801, 128
          %873 = vxpose.xlu0.b32.cont [2/16] 0.0, 128
          %874 = vxpose.xlu0.b32.cont [3/16] 0.0, 128
          %875 = vxpose.xlu0.b32.cont [4/16] 0.0, 128
          %876 = vxpose.xlu0.b32.cont [5/16] 0.0, 128
          %877 = vxpose.xlu0.b32.cont [6/16] 0.0, 128
          %878 = vxpose.xlu0.b32.cont [7/16] 0.0, 128
          %879 = vxpose.xlu0.b32.cont [8/16] 0.0, 128
          %880 = vxpose.xlu0.b32.cont [9/16] 0.0, 128
          %881 = vxpose.xlu0.b32.cont [10/16] 0.0, 128
          %882 = vxpose.xlu0.b32.cont [11/16] 0.0, 128
          %883 = vxpose.xlu0.b32.cont [12/16] 0.0, 128
          %884 = vxpose.xlu0.b32.cont [13/16] 0.0, 128
          %885 = vxpose.xlu0.b32.cont [14/16] 0.0, 128
          %886 = vxpose.xlu0.b32.cont [15/16] 0.0, 128
          %887 = vxpose.xlu0.b32.end [16/16] 0.0, 128
          %v888 = vpop.trf.xlu0
          %v889 = vpop.trf.xlu0
          %v890 = vpop.trf.xlu0
          %v891 = vpop.trf.xlu0
          %v892 = vpop.trf.xlu0
          %v893 = vpop.trf.xlu0
          %v894 = vpop.trf.xlu0
          %v895 = vpop.trf.xlu0
          %v896 = vpop.trf.xlu0
          %v897 = vpop.trf.xlu0
          %v898 = vpop.trf.xlu0
          %v899 = vpop.trf.xlu0
          %v900 = vpop.trf.xlu0
          %v901 = vpop.trf.xlu0
          %v902 = vpop.trf.xlu0
          %v903 = vpop.trf.xlu0
          %904 = vxpose.xlu0.b32.start [1/16] %v803, 128
          %905 = vxpose.xlu0.b32.cont [2/16] 0.0, 128
          %906 = vxpose.xlu0.b32.cont [3/16] 0.0, 128
          %907 = vxpose.xlu0.b32.cont [4/16] 0.0, 128
          %908 = vxpose.xlu0.b32.cont [5/16] 0.0, 128
          %909 = vxpose.xlu0.b32.cont [6/16] 0.0, 128
          %910 = vxpose.xlu0.b32.cont [7/16] 0.0, 128
          %911 = vxpose.xlu0.b32.cont [8/16] 0.0, 128
          %912 = vxpose.xlu0.b32.cont [9/16] 0.0, 128
          %913 = vxpose.xlu0.b32.cont [10/16] 0.0, 128
          %914 = vxpose.xlu0.b32.cont [11/16] 0.0, 128
          %915 = vxpose.xlu0.b32.cont [12/16] 0.0, 128
          %916 = vxpose.xlu0.b32.cont [13/16] 0.0, 128
          %917 = vxpose.xlu0.b32.cont [14/16] 0.0, 128
          %918 = vxpose.xlu0.b32.cont [15/16] 0.0, 128
          %919 = vxpose.xlu0.b32.end [16/16] 0.0, 128
          %v920 = vpop.trf.xlu0
          %v921 = vpop.trf.xlu0
          %v922 = vpop.trf.xlu0
          %v923 = vpop.trf.xlu0
          %v924 = vpop.trf.xlu0
          %v925 = vpop.trf.xlu0
          %v926 = vpop.trf.xlu0
          %v927 = vpop.trf.xlu0
          %v928 = vpop.trf.xlu0
          %v929 = vpop.trf.xlu0
          %v930 = vpop.trf.xlu0
          %v931 = vpop.trf.xlu0
          %v932 = vpop.trf.xlu0
          %v933 = vpop.trf.xlu0
          %v934 = vpop.trf.xlu0
          %v935 = vpop.trf.xlu0
          %940 = vrot.lane.b32.xlu0 %v824, 8
          %v941 = vpop.permute.xlu0 %940
          %942 = vrot.lane.b32.xlu0 %v856, 8
          %v943 = vpop.permute.xlu0 %942
          %944 = vrot.lane.b32.xlu0 %v888, 8
          %v945 = vpop.permute.xlu0 %944
          %946 = vrot.lane.b32.xlu0 %v920, 8
          %v947 = vpop.permute.xlu0 %946
          %vm952 = vcmask 130112
          %953 = vst.msk [vmem:[%s154] sm:$0xff] %vm952, %v941
          %954 = vst.msk [vmem:[%s154 + $0x20] sm:$0xff] %vm952, %v943
          %955 = vst.msk [vmem:[%s154 + $0x40] sm:$0xff] %vm952, %v945
          %956 = vst.msk [vmem:[%s154 + $0x60] sm:$0xff] %vm952, %v947
          %v957 = vld [vmem:[%s135] sm:$0xff]
          %v958 = vld [vmem:[%s135 + $0x20] sm:$0xff]
          %v959 = vld [vmem:[%s135 + $0x40] sm:$0xff]
          %v960 = vld [vmem:[%s135 + $0x60] sm:$0xff]
          %965 = vrot.lane.b32.xlu0 %v957, 112
          %v966 = vpop.permute.xlu0 %965
          %967 = vrot.lane.b32.xlu0 %v958, 112
          %v968 = vpop.permute.xlu0 %967
          %969 = vrot.lane.b32.xlu0 %v959, 112
          %v970 = vpop.permute.xlu0 %969
          %971 = vrot.lane.b32.xlu0 %v960, 112
          %v972 = vpop.permute.xlu0 %971
          %977 = vxpose.xlu0.b32.start [1/16] %v966, 128
          %978 = vxpose.xlu0.b32.cont [2/16] 0.0, 128
          %979 = vxpose.xlu0.b32.cont [3/16] 0.0, 128
          %980 = vxpose.xlu0.b32.cont [4/16] 0.0, 128
          %981 = vxpose.xlu0.b32.cont [5/16] 0.0, 128
          %982 = vxpose.xlu0.b32.cont [6/16] 0.0, 128
          %983 = vxpose.xlu0.b32.cont [7/16] 0.0, 128
          %984 = vxpose.xlu0.b32.cont [8/16] 0.0, 128
          %985 = vxpose.xlu0.b32.cont [9/16] 0.0, 128
          %986 = vxpose.xlu0.b32.cont [10/16] 0.0, 128
          %987 = vxpose.xlu0.b32.cont [11/16] 0.0, 128
          %988 = vxpose.xlu0.b32.cont [12/16] 0.0, 128
          %989 = vxpose.xlu0.b32.cont [13/16] 0.0, 128
          %990 = vxpose.xlu0.b32.cont [14/16] 0.0, 128
          %991 = vxpose.xlu0.b32.cont [15/16] 0.0, 128
          %992 = vxpose.xlu0.b32.end [16/16] 0.0, 128
          %v993 = vpop.trf.xlu0
          %v994 = vpop.trf.xlu0
          %v995 = vpop.trf.xlu0
          %v996 = vpop.trf.xlu0
          %v997 = vpop.trf.xlu0
          %v998 = vpop.trf.xlu0
          %v999 = vpop.trf.xlu0
          %v1000 = vpop.trf.xlu0
          %v1001 = vpop.trf.xlu0
          %v1002 = vpop.trf.xlu0
          %v1003 = vpop.trf.xlu0
          %v1004 = vpop.trf.xlu0
          %v1005 = vpop.trf.xlu0
          %v1006 = vpop.trf.xlu0
          %v1007 = vpop.trf.xlu0
          %v1008 = vpop.trf.xlu0
          %1009 = vxpose.xlu0.b32.start [1/16] %v968, 128
          %1010 = vxpose.xlu0.b32.cont [2/16] 0.0, 128
          %1011 = vxpose.xlu0.b32.cont [3/16] 0.0, 128
          %1012 = vxpose.xlu0.b32.cont [4/16] 0.0, 128
          %1013 = vxpose.xlu0.b32.cont [5/16] 0.0, 128
          %1014 = vxpose.xlu0.b32.cont [6/16] 0.0, 128
          %1015 = vxpose.xlu0.b32.cont [7/16] 0.0, 128
          %1016 = vxpose.xlu0.b32.cont [8/16] 0.0, 128
          %1017 = vxpose.xlu0.b32.cont [9/16] 0.0, 128
          %1018 = vxpose.xlu0.b32.cont [10/16] 0.0, 128
          %1019 = vxpose.xlu0.b32.cont [11/16] 0.0, 128
          %1020 = vxpose.xlu0.b32.cont [12/16] 0.0, 128
          %1021 = vxpose.xlu0.b32.cont [13/16] 0.0, 128
          %1022 = vxpose.xlu0.b32.cont [14/16] 0.0, 128
          %1023 = vxpose.xlu0.b32.cont [15/16] 0.0, 128
          %1024 = vxpose.xlu0.b32.end [16/16] 0.0, 128
          %v1025 = vpop.trf.xlu0
          %v1026 = vpop.trf.xlu0
          %v1027 = vpop.trf.xlu0
          %v1028 = vpop.trf.xlu0
          %v1029 = vpop.trf.xlu0
          %v1030 = vpop.trf.xlu0
          %v1031 = vpop.trf.xlu0
          %v1032 = vpop.trf.xlu0
          %v1033 = vpop.trf.xlu0
          %v1034 = vpop.trf.xlu0
          %v1035 = vpop.trf.xlu0
          %v1036 = vpop.trf.xlu0
          %v1037 = vpop.trf.xlu0
          %v1038 = vpop.trf.xlu0
          %v1039 = vpop.trf.xlu0
          %v1040 = vpop.trf.xlu0
          %1041 = vxpose.xlu0.b32.start [1/16] %v970, 128
          %1042 = vxpose.xlu0.b32.cont [2/16] 0.0, 128
          %1043 = vxpose.xlu0.b32.cont [3/16] 0.0, 128
          %1044 = vxpose.xlu0.b32.cont [4/16] 0.0, 128
          %1045 = vxpose.xlu0.b32.cont [5/16] 0.0, 128
          %1046 = vxpose.xlu0.b32.cont [6/16] 0.0, 128
          %1047 = vxpose.xlu0.b32.cont [7/16] 0.0, 128
          %1048 = vxpose.xlu0.b32.cont [8/16] 0.0, 128
          %1049 = vxpose.xlu0.b32.cont [9/16] 0.0, 128
          %1050 = vxpose.xlu0.b32.cont [10/16] 0.0, 128
          %1051 = vxpose.xlu0.b32.cont [11/16] 0.0, 128
          %1052 = vxpose.xlu0.b32.cont [12/16] 0.0, 128
          %1053 = vxpose.xlu0.b32.cont [13/16] 0.0, 128
          %1054 = vxpose.xlu0.b32.cont [14/16] 0.0, 128
          %1055 = vxpose.xlu0.b32.cont [15/16] 0.0, 128
          %1056 = vxpose.xlu0.b32.end [16/16] 0.0, 128
          %v1057 = vpop.trf.xlu0
          %v1058 = vpop.trf.xlu0
          %v1059 = vpop.trf.xlu0
          %v1060 = vpop.trf.xlu0
          %v1061 = vpop.trf.xlu0
          %v1062 = vpop.trf.xlu0
          %v1063 = vpop.trf.xlu0
          %v1064 = vpop.trf.xlu0
          %v1065 = vpop.trf.xlu0
          %v1066 = vpop.trf.xlu0
          %v1067 = vpop.trf.xlu0
          %v1068 = vpop.trf.xlu0
          %v1069 = vpop.trf.xlu0
          %v1070 = vpop.trf.xlu0
          %v1071 = vpop.trf.xlu0
          %v1072 = vpop.trf.xlu0
          %1073 = vxpose.xlu0.b32.start [1/16] %v972, 128
          %1074 = vxpose.xlu0.b32.cont [2/16] 0.0, 128
          %1075 = vxpose.xlu0.b32.cont [3/16] 0.0, 128
          %1076 = vxpose.xlu0.b32.cont [4/16] 0.0, 128
          %1077 = vxpose.xlu0.b32.cont [5/16] 0.0, 128
          %1078 = vxpose.xlu0.b32.cont [6/16] 0.0, 128
          %1079 = vxpose.xlu0.b32.cont [7/16] 0.0, 128
          %1080 = vxpose.xlu0.b32.cont [8/16] 0.0, 128
          %1081 = vxpose.xlu0.b32.cont [9/16] 0.0, 128
          %1082 = vxpose.xlu0.b32.cont [10/16] 0.0, 128
          %1083 = vxpose.xlu0.b32.cont [11/16] 0.0, 128
          %1084 = vxpose.xlu0.b32.cont [12/16] 0.0, 128
          %1085 = vxpose.xlu0.b32.cont [13/16] 0.0, 128
          %1086 = vxpose.xlu0.b32.cont [14/16] 0.0, 128
          %1087 = vxpose.xlu0.b32.cont [15/16] 0.0, 128
          %1088 = vxpose.xlu0.b32.end [16/16] 0.0, 128
          %v1089 = vpop.trf.xlu0
          %v1090 = vpop.trf.xlu0
          %v1091 = vpop.trf.xlu0
          %v1092 = vpop.trf.xlu0
          %v1093 = vpop.trf.xlu0
          %v1094 = vpop.trf.xlu0
          %v1095 = vpop.trf.xlu0
          %v1096 = vpop.trf.xlu0
          %v1097 = vpop.trf.xlu0
          %v1098 = vpop.trf.xlu0
          %v1099 = vpop.trf.xlu0
          %v1100 = vpop.trf.xlu0
          %v1101 = vpop.trf.xlu0
          %v1102 = vpop.trf.xlu0
          %v1103 = vpop.trf.xlu0
          %v1104 = vpop.trf.xlu0
          %1109 = vrot.lane.b32.xlu0 %v993, 16
          %v1110 = vpop.permute.xlu0 %1109
          %1111 = vrot.lane.b32.xlu0 %v1025, 16
          %v1112 = vpop.permute.xlu0 %1111
          %1113 = vrot.lane.b32.xlu0 %v1057, 16
          %v1114 = vpop.permute.xlu0 %1113
          %1115 = vrot.lane.b32.xlu0 %v1089, 16
          %v1116 = vpop.permute.xlu0 %1115
          %vm1121 = vcmask 195712
          %1122 = vst.msk [vmem:[%s154] sm:$0xff] %vm1121, %v1110
          %1123 = vst.msk [vmem:[%s154 + $0x20] sm:$0xff] %vm1121, %v1112
          %1124 = vst.msk [vmem:[%s154 + $0x40] sm:$0xff] %vm1121, %v1114
          %1125 = vst.msk [vmem:[%s154 + $0x60] sm:$0xff] %vm1121, %v1116
          %v1126 = vld [vmem:[%s135] sm:$0xff]
          %v1127 = vld [vmem:[%s135 + $0x20] sm:$0xff]
          %v1128 = vld [vmem:[%s135 + $0x40] sm:$0xff]
          %v1129 = vld [vmem:[%s135 + $0x60] sm:$0xff]
          %1134 = vrot.lane.b32.xlu0 %v1126, 104
          %v1135 = vpop.permute.xlu0 %1134
          %1136 = vrot.lane.b32.xlu0 %v1127, 104
          %v1137 = vpop.permute.xlu0 %1136
          %1138 = vrot.lane.b32.xlu0 %v1128, 104
          %v1139 = vpop.permute.xlu0 %1138
          %1140 = vrot.lane.b32.xlu0 %v1129, 104
          %v1141 = vpop.permute.xlu0 %1140
          %1146 = vxpose.xlu0.b32.start [1/16] %v1135, 128
          %1147 = vxpose.xlu0.b32.cont [2/16] 0.0, 128
          %1148 = vxpose.xlu0.b32.cont [3/16] 0.0, 128
          %1149 = vxpose.xlu0.b32.cont [4/16] 0.0, 128
          %1150 = vxpose.xlu0.b32.cont [5/16] 0.0, 128
          %1151 = vxpose.xlu0.b32.cont [6/16] 0.0, 128
          %1152 = vxpose.xlu0.b32.cont [7/16] 0.0, 128
          %1153 = vxpose.xlu0.b32.cont [8/16] 0.0, 128
          %1154 = vxpose.xlu0.b32.cont [9/16] 0.0, 128
          %1155 = vxpose.xlu0.b32.cont [10/16] 0.0, 128
          %1156 = vxpose.xlu0.b32.cont [11/16] 0.0, 128
          %1157 = vxpose.xlu0.b32.cont [12/16] 0.0, 128
          %1158 = vxpose.xlu0.b32.cont [13/16] 0.0, 128
          %1159 = vxpose.xlu0.b32.cont [14/16] 0.0, 128
          %1160 = vxpose.xlu0.b32.cont [15/16] 0.0, 128
          %1161 = vxpose.xlu0.b32.end [16/16] 0.0, 128
          %v1162 = vpop.trf.xlu0
          %v1163 = vpop.trf.xlu0
          %v1164 = vpop.trf.xlu0
          %v1165 = vpop.trf.xlu0
          %v1166 = vpop.trf.xlu0
          %v1167 = vpop.trf.xlu0
          %v1168 = vpop.trf.xlu0
          %v1169 = vpop.trf.xlu0
          %v1170 = vpop.trf.xlu0
          %v1171 = vpop.trf.xlu0
          %v1172 = vpop.trf.xlu0
          %v1173 = vpop.trf.xlu0
          %v1174 = vpop.trf.xlu0
          %v1175 = vpop.trf.xlu0
          %v1176 = vpop.trf.xlu0
          %v1177 = vpop.trf.xlu0
          %1178 = vxpose.xlu0.b32.start [1/16] %v1137, 128
          %1179 = vxpose.xlu0.b32.cont [2/16] 0.0, 128
          %1180 = vxpose.xlu0.b32.cont [3/16] 0.0, 128
          %1181 = vxpose.xlu0.b32.cont [4/16] 0.0, 128
          %1182 = vxpose.xlu0.b32.cont [5/16] 0.0, 128
          %1183 = vxpose.xlu0.b32.cont [6/16] 0.0, 128
          %1184 = vxpose.xlu0.b32.cont [7/16] 0.0, 128
          %1185 = vxpose.xlu0.b32.cont [8/16] 0.0, 128
          %1186 = vxpose.xlu0.b32.cont [9/16] 0.0, 128
          %1187 = vxpose.xlu0.b32.cont [10/16] 0.0, 128
          %1188 = vxpose.xlu0.b32.cont [11/16] 0.0, 128
          %1189 = vxpose.xlu0.b32.cont [12/16] 0.0, 128
          %1190 = vxpose.xlu0.b32.cont [13/16] 0.0, 128
          %1191 = vxpose.xlu0.b32.cont [14/16] 0.0, 128
          %1192 = vxpose.xlu0.b32.cont [15/16] 0.0, 128
          %1193 = vxpose.xlu0.b32.end [16/16] 0.0, 128
          %v1194 = vpop.trf.xlu0
          %v1195 = vpop.trf.xlu0
          %v1196 = vpop.trf.xlu0
          %v1197 = vpop.trf.xlu0
          %v1198 = vpop.trf.xlu0
          %v1199 = vpop.trf.xlu0
          %v1200 = vpop.trf.xlu0
          %v1201 = vpop.trf.xlu0
          %v1202 = vpop.trf.xlu0
          %v1203 = vpop.trf.xlu0
          %v1204 = vpop.trf.xlu0
          %v1205 = vpop.trf.xlu0
          %v1206 = vpop.trf.xlu0
          %v1207 = vpop.trf.xlu0
          %v1208 = vpop.trf.xlu0
          %v1209 = vpop.trf.xlu0
          %1210 = vxpose.xlu0.b32.start [1/16] %v1139, 128
          %1211 = vxpose.xlu0.b32.cont [2/16] 0.0, 128
          %1212 = vxpose.xlu0.b32.cont [3/16] 0.0, 128
          %1213 = vxpose.xlu0.b32.cont [4/16] 0.0, 128
          %1214 = vxpose.xlu0.b32.cont [5/16] 0.0, 128
          %1215 = vxpose.xlu0.b32.cont [6/16] 0.0, 128
          %1216 = vxpose.xlu0.b32.cont [7/16] 0.0, 128
          %1217 = vxpose.xlu0.b32.cont [8/16] 0.0, 128
          %1218 = vxpose.xlu0.b32.cont [9/16] 0.0, 128
          %1219 = vxpose.xlu0.b32.cont [10/16] 0.0, 128
          %1220 = vxpose.xlu0.b32.cont [11/16] 0.0, 128
          %1221 = vxpose.xlu0.b32.cont [12/16] 0.0, 128
          %1222 = vxpose.xlu0.b32.cont [13/16] 0.0, 128
          %1223 = vxpose.xlu0.b32.cont [14/16] 0.0, 128
          %1224 = vxpose.xlu0.b32.cont [15/16] 0.0, 128
          %1225 = vxpose.xlu0.b32.end [16/16] 0.0, 128
          %v1226 = vpop.trf.xlu0
          %v1227 = vpop.trf.xlu0
          %v1228 = vpop.trf.xlu0
          %v1229 = vpop.trf.xlu0
          %v1230 = vpop.trf.xlu0
          %v1231 = vpop.trf.xlu0
          %v1232 = vpop.trf.xlu0
          %v1233 = vpop.trf.xlu0
          %v1234 = vpop.trf.xlu0
          %v1235 = vpop.trf.xlu0
          %v1236 = vpop.trf.xlu0
          %v1237 = vpop.trf.xlu0
          %v1238 = vpop.trf.xlu0
          %v1239 = vpop.trf.xlu0
          %v1240 = vpop.trf.xlu0
          %v1241 = vpop.trf.xlu0
          %1242 = vxpose.xlu0.b32.start [1/16] %v1141, 128
          %1243 = vxpose.xlu0.b32.cont [2/16] 0.0, 128
          %1244 = vxpose.xlu0.b32.cont [3/16] 0.0, 128
          %1245 = vxpose.xlu0.b32.cont [4/16] 0.0, 128
          %1246 = vxpose.xlu0.b32.cont [5/16] 0.0, 128
          %1247 = vxpose.xlu0.b32.cont [6/16] 0.0, 128
          %1248 = vxpose.xlu0.b32.cont [7/16] 0.0, 128
          %1249 = vxpose.xlu0.b32.cont [8/16] 0.0, 128
          %1250 = vxpose.xlu0.b32.cont [9/16] 0.0, 128
          %1251 = vxpose.xlu0.b32.cont [10/16] 0.0, 128
          %1252 = vxpose.xlu0.b32.cont [11/16] 0.0, 128
          %1253 = vxpose.xlu0.b32.cont [12/16] 0.0, 128
          %1254 = vxpose.xlu0.b32.cont [13/16] 0.0, 128
          %1255 = vxpose.xlu0.b32.cont [14/16] 0.0, 128
          %1256 = vxpose.xlu0.b32.cont [15/16] 0.0, 128
          %1257 = vxpose.xlu0.b32.end [16/16] 0.0, 128
          %v1258 = vpop.trf.xlu0
          %v1259 = vpop.trf.xlu0
          %v1260 = vpop.trf.xlu0
          %v1261 = vpop.trf.xlu0
          %v1262 = vpop.trf.xlu0
          %v1263 = vpop.trf.xlu0
          %v1264 = vpop.trf.xlu0
          %v1265 = vpop.trf.xlu0
          %v1266 = vpop.trf.xlu0
          %v1267 = vpop.trf.xlu0
          %v1268 = vpop.trf.xlu0
          %v1269 = vpop.trf.xlu0
          %v1270 = vpop.trf.xlu0
          %v1271 = vpop.trf.xlu0
          %v1272 = vpop.trf.xlu0
          %v1273 = vpop.trf.xlu0
          %1278 = vrot.lane.b32.xlu0 %v1162, 24
          %v1279 = vpop.permute.xlu0 %1278
          %1280 = vrot.lane.b32.xlu0 %v1194, 24
          %v1281 = vpop.permute.xlu0 %1280
          %1282 = vrot.lane.b32.xlu0 %v1226, 24
          %v1283 = vpop.permute.xlu0 %1282
          %1284 = vrot.lane.b32.xlu0 %v1258, 24
          %v1285 = vpop.permute.xlu0 %1284
          %vm1290 = vcmask 261312
          %1291 = vst.msk [vmem:[%s154] sm:$0xff] %vm1290, %v1279
          %1292 = vst.msk [vmem:[%s154 + $0x20] sm:$0xff] %vm1290, %v1281
          %1293 = vst.msk [vmem:[%s154 + $0x40] sm:$0xff] %vm1290, %v1283
          %1294 = vst.msk [vmem:[%s154 + $0x60] sm:$0xff] %vm1290, %v1285
        $region36: #{tpu_custom_call.1} parent=23 // pred_fallthru
          _
        %s1295 = smul.u32 %s23, 4
        %s1296 = sadd.s32 %s1295, 1
        %s1297 = smul.u32 %s1296, 3
        %p1298 = scmp.gt.s32.totalorder %s1297, 4
        %p1299 = scmp.lt.s32.totalorder %s1297, 8
        %p1300 = pnand %p1298, %p1299
        %p1301 = pneg %p1300
        // Predicated region
        $region37: #{tpu_custom_call.1} parent=23 // pred_check
          _
        $region38: #{tpu_custom_call.1} parent=23 // pred_check_branch
          %1303 = sbr.rel (%p1300) target = $region40
        $region39: #{tpu_custom_call.1} parent=23 // pred_region
          %v1304 = vld [vmem:[%s135 + $0x8] sm:$0xff]
          %v1305 = vld [vmem:[%s135 + $0x28] sm:$0xff]
          %v1306 = vld [vmem:[%s135 + $0x48] sm:$0xff]
          %v1307 = vld [vmem:[%s135 + $0x68] sm:$0xff]
          %vm1308 = vcmask 195712
          %1309 = vst.msk [vmem:[%s154 + $0x8] sm:$0xff] %vm1308, %v1304
          %1310 = vst.msk [vmem:[%s154 + $0x28] sm:$0xff] %vm1308, %v1305
          %1311 = vst.msk [vmem:[%s154 + $0x48] sm:$0xff] %vm1308, %v1306
          %1312 = vst.msk [vmem:[%s154 + $0x68] sm:$0xff] %vm1308, %v1307
          %v1313 = vld [vmem:[%s135 + $0x8] sm:$0xff]
          %v1314 = vld [vmem:[%s135 + $0x28] sm:$0xff]
          %v1315 = vld [vmem:[%s135 + $0x48] sm:$0xff]
          %v1316 = vld [vmem:[%s135 + $0x68] sm:$0xff]
          %1317 = vxpose.xlu0.b32.start [1/16] %v1313, 128
          %1318 = vxpose.xlu0.b32.cont [2/16] 0.0, 128
          %1319 = vxpose.xlu0.b32.cont [3/16] 0.0, 128
          %1320 = vxpose.xlu0.b32.cont [4/16] 0.0, 128
          %1321 = vxpose.xlu0.b32.cont [5/16] 0.0, 128
          %1322 = vxpose.xlu0.b32.cont [6/16] 0.0, 128
          %1323 = vxpose.xlu0.b32.cont [7/16] 0.0, 128
          %1324 = vxpose.xlu0.b32.cont [8/16] 0.0, 128
          %1325 = vxpose.xlu0.b32.cont [9/16] 0.0, 128
          %1326 = vxpose.xlu0.b32.cont [10/16] 0.0, 128
          %1327 = vxpose.xlu0.b32.cont [11/16] 0.0, 128
          %1328 = vxpose.xlu0.b32.cont [12/16] 0.0, 128
          %1329 = vxpose.xlu0.b32.cont [13/16] 0.0, 128
          %1330 = vxpose.xlu0.b32.cont [14/16] 0.0, 128
          %1331 = vxpose.xlu0.b32.cont [15/16] 0.0, 128
          %1332 = vxpose.xlu0.b32.end [16/16] 0.0, 128
          %v1333 = vpop.trf.xlu0
          %v1334 = vpop.trf.xlu0
          %v1335 = vpop.trf.xlu0
          %v1336 = vpop.trf.xlu0
          %v1337 = vpop.trf.xlu0
          %v1338 = vpop.trf.xlu0
          %v1339 = vpop.trf.xlu0
          %v1340 = vpop.trf.xlu0
          %v1341 = vpop.trf.xlu0
          %v1342 = vpop.trf.xlu0
          %v1343 = vpop.trf.xlu0
          %v1344 = vpop.trf.xlu0
          %v1345 = vpop.trf.xlu0
          %v1346 = vpop.trf.xlu0
          %v1347 = vpop.trf.xlu0
          %v1348 = vpop.trf.xlu0
          %1349 = vxpose.xlu0.b32.start [1/16] %v1314, 128
          %1350 = vxpose.xlu0.b32.cont [2/16] 0.0, 128
          %1351 = vxpose.xlu0.b32.cont [3/16] 0.0, 128
          %1352 = vxpose.xlu0.b32.cont [4/16] 0.0, 128
          %1353 = vxpose.xlu0.b32.cont [5/16] 0.0, 128
          %1354 = vxpose.xlu0.b32.cont [6/16] 0.0, 128
          %1355 = vxpose.xlu0.b32.cont [7/16] 0.0, 128
          %1356 = vxpose.xlu0.b32.cont [8/16] 0.0, 128
          %1357 = vxpose.xlu0.b32.cont [9/16] 0.0, 128
          %1358 = vxpose.xlu0.b32.cont [10/16] 0.0, 128
          %1359 = vxpose.xlu0.b32.cont [11/16] 0.0, 128
          %1360 = vxpose.xlu0.b32.cont [12/16] 0.0, 128
          %1361 = vxpose.xlu0.b32.cont [13/16] 0.0, 128
          %1362 = vxpose.xlu0.b32.cont [14/16] 0.0, 128
          %1363 = vxpose.xlu0.b32.cont [15/16] 0.0, 128
          %1364 = vxpose.xlu0.b32.end [16/16] 0.0, 128
          %v1365 = vpop.trf.xlu0
          %v1366 = vpop.trf.xlu0
          %v1367 = vpop.trf.xlu0
          %v1368 = vpop.trf.xlu0
          %v1369 = vpop.trf.xlu0
          %v1370 = vpop.trf.xlu0
          %v1371 = vpop.trf.xlu0
          %v1372 = vpop.trf.xlu0
          %v1373 = vpop.trf.xlu0
          %v1374 = vpop.trf.xlu0
          %v1375 = vpop.trf.xlu0
          %v1376 = vpop.trf.xlu0
          %v1377 = vpop.trf.xlu0
          %v1378 = vpop.trf.xlu0
          %v1379 = vpop.trf.xlu0
          %v1380 = vpop.trf.xlu0
          %1381 = vxpose.xlu0.b32.start [1/16] %v1315, 128
          %1382 = vxpose.xlu0.b32.cont [2/16] 0.0, 128
          %1383 = vxpose.xlu0.b32.cont [3/16] 0.0, 128
          %1384 = vxpose.xlu0.b32.cont [4/16] 0.0, 128
          %1385 = vxpose.xlu0.b32.cont [5/16] 0.0, 128
          %1386 = vxpose.xlu0.b32.cont [6/16] 0.0, 128
          %1387 = vxpose.xlu0.b32.cont [7/16] 0.0, 128
          %1388 = vxpose.xlu0.b32.cont [8/16] 0.0, 128
          %1389 = vxpose.xlu0.b32.cont [9/16] 0.0, 128
          %1390 = vxpose.xlu0.b32.cont [10/16] 0.0, 128
          %1391 = vxpose.xlu0.b32.cont [11/16] 0.0, 128
          %1392 = vxpose.xlu0.b32.cont [12/16] 0.0, 128
          %1393 = vxpose.xlu0.b32.cont [13/16] 0.0, 128
          %1394 = vxpose.xlu0.b32.cont [14/16] 0.0, 128
          %1395 = vxpose.xlu0.b32.cont [15/16] 0.0, 128
          %1396 = vxpose.xlu0.b32.end [16/16] 0.0, 128
          %v1397 = vpop.trf.xlu0
          %v1398 = vpop.trf.xlu0
          %v1399 = vpop.trf.xlu0
          %v1400 = vpop.trf.xlu0
          %v1401 = vpop.trf.xlu0
          %v1402 = vpop.trf.xlu0
          %v1403 = vpop.trf.xlu0
          %v1404 = vpop.trf.xlu0
          %v1405 = vpop.trf.xlu0
          %v1406 = vpop.trf.xlu0
          %v1407 = vpop.trf.xlu0
          %v1408 = vpop.trf.xlu0
          %v1409 = vpop.trf.xlu0
          %v1410 = vpop.trf.xlu0
          %v1411 = vpop.trf.xlu0
          %v1412 = vpop.trf.xlu0
          %1413 = vxpose.xlu0.b32.start [1/16] %v1316, 128
          %1414 = vxpose.xlu0.b32.cont [2/16] 0.0, 128
          %1415 = vxpose.xlu0.b32.cont [3/16] 0.0, 128
          %1416 = vxpose.xlu0.b32.cont [4/16] 0.0, 128
          %1417 = vxpose.xlu0.b32.cont [5/16] 0.0, 128
          %1418 = vxpose.xlu0.b32.cont [6/16] 0.0, 128
          %1419 = vxpose.xlu0.b32.cont [7/16] 0.0, 128
          %1420 = vxpose.xlu0.b32.cont [8/16] 0.0, 128
          %1421 = vxpose.xlu0.b32.cont [9/16] 0.0, 128
          %1422 = vxpose.xlu0.b32.cont [10/16] 0.0, 128
          %1423 = vxpose.xlu0.b32.cont [11/16] 0.0, 128
          %1424 = vxpose.xlu0.b32.cont [12/16] 0.0, 128
          %1425 = vxpose.xlu0.b32.cont [13/16] 0.0, 128
          %1426 = vxpose.xlu0.b32.cont [14/16] 0.0, 128
          %1427 = vxpose.xlu0.b32.cont [15/16] 0.0, 128
          %1428 = vxpose.xlu0.b32.end [16/16] 0.0, 128
          %v1429 = vpop.trf.xlu0
          %v1430 = vpop.trf.xlu0
          %v1431 = vpop.trf.xlu0
          %v1432 = vpop.trf.xlu0
          %v1433 = vpop.trf.xlu0
          %v1434 = vpop.trf.xlu0
          %v1435 = vpop.trf.xlu0
          %v1436 = vpop.trf.xlu0
          %v1437 = vpop.trf.xlu0
          %v1438 = vpop.trf.xlu0
          %v1439 = vpop.trf.xlu0
          %v1440 = vpop.trf.xlu0
          %v1441 = vpop.trf.xlu0
          %v1442 = vpop.trf.xlu0
          %v1443 = vpop.trf.xlu0
          %v1444 = vpop.trf.xlu0
          %vm1445 = vcmask 64512
          %1446 = vst.msk [vmem:[%s154 + $0x8] sm:$0xff] %vm1445, %v1333
          %1447 = vst.msk [vmem:[%s154 + $0x28] sm:$0xff] %vm1445, %v1365
          %1448 = vst.msk [vmem:[%s154 + $0x48] sm:$0xff] %vm1445, %v1397
          %1449 = vst.msk [vmem:[%s154 + $0x68] sm:$0xff] %vm1445, %v1429
          %v1450 = vld [vmem:[%s135 + $0x8] sm:$0xff]
          %v1451 = vld [vmem:[%s135 + $0x28] sm:$0xff]
          %v1452 = vld [vmem:[%s135 + $0x48] sm:$0xff]
          %v1453 = vld [vmem:[%s135 + $0x68] sm:$0xff]
          %1458 = vrot.lane.b32.xlu0 %v1450, 120
          %v1459 = vpop.permute.xlu0 %1458
          %1460 = vrot.lane.b32.xlu0 %v1451, 120
          %v1461 = vpop.permute.xlu0 %1460
          %1462 = vrot.lane.b32.xlu0 %v1452, 120
          %v1463 = vpop.permute.xlu0 %1462
          %1464 = vrot.lane.b32.xlu0 %v1453, 120
          %v1465 = vpop.permute.xlu0 %1464
          %1470 = vxpose.xlu0.b32.start [1/16] %v1459, 128
          %1471 = vxpose.xlu0.b32.cont [2/16] 0.0, 128
          %1472 = vxpose.xlu0.b32.cont [3/16] 0.0, 128
          %1473 = vxpose.xlu0.b32.cont [4/16] 0.0, 128
          %1474 = vxpose.xlu0.b32.cont [5/16] 0.0, 128
          %1475 = vxpose.xlu0.b32.cont [6/16] 0.0, 128
          %1476 = vxpose.xlu0.b32.cont [7/16] 0.0, 128
          %1477 = vxpose.xlu0.b32.cont [8/16] 0.0, 128
          %1478 = vxpose.xlu0.b32.cont [9/16] 0.0, 128
          %1479 = vxpose.xlu0.b32.cont [10/16] 0.0, 128
          %1480 = vxpose.xlu0.b32.cont [11/16] 0.0, 128
          %1481 = vxpose.xlu0.b32.cont [12/16] 0.0, 128
          %1482 = vxpose.xlu0.b32.cont [13/16] 0.0, 128
          %1483 = vxpose.xlu0.b32.cont [14/16] 0.0, 128
          %1484 = vxpose.xlu0.b32.cont [15/16] 0.0, 128
          %1485 = vxpose.xlu0.b32.end [16/16] 0.0, 128
          %v1486 = vpop.trf.xlu0
          %v1487 = vpop.trf.xlu0
          %v1488 = vpop.trf.xlu0
          %v1489 = vpop.trf.xlu0
          %v1490 = vpop.trf.xlu0
          %v1491 = vpop.trf.xlu0
          %v1492 = vpop.trf.xlu0
          %v1493 = vpop.trf.xlu0
          %v1494 = vpop.trf.xlu0
          %v1495 = vpop.trf.xlu0
          %v1496 = vpop.trf.xlu0
          %v1497 = vpop.trf.xlu0
          %v1498 = vpop.trf.xlu0
          %v1499 = vpop.trf.xlu0
          %v1500 = vpop.trf.xlu0
          %v1501 = vpop.trf.xlu0
          %1502 = vxpose.xlu0.b32.start [1/16] %v1461, 128
          %1503 = vxpose.xlu0.b32.cont [2/16] 0.0, 128
          %1504 = vxpose.xlu0.b32.cont [3/16] 0.0, 128
          %1505 = vxpose.xlu0.b32.cont [4/16] 0.0, 128
          %1506 = vxpose.xlu0.b32.cont [5/16] 0.0, 128
          %1507 = vxpose.xlu0.b32.cont [6/16] 0.0, 128
          %1508 = vxpose.xlu0.b32.cont [7/16] 0.0, 128
          %1509 = vxpose.xlu0.b32.cont [8/16] 0.0, 128
          %1510 = vxpose.xlu0.b32.cont [9/16] 0.0, 128
          %1511 = vxpose.xlu0.b32.cont [10/16] 0.0, 128
          %1512 = vxpose.xlu0.b32.cont [11/16] 0.0, 128
          %1513 = vxpose.xlu0.b32.cont [12/16] 0.0, 128
          %1514 = vxpose.xlu0.b32.cont [13/16] 0.0, 128
          %1515 = vxpose.xlu0.b32.cont [14/16] 0.0, 128
          %1516 = vxpose.xlu0.b32.cont [15/16] 0.0, 128
          %1517 = vxpose.xlu0.b32.end [16/16] 0.0, 128
          %v1518 = vpop.trf.xlu0
          %v1519 = vpop.trf.xlu0
          %v1520 = vpop.trf.xlu0
          %v1521 = vpop.trf.xlu0
          %v1522 = vpop.trf.xlu0
          %v1523 = vpop.trf.xlu0
          %v1524 = vpop.trf.xlu0
          %v1525 = vpop.trf.xlu0
          %v1526 = vpop.trf.xlu0
          %v1527 = vpop.trf.xlu0
          %v1528 = vpop.trf.xlu0
          %v1529 = vpop.trf.xlu0
          %v1530 = vpop.trf.xlu0
          %v1531 = vpop.trf.xlu0
          %v1532 = vpop.trf.xlu0
          %v1533 = vpop.trf.xlu0
          %1534 = vxpose.xlu0.b32.start [1/16] %v1463, 128
          %1535 = vxpose.xlu0.b32.cont [2/16] 0.0, 128
          %1536 = vxpose.xlu0.b32.cont [3/16] 0.0, 128
          %1537 = vxpose.xlu0.b32.cont [4/16] 0.0, 128
          %1538 = vxpose.xlu0.b32.cont [5/16] 0.0, 128
          %1539 = vxpose.xlu0.b32.cont [6/16] 0.0, 128
          %1540 = vxpose.xlu0.b32.cont [7/16] 0.0, 128
          %1541 = vxpose.xlu0.b32.cont [8/16] 0.0, 128
          %1542 = vxpose.xlu0.b32.cont [9/16] 0.0, 128
          %1543 = vxpose.xlu0.b32.cont [10/16] 0.0, 128
          %1544 = vxpose.xlu0.b32.cont [11/16] 0.0, 128
          %1545 = vxpose.xlu0.b32.cont [12/16] 0.0, 128
          %1546 = vxpose.xlu0.b32.cont [13/16] 0.0, 128
          %1547 = vxpose.xlu0.b32.cont [14/16] 0.0, 128
          %1548 = vxpose.xlu0.b32.cont [15/16] 0.0, 128
          %1549 = vxpose.xlu0.b32.end [16/16] 0.0, 128
          %v1550 = vpop.trf.xlu0
          %v1551 = vpop.trf.xlu0
          %v1552 = vpop.trf.xlu0
          %v1553 = vpop.trf.xlu0
          %v1554 = vpop.trf.xlu0
          %v1555 = vpop.trf.xlu0
          %v1556 = vpop.trf.xlu0
          %v1557 = vpop.trf.xlu0
          %v1558 = vpop.trf.xlu0
          %v1559 = vpop.trf.xlu0
          %v1560 = vpop.trf.xlu0
          %v1561 = vpop.trf.xlu0
          %v1562 = vpop.trf.xlu0
          %v1563 = vpop.trf.xlu0
          %v1564 = vpop.trf.xlu0
          %v1565 = vpop.trf.xlu0
          %1566 = vxpose.xlu0.b32.start [1/16] %v1465, 128
          %1567 = vxpose.xlu0.b32.cont [2/16] 0.0, 128
          %1568 = vxpose.xlu0.b32.cont [3/16] 0.0, 128
          %1569 = vxpose.xlu0.b32.cont [4/16] 0.0, 128
          %1570 = vxpose.xlu0.b32.cont [5/16] 0.0, 128
          %1571 = vxpose.xlu0.b32.cont [6/16] 0.0, 128
          %1572 = vxpose.xlu0.b32.cont [7/16] 0.0, 128
          %1573 = vxpose.xlu0.b32.cont [8/16] 0.0, 128
          %1574 = vxpose.xlu0.b32.cont [9/16] 0.0, 128
          %1575 = vxpose.xlu0.b32.cont [10/16] 0.0, 128
          %1576 = vxpose.xlu0.b32.cont [11/16] 0.0, 128
          %1577 = vxpose.xlu0.b32.cont [12/16] 0.0, 128
          %1578 = vxpose.xlu0.b32.cont [13/16] 0.0, 128
          %1579 = vxpose.xlu0.b32.cont [14/16] 0.0, 128
          %1580 = vxpose.xlu0.b32.cont [15/16] 0.0, 128
          %1581 = vxpose.xlu0.b32.end [16/16] 0.0, 128
          %v1582 = vpop.trf.xlu0
          %v1583 = vpop.trf.xlu0
          %v1584 = vpop.trf.xlu0
          %v1585 = vpop.trf.xlu0
          %v1586 = vpop.trf.xlu0
          %v1587 = vpop.trf.xlu0
          %v1588 = vpop.trf.xlu0
          %v1589 = vpop.trf.xlu0
          %v1590 = vpop.trf.xlu0
          %v1591 = vpop.trf.xlu0
          %v1592 = vpop.trf.xlu0
          %v1593 = vpop.trf.xlu0
          %v1594 = vpop.trf.xlu0
          %v1595 = vpop.trf.xlu0
          %v1596 = vpop.trf.xlu0
          %v1597 = vpop.trf.xlu0
          %1602 = vrot.lane.b32.xlu0 %v1486, 8
          %v1603 = vpop.permute.xlu0 %1602
          %1604 = vrot.lane.b32.xlu0 %v1518, 8
          %v1605 = vpop.permute.xlu0 %1604
          %1606 = vrot.lane.b32.xlu0 %v1550, 8
          %v1607 = vpop.permute.xlu0 %1606
          %1608 = vrot.lane.b32.xlu0 %v1582, 8
          %v1609 = vpop.permute.xlu0 %1608
          %vm1614 = vcmask 130112
          %1615 = vst.msk [vmem:[%s154 + $0x8] sm:$0xff] %vm1614, %v1603
          %1616 = vst.msk [vmem:[%s154 + $0x28] sm:$0xff] %vm1614, %v1605
          %1617 = vst.msk [vmem:[%s154 + $0x48] sm:$0xff] %vm1614, %v1607
          %1618 = vst.msk [vmem:[%s154 + $0x68] sm:$0xff] %vm1614, %v1609
          %v1619 = vld [vmem:[%s135 + $0x8] sm:$0xff]
          %v1620 = vld [vmem:[%s135 + $0x28] sm:$0xff]
          %v1621 = vld [vmem:[%s135 + $0x48] sm:$0xff]
          %v1622 = vld [vmem:[%s135 + $0x68] sm:$0xff]
          %1627 = vrot.lane.b32.xlu0 %v1619, 104
          %v1628 = vpop.permute.xlu0 %1627
          %1629 = vrot.lane.b32.xlu0 %v1620, 104
          %v1630 = vpop.permute.xlu0 %1629
          %1631 = vrot.lane.b32.xlu0 %v1621, 104
          %v1632 = vpop.permute.xlu0 %1631
          %1633 = vrot.lane.b32.xlu0 %v1622, 104
          %v1634 = vpop.permute.xlu0 %1633
          %1639 = vxpose.xlu0.b32.start [1/16] %v1628, 128
          %1640 = vxpose.xlu0.b32.cont [2/16] 0.0, 128
          %1641 = vxpose.xlu0.b32.cont [3/16] 0.0, 128
          %1642 = vxpose.xlu0.b32.cont [4/16] 0.0, 128
          %1643 = vxpose.xlu0.b32.cont [5/16] 0.0, 128
          %1644 = vxpose.xlu0.b32.cont [6/16] 0.0, 128
          %1645 = vxpose.xlu0.b32.cont [7/16] 0.0, 128
          %1646 = vxpose.xlu0.b32.cont [8/16] 0.0, 128
          %1647 = vxpose.xlu0.b32.cont [9/16] 0.0, 128
          %1648 = vxpose.xlu0.b32.cont [10/16] 0.0, 128
          %1649 = vxpose.xlu0.b32.cont [11/16] 0.0, 128
          %1650 = vxpose.xlu0.b32.cont [12/16] 0.0, 128
          %1651 = vxpose.xlu0.b32.cont [13/16] 0.0, 128
          %1652 = vxpose.xlu0.b32.cont [14/16] 0.0, 128
          %1653 = vxpose.xlu0.b32.cont [15/16] 0.0, 128
          %1654 = vxpose.xlu0.b32.end [16/16] 0.0, 128
          %v1655 = vpop.trf.xlu0
          %v1656 = vpop.trf.xlu0
          %v1657 = vpop.trf.xlu0
          %v1658 = vpop.trf.xlu0
          %v1659 = vpop.trf.xlu0
          %v1660 = vpop.trf.xlu0
          %v1661 = vpop.trf.xlu0
          %v1662 = vpop.trf.xlu0
          %v1663 = vpop.trf.xlu0
          %v1664 = vpop.trf.xlu0
          %v1665 = vpop.trf.xlu0
          %v1666 = vpop.trf.xlu0
          %v1667 = vpop.trf.xlu0
          %v1668 = vpop.trf.xlu0
          %v1669 = vpop.trf.xlu0
          %v1670 = vpop.trf.xlu0
          %1671 = vxpose.xlu0.b32.start [1/16] %v1630, 128
          %1672 = vxpose.xlu0.b32.cont [2/16] 0.0, 128
          %1673 = vxpose.xlu0.b32.cont [3/16] 0.0, 128
          %1674 = vxpose.xlu0.b32.cont [4/16] 0.0, 128
          %1675 = vxpose.xlu0.b32.cont [5/16] 0.0, 128
          %1676 = vxpose.xlu0.b32.cont [6/16] 0.0, 128
          %1677 = vxpose.xlu0.b32.cont [7/16] 0.0, 128
          %1678 = vxpose.xlu0.b32.cont [8/16] 0.0, 128
          %1679 = vxpose.xlu0.b32.cont [9/16] 0.0, 128
          %1680 = vxpose.xlu0.b32.cont [10/16] 0.0, 128
          %1681 = vxpose.xlu0.b32.cont [11/16] 0.0, 128
          %1682 = vxpose.xlu0.b32.cont [12/16] 0.0, 128
          %1683 = vxpose.xlu0.b32.cont [13/16] 0.0, 128
          %1684 = vxpose.xlu0.b32.cont [14/16] 0.0, 128
          %1685 = vxpose.xlu0.b32.cont [15/16] 0.0, 128
          %1686 = vxpose.xlu0.b32.end [16/16] 0.0, 128
          %v1687 = vpop.trf.xlu0
          %v1688 = vpop.trf.xlu0
          %v1689 = vpop.trf.xlu0
          %v1690 = vpop.trf.xlu0
          %v1691 = vpop.trf.xlu0
          %v1692 = vpop.trf.xlu0
          %v1693 = vpop.trf.xlu0
          %v1694 = vpop.trf.xlu0
          %v1695 = vpop.trf.xlu0
          %v1696 = vpop.trf.xlu0
          %v1697 = vpop.trf.xlu0
          %v1698 = vpop.trf.xlu0
          %v1699 = vpop.trf.xlu0
          %v1700 = vpop.trf.xlu0
          %v1701 = vpop.trf.xlu0
          %v1702 = vpop.trf.xlu0
          %1703 = vxpose.xlu0.b32.start [1/16] %v1632, 128
          %1704 = vxpose.xlu0.b32.cont [2/16] 0.0, 128
          %1705 = vxpose.xlu0.b32.cont [3/16] 0.0, 128
          %1706 = vxpose.xlu0.b32.cont [4/16] 0.0, 128
          %1707 = vxpose.xlu0.b32.cont [5/16] 0.0, 128
          %1708 = vxpose.xlu0.b32.cont [6/16] 0.0, 128
          %1709 = vxpose.xlu0.b32.cont [7/16] 0.0, 128
          %1710 = vxpose.xlu0.b32.cont [8/16] 0.0, 128
          %1711 = vxpose.xlu0.b32.cont [9/16] 0.0, 128
          %1712 = vxpose.xlu0.b32.cont [10/16] 0.0, 128
          %1713 = vxpose.xlu0.b32.cont [11/16] 0.0, 128
          %1714 = vxpose.xlu0.b32.cont [12/16] 0.0, 128
          %1715 = vxpose.xlu0.b32.cont [13/16] 0.0, 128
          %1716 = vxpose.xlu0.b32.cont [14/16] 0.0, 128
          %1717 = vxpose.xlu0.b32.cont [15/16] 0.0, 128
          %1718 = vxpose.xlu0.b32.end [16/16] 0.0, 128
          %v1719 = vpop.trf.xlu0
          %v1720 = vpop.trf.xlu0
          %v1721 = vpop.trf.xlu0
          %v1722 = vpop.trf.xlu0
          %v1723 = vpop.trf.xlu0
          %v1724 = vpop.trf.xlu0
          %v1725 = vpop.trf.xlu0
          %v1726 = vpop.trf.xlu0
          %v1727 = vpop.trf.xlu0
          %v1728 = vpop.trf.xlu0
          %v1729 = vpop.trf.xlu0
          %v1730 = vpop.trf.xlu0
          %v1731 = vpop.trf.xlu0
          %v1732 = vpop.trf.xlu0
          %v1733 = vpop.trf.xlu0
          %v1734 = vpop.trf.xlu0
          %1735 = vxpose.xlu0.b32.start [1/16] %v1634, 128
          %1736 = vxpose.xlu0.b32.cont [2/16] 0.0, 128
          %1737 = vxpose.xlu0.b32.cont [3/16] 0.0, 128
          %1738 = vxpose.xlu0.b32.cont [4/16] 0.0, 128
          %1739 = vxpose.xlu0.b32.cont [5/16] 0.0, 128
          %1740 = vxpose.xlu0.b32.cont [6/16] 0.0, 128
          %1741 = vxpose.xlu0.b32.cont [7/16] 0.0, 128
          %1742 = vxpose.xlu0.b32.cont [8/16] 0.0, 128
          %1743 = vxpose.xlu0.b32.cont [9/16] 0.0, 128
          %1744 = vxpose.xlu0.b32.cont [10/16] 0.0, 128
          %1745 = vxpose.xlu0.b32.cont [11/16] 0.0, 128
          %1746 = vxpose.xlu0.b32.cont [12/16] 0.0, 128
          %1747 = vxpose.xlu0.b32.cont [13/16] 0.0, 128
          %1748 = vxpose.xlu0.b32.cont [14/16] 0.0, 128
          %1749 = vxpose.xlu0.b32.cont [15/16] 0.0, 128
          %1750 = vxpose.xlu0.b32.end [16/16] 0.0, 128
          %v1751 = vpop.trf.xlu0
          %v1752 = vpop.trf.xlu0
          %v1753 = vpop.trf.xlu0
          %v1754 = vpop.trf.xlu0
          %v1755 = vpop.trf.xlu0
          %v1756 = vpop.trf.xlu0
          %v1757 = vpop.trf.xlu0
          %v1758 = vpop.trf.xlu0
          %v1759 = vpop.trf.xlu0
          %v1760 = vpop.trf.xlu0
          %v1761 = vpop.trf.xlu0
          %v1762 = vpop.trf.xlu0
          %v1763 = vpop.trf.xlu0
          %v1764 = vpop.trf.xlu0
          %v1765 = vpop.trf.xlu0
          %v1766 = vpop.trf.xlu0
          %1771 = vrot.lane.b32.xlu0 %v1655, 24
          %v1772 = vpop.permute.xlu0 %1771
          %1773 = vrot.lane.b32.xlu0 %v1687, 24
          %v1774 = vpop.permute.xlu0 %1773
          %1775 = vrot.lane.b32.xlu0 %v1719, 24
          %v1776 = vpop.permute.xlu0 %1775
          %1777 = vrot.lane.b32.xlu0 %v1751, 24
          %v1778 = vpop.permute.xlu0 %1777
          %vm1783 = vcmask 261312
          %1784 = vst.msk [vmem:[%s154 + $0x8] sm:$0xff] %vm1783, %v1772
          %1785 = vst.msk [vmem:[%s154 + $0x28] sm:$0xff] %vm1783, %v1774
          %1786 = vst.msk [vmem:[%s154 + $0x48] sm:$0xff] %vm1783, %v1776
          %1787 = vst.msk [vmem:[%s154 + $0x68] sm:$0xff] %vm1783, %v1778
        $region40: #{tpu_custom_call.1} parent=23 // pred_fallthru
          _
        // Predicated region
        $region41: #{tpu_custom_call.1} parent=23 // pred_check
          %p1788 = pneg %p1300
        $region42: #{tpu_custom_call.1} parent=23 // pred_check_branch
          %1790 = sbr.rel (%p1788) target = $region44
        $region43: #{tpu_custom_call.1} parent=23 // pred_region
          %v1791 = vld [vmem:[%s135 + $0x8] sm:$0xff]
          %v1792 = vld [vmem:[%s135 + $0x28] sm:$0xff]
          %v1793 = vld [vmem:[%s135 + $0x48] sm:$0xff]
          %v1794 = vld [vmem:[%s135 + $0x68] sm:$0xff]
          %1795 = vxpose.xlu0.b32.start [1/16] %v1791, 128
          %1796 = vxpose.xlu0.b32.cont [2/16] 0.0, 128
          %1797 = vxpose.xlu0.b32.cont [3/16] 0.0, 128
          %1798 = vxpose.xlu0.b32.cont [4/16] 0.0, 128
          %1799 = vxpose.xlu0.b32.cont [5/16] 0.0, 128
          %1800 = vxpose.xlu0.b32.cont [6/16] 0.0, 128
          %1801 = vxpose.xlu0.b32.cont [7/16] 0.0, 128
          %1802 = vxpose.xlu0.b32.cont [8/16] 0.0, 128
          %1803 = vxpose.xlu0.b32.cont [9/16] 0.0, 128
          %1804 = vxpose.xlu0.b32.cont [10/16] 0.0, 128
          %1805 = vxpose.xlu0.b32.cont [11/16] 0.0, 128
          %1806 = vxpose.xlu0.b32.cont [12/16] 0.0, 128
          %1807 = vxpose.xlu0.b32.cont [13/16] 0.0, 128
          %1808 = vxpose.xlu0.b32.cont [14/16] 0.0, 128
          %1809 = vxpose.xlu0.b32.cont [15/16] 0.0, 128
          %1810 = vxpose.xlu0.b32.end [16/16] 0.0, 128
          %v1811 = vpop.trf.xlu0
          %v1812 = vpop.trf.xlu0
          %v1813 = vpop.trf.xlu0
          %v1814 = vpop.trf.xlu0
          %v1815 = vpop.trf.xlu0
          %v1816 = vpop.trf.xlu0
          %v1817 = vpop.trf.xlu0
          %v1818 = vpop.trf.xlu0
          %v1819 = vpop.trf.xlu0
          %v1820 = vpop.trf.xlu0
          %v1821 = vpop.trf.xlu0
          %v1822 = vpop.trf.xlu0
          %v1823 = vpop.trf.xlu0
          %v1824 = vpop.trf.xlu0
          %v1825 = vpop.trf.xlu0
          %v1826 = vpop.trf.xlu0
          %1827 = vxpose.xlu0.b32.start [1/16] %v1792, 128
          %1828 = vxpose.xlu0.b32.cont [2/16] 0.0, 128
          %1829 = vxpose.xlu0.b32.cont [3/16] 0.0, 128
          %1830 = vxpose.xlu0.b32.cont [4/16] 0.0, 128
          %1831 = vxpose.xlu0.b32.cont [5/16] 0.0, 128
          %1832 = vxpose.xlu0.b32.cont [6/16] 0.0, 128
          %1833 = vxpose.xlu0.b32.cont [7/16] 0.0, 128
          %1834 = vxpose.xlu0.b32.cont [8/16] 0.0, 128
          %1835 = vxpose.xlu0.b32.cont [9/16] 0.0, 128
          %1836 = vxpose.xlu0.b32.cont [10/16] 0.0, 128
          %1837 = vxpose.xlu0.b32.cont [11/16] 0.0, 128
          %1838 = vxpose.xlu0.b32.cont [12/16] 0.0, 128
          %1839 = vxpose.xlu0.b32.cont [13/16] 0.0, 128
          %1840 = vxpose.xlu0.b32.cont [14/16] 0.0, 128
          %1841 = vxpose.xlu0.b32.cont [15/16] 0.0, 128
          %1842 = vxpose.xlu0.b32.end [16/16] 0.0, 128
          %v1843 = vpop.trf.xlu0
          %v1844 = vpop.trf.xlu0
          %v1845 = vpop.trf.xlu0
          %v1846 = vpop.trf.xlu0
          %v1847 = vpop.trf.xlu0
          %v1848 = vpop.trf.xlu0
          %v1849 = vpop.trf.xlu0
          %v1850 = vpop.trf.xlu0
          %v1851 = vpop.trf.xlu0
          %v1852 = vpop.trf.xlu0
          %v1853 = vpop.trf.xlu0
          %v1854 = vpop.trf.xlu0
          %v1855 = vpop.trf.xlu0
          %v1856 = vpop.trf.xlu0
          %v1857 = vpop.trf.xlu0
          %v1858 = vpop.trf.xlu0
          %1859 = vxpose.xlu0.b32.start [1/16] %v1793, 128
          %1860 = vxpose.xlu0.b32.cont [2/16] 0.0, 128
          %1861 = vxpose.xlu0.b32.cont [3/16] 0.0, 128
          %1862 = vxpose.xlu0.b32.cont [4/16] 0.0, 128
          %1863 = vxpose.xlu0.b32.cont [5/16] 0.0, 128
          %1864 = vxpose.xlu0.b32.cont [6/16] 0.0, 128
          %1865 = vxpose.xlu0.b32.cont [7/16] 0.0, 128
          %1866 = vxpose.xlu0.b32.cont [8/16] 0.0, 128
          %1867 = vxpose.xlu0.b32.cont [9/16] 0.0, 128
          %1868 = vxpose.xlu0.b32.cont [10/16] 0.0, 128
          %1869 = vxpose.xlu0.b32.cont [11/16] 0.0, 128
          %1870 = vxpose.xlu0.b32.cont [12/16] 0.0, 128
          %1871 = vxpose.xlu0.b32.cont [13/16] 0.0, 128
          %1872 = vxpose.xlu0.b32.cont [14/16] 0.0, 128
          %1873 = vxpose.xlu0.b32.cont [15/16] 0.0, 128
          %1874 = vxpose.xlu0.b32.end [16/16] 0.0, 128
          %v1875 = vpop.trf.xlu0
          %v1876 = vpop.trf.xlu0
          %v1877 = vpop.trf.xlu0
          %v1878 = vpop.trf.xlu0
          %v1879 = vpop.trf.xlu0
          %v1880 = vpop.trf.xlu0
          %v1881 = vpop.trf.xlu0
          %v1882 = vpop.trf.xlu0
          %v1883 = vpop.trf.xlu0
          %v1884 = vpop.trf.xlu0
          %v1885 = vpop.trf.xlu0
          %v1886 = vpop.trf.xlu0
          %v1887 = vpop.trf.xlu0
          %v1888 = vpop.trf.xlu0
          %v1889 = vpop.trf.xlu0
          %v1890 = vpop.trf.xlu0
          %1891 = vxpose.xlu0.b32.start [1/16] %v1794, 128
          %1892 = vxpose.xlu0.b32.cont [2/16] 0.0, 128
          %1893 = vxpose.xlu0.b32.cont [3/16] 0.0, 128
          %1894 = vxpose.xlu0.b32.cont [4/16] 0.0, 128
          %1895 = vxpose.xlu0.b32.cont [5/16] 0.0, 128
          %1896 = vxpose.xlu0.b32.cont [6/16] 0.0, 128
          %1897 = vxpose.xlu0.b32.cont [7/16] 0.0, 128
          %1898 = vxpose.xlu0.b32.cont [8/16] 0.0, 128
          %1899 = vxpose.xlu0.b32.cont [9/16] 0.0, 128
          %1900 = vxpose.xlu0.b32.cont [10/16] 0.0, 128
          %1901 = vxpose.xlu0.b32.cont [11/16] 0.0, 128
          %1902 = vxpose.xlu0.b32.cont [12/16] 0.0, 128
          %1903 = vxpose.xlu0.b32.cont [13/16] 0.0, 128
          %1904 = vxpose.xlu0.b32.cont [14/16] 0.0, 128
          %1905 = vxpose.xlu0.b32.cont [15/16] 0.0, 128
          %1906 = vxpose.xlu0.b32.end [16/16] 0.0, 128
          %v1907 = vpop.trf.xlu0
          %v1908 = vpop.trf.xlu0
          %v1909 = vpop.trf.xlu0
          %v1910 = vpop.trf.xlu0
          %v1911 = vpop.trf.xlu0
          %v1912 = vpop.trf.xlu0
          %v1913 = vpop.trf.xlu0
          %v1914 = vpop.trf.xlu0
          %v1915 = vpop.trf.xlu0
          %v1916 = vpop.trf.xlu0
          %v1917 = vpop.trf.xlu0
          %v1918 = vpop.trf.xlu0
          %v1919 = vpop.trf.xlu0
          %v1920 = vpop.trf.xlu0
          %v1921 = vpop.trf.xlu0
          %v1922 = vpop.trf.xlu0
          %vm1923 = vcmask 64512
          %1924 = vst.msk [vmem:[%s154 + $0x8] sm:$0xff] %vm1923, %v1811
          %1925 = vst.msk [vmem:[%s154 + $0x28] sm:$0xff] %vm1923, %v1843
          %1926 = vst.msk [vmem:[%s154 + $0x48] sm:$0xff] %vm1923, %v1875
          %1927 = vst.msk [vmem:[%s154 + $0x68] sm:$0xff] %vm1923, %v1907
          %v1928 = vld [vmem:[%s135 + $0x8] sm:$0xff]
          %v1929 = vld [vmem:[%s135 + $0x28] sm:$0xff]
          %v1930 = vld [vmem:[%s135 + $0x48] sm:$0xff]
          %v1931 = vld [vmem:[%s135 + $0x68] sm:$0xff]
          %1936 = vrot.lane.b32.xlu0 %v1928, 120
          %v1937 = vpop.permute.xlu0 %1936
          %1938 = vrot.lane.b32.xlu0 %v1929, 120
          %v1939 = vpop.permute.xlu0 %1938
          %1940 = vrot.lane.b32.xlu0 %v1930, 120
          %v1941 = vpop.permute.xlu0 %1940
          %1942 = vrot.lane.b32.xlu0 %v1931, 120
          %v1943 = vpop.permute.xlu0 %1942
          %1948 = vxpose.xlu0.b32.start [1/16] %v1937, 128
          %1949 = vxpose.xlu0.b32.cont [2/16] 0.0, 128
          %1950 = vxpose.xlu0.b32.cont [3/16] 0.0, 128
          %1951 = vxpose.xlu0.b32.cont [4/16] 0.0, 128
          %1952 = vxpose.xlu0.b32.cont [5/16] 0.0, 128
          %1953 = vxpose.xlu0.b32.cont [6/16] 0.0, 128
          %1954 = vxpose.xlu0.b32.cont [7/16] 0.0, 128
          %1955 = vxpose.xlu0.b32.cont [8/16] 0.0, 128
          %1956 = vxpose.xlu0.b32.cont [9/16] 0.0, 128
          %1957 = vxpose.xlu0.b32.cont [10/16] 0.0, 128
          %1958 = vxpose.xlu0.b32.cont [11/16] 0.0, 128
          %1959 = vxpose.xlu0.b32.cont [12/16] 0.0, 128
          %1960 = vxpose.xlu0.b32.cont [13/16] 0.0, 128
          %1961 = vxpose.xlu0.b32.cont [14/16] 0.0, 128
          %1962 = vxpose.xlu0.b32.cont [15/16] 0.0, 128
          %1963 = vxpose.xlu0.b32.end [16/16] 0.0, 128
          %v1964 = vpop.trf.xlu0
          %v1965 = vpop.trf.xlu0
          %v1966 = vpop.trf.xlu0
          %v1967 = vpop.trf.xlu0
          %v1968 = vpop.trf.xlu0
          %v1969 = vpop.trf.xlu0
          %v1970 = vpop.trf.xlu0
          %v1971 = vpop.trf.xlu0
          %v1972 = vpop.trf.xlu0
          %v1973 = vpop.trf.xlu0
          %v1974 = vpop.trf.xlu0
          %v1975 = vpop.trf.xlu0
          %v1976 = vpop.trf.xlu0
          %v1977 = vpop.trf.xlu0
          %v1978 = vpop.trf.xlu0
          %v1979 = vpop.trf.xlu0
          %1980 = vxpose.xlu0.b32.start [1/16] %v1939, 128
          %1981 = vxpose.xlu0.b32.cont [2/16] 0.0, 128
          %1982 = vxpose.xlu0.b32.cont [3/16] 0.0, 128
          %1983 = vxpose.xlu0.b32.cont [4/16] 0.0, 128
          %1984 = vxpose.xlu0.b32.cont [5/16] 0.0, 128
          %1985 = vxpose.xlu0.b32.cont [6/16] 0.0, 128
          %1986 = vxpose.xlu0.b32.cont [7/16] 0.0, 128
          %1987 = vxpose.xlu0.b32.cont [8/16] 0.0, 128
          %1988 = vxpose.xlu0.b32.cont [9/16] 0.0, 128
          %1989 = vxpose.xlu0.b32.cont [10/16] 0.0, 128
          %1990 = vxpose.xlu0.b32.cont [11/16] 0.0, 128
          %1991 = vxpose.xlu0.b32.cont [12/16] 0.0, 128
          %1992 = vxpose.xlu0.b32.cont [13/16] 0.0, 128
          %1993 = vxpose.xlu0.b32.cont [14/16] 0.0, 128
          %1994 = vxpose.xlu0.b32.cont [15/16] 0.0, 128
          %1995 = vxpose.xlu0.b32.end [16/16] 0.0, 128
          %v1996 = vpop.trf.xlu0
          %v1997 = vpop.trf.xlu0
          %v1998 = vpop.trf.xlu0
          %v1999 = vpop.trf.xlu0
          %v2000 = vpop.trf.xlu0
          %v2001 = vpop.trf.xlu0
          %v2002 = vpop.trf.xlu0
          %v2003 = vpop.trf.xlu0
          %v2004 = vpop.trf.xlu0
          %v2005 = vpop.trf.xlu0
          %v2006 = vpop.trf.xlu0
          %v2007 = vpop.trf.xlu0
          %v2008 = vpop.trf.xlu0
          %v2009 = vpop.trf.xlu0
          %v2010 = vpop.trf.xlu0
          %v2011 = vpop.trf.xlu0
          %2012 = vxpose.xlu0.b32.start [1/16] %v1941, 128
          %2013 = vxpose.xlu0.b32.cont [2/16] 0.0, 128
          %2014 = vxpose.xlu0.b32.cont [3/16] 0.0, 128
          %2015 = vxpose.xlu0.b32.cont [4/16] 0.0, 128
          %2016 = vxpose.xlu0.b32.cont [5/16] 0.0, 128
          %2017 = vxpose.xlu0.b32.cont [6/16] 0.0, 128
          %2018 = vxpose.xlu0.b32.cont [7/16] 0.0, 128
          %2019 = vxpose.xlu0.b32.cont [8/16] 0.0, 128
          %2020 = vxpose.xlu0.b32.cont [9/16] 0.0, 128
          %2021 = vxpose.xlu0.b32.cont [10/16] 0.0, 128
          %2022 = vxpose.xlu0.b32.cont [11/16] 0.0, 128
          %2023 = vxpose.xlu0.b32.cont [12/16] 0.0, 128
          %2024 = vxpose.xlu0.b32.cont [13/16] 0.0, 128
          %2025 = vxpose.xlu0.b32.cont [14/16] 0.0, 128
          %2026 = vxpose.xlu0.b32.cont [15/16] 0.0, 128
          %2027 = vxpose.xlu0.b32.end [16/16] 0.0, 128
          %v2028 = vpop.trf.xlu0
          %v2029 = vpop.trf.xlu0
          %v2030 = vpop.trf.xlu0
          %v2031 = vpop.trf.xlu0
          %v2032 = vpop.trf.xlu0
          %v2033 = vpop.trf.xlu0
          %v2034 = vpop.trf.xlu0
          %v2035 = vpop.trf.xlu0
          %v2036 = vpop.trf.xlu0
          %v2037 = vpop.trf.xlu0
          %v2038 = vpop.trf.xlu0
          %v2039 = vpop.trf.xlu0
          %v2040 = vpop.trf.xlu0
          %v2041 = vpop.trf.xlu0
          %v2042 = vpop.trf.xlu0
          %v2043 = vpop.trf.xlu0
          %2044 = vxpose.xlu0.b32.start [1/16] %v1943, 128
          %2045 = vxpose.xlu0.b32.cont [2/16] 0.0, 128
          %2046 = vxpose.xlu0.b32.cont [3/16] 0.0, 128
          %2047 = vxpose.xlu0.b32.cont [4/16] 0.0, 128
          %2048 = vxpose.xlu0.b32.cont [5/16] 0.0, 128
          %2049 = vxpose.xlu0.b32.cont [6/16] 0.0, 128
          %2050 = vxpose.xlu0.b32.cont [7/16] 0.0, 128
          %2051 = vxpose.xlu0.b32.cont [8/16] 0.0, 128
          %2052 = vxpose.xlu0.b32.cont [9/16] 0.0, 128
          %2053 = vxpose.xlu0.b32.cont [10/16] 0.0, 128
          %2054 = vxpose.xlu0.b32.cont [11/16] 0.0, 128
          %2055 = vxpose.xlu0.b32.cont [12/16] 0.0, 128
          %2056 = vxpose.xlu0.b32.cont [13/16] 0.0, 128
          %2057 = vxpose.xlu0.b32.cont [14/16] 0.0, 128
          %2058 = vxpose.xlu0.b32.cont [15/16] 0.0, 128
          %2059 = vxpose.xlu0.b32.end [16/16] 0.0, 128
          %v2060 = vpop.trf.xlu0
          %v2061 = vpop.trf.xlu0
          %v2062 = vpop.trf.xlu0
          %v2063 = vpop.trf.xlu0
          %v2064 = vpop.trf.xlu0
          %v2065 = vpop.trf.xlu0
          %v2066 = vpop.trf.xlu0
          %v2067 = vpop.trf.xlu0
          %v2068 = vpop.trf.xlu0
          %v2069 = vpop.trf.xlu0
          %v2070 = vpop.trf.xlu0
          %v2071 = vpop.trf.xlu0
          %v2072 = vpop.trf.xlu0
          %v2073 = vpop.trf.xlu0
          %v2074 = vpop.trf.xlu0
          %v2075 = vpop.trf.xlu0
          %2080 = vrot.lane.b32.xlu0 %v1964, 8
          %v2081 = vpop.permute.xlu0 %2080
          %2082 = vrot.lane.b32.xlu0 %v1996, 8
          %v2083 = vpop.permute.xlu0 %2082
          %2084 = vrot.lane.b32.xlu0 %v2028, 8
          %v2085 = vpop.permute.xlu0 %2084
          %2086 = vrot.lane.b32.xlu0 %v2060, 8
          %v2087 = vpop.permute.xlu0 %2086
          %vm2092 = vcmask 130112
          %2093 = vst.msk [vmem:[%s154 + $0x8] sm:$0xff] %vm2092, %v2081
          %2094 = vst.msk [vmem:[%s154 + $0x28] sm:$0xff] %vm2092, %v2083
          %2095 = vst.msk [vmem:[%s154 + $0x48] sm:$0xff] %vm2092, %v2085
          %2096 = vst.msk [vmem:[%s154 + $0x68] sm:$0xff] %vm2092, %v2087
          %v2097 = vld [vmem:[%s135 + $0x8] sm:$0xff]
          %v2098 = vld [vmem:[%s135 + $0x28] sm:$0xff]
          %v2099 = vld [vmem:[%s135 + $0x48] sm:$0xff]
          %v2100 = vld [vmem:[%s135 + $0x68] sm:$0xff]
          %2105 = vrot.lane.b32.xlu0 %v2097, 112
          %v2106 = vpop.permute.xlu0 %2105
          %2107 = vrot.lane.b32.xlu0 %v2098, 112
          %v2108 = vpop.permute.xlu0 %2107
          %2109 = vrot.lane.b32.xlu0 %v2099, 112
          %v2110 = vpop.permute.xlu0 %2109
          %2111 = vrot.lane.b32.xlu0 %v2100, 112
          %v2112 = vpop.permute.xlu0 %2111
          %2117 = vxpose.xlu0.b32.start [1/16] %v2106, 128
          %2118 = vxpose.xlu0.b32.cont [2/16] 0.0, 128
          %2119 = vxpose.xlu0.b32.cont [3/16] 0.0, 128
          %2120 = vxpose.xlu0.b32.cont [4/16] 0.0, 128
          %2121 = vxpose.xlu0.b32.cont [5/16] 0.0, 128
          %2122 = vxpose.xlu0.b32.cont [6/16] 0.0, 128
          %2123 = vxpose.xlu0.b32.cont [7/16] 0.0, 128
          %2124 = vxpose.xlu0.b32.cont [8/16] 0.0, 128
          %2125 = vxpose.xlu0.b32.cont [9/16] 0.0, 128
          %2126 = vxpose.xlu0.b32.cont [10/16] 0.0, 128
          %2127 = vxpose.xlu0.b32.cont [11/16] 0.0, 128
          %2128 = vxpose.xlu0.b32.cont [12/16] 0.0, 128
          %2129 = vxpose.xlu0.b32.cont [13/16] 0.0, 128
          %2130 = vxpose.xlu0.b32.cont [14/16] 0.0, 128
          %2131 = vxpose.xlu0.b32.cont [15/16] 0.0, 128
          %2132 = vxpose.xlu0.b32.end [16/16] 0.0, 128
          %v2133 = vpop.trf.xlu0
          %v2134 = vpop.trf.xlu0
          %v2135 = vpop.trf.xlu0
          %v2136 = vpop.trf.xlu0
          %v2137 = vpop.trf.xlu0
          %v2138 = vpop.trf.xlu0
          %v2139 = vpop.trf.xlu0
          %v2140 = vpop.trf.xlu0
          %v2141 = vpop.trf.xlu0
          %v2142 = vpop.trf.xlu0
          %v2143 = vpop.trf.xlu0
          %v2144 = vpop.trf.xlu0
          %v2145 = vpop.trf.xlu0
          %v2146 = vpop.trf.xlu0
          %v2147 = vpop.trf.xlu0
          %v2148 = vpop.trf.xlu0
          %2149 = vxpose.xlu0.b32.start [1/16] %v2108, 128
          %2150 = vxpose.xlu0.b32.cont [2/16] 0.0, 128
          %2151 = vxpose.xlu0.b32.cont [3/16] 0.0, 128
          %2152 = vxpose.xlu0.b32.cont [4/16] 0.0, 128
          %2153 = vxpose.xlu0.b32.cont [5/16] 0.0, 128
          %2154 = vxpose.xlu0.b32.cont [6/16] 0.0, 128
          %2155 = vxpose.xlu0.b32.cont [7/16] 0.0, 128
          %2156 = vxpose.xlu0.b32.cont [8/16] 0.0, 128
          %2157 = vxpose.xlu0.b32.cont [9/16] 0.0, 128
          %2158 = vxpose.xlu0.b32.cont [10/16] 0.0, 128
          %2159 = vxpose.xlu0.b32.cont [11/16] 0.0, 128
          %2160 = vxpose.xlu0.b32.cont [12/16] 0.0, 128
          %2161 = vxpose.xlu0.b32.cont [13/16] 0.0, 128
          %2162 = vxpose.xlu0.b32.cont [14/16] 0.0, 128
          %2163 = vxpose.xlu0.b32.cont [15/16] 0.0, 128
          %2164 = vxpose.xlu0.b32.end [16/16] 0.0, 128
          %v2165 = vpop.trf.xlu0
          %v2166 = vpop.trf.xlu0
          %v2167 = vpop.trf.xlu0
          %v2168 = vpop.trf.xlu0
          %v2169 = vpop.trf.xlu0
          %v2170 = vpop.trf.xlu0
          %v2171 = vpop.trf.xlu0
          %v2172 = vpop.trf.xlu0
          %v2173 = vpop.trf.xlu0
          %v2174 = vpop.trf.xlu0
          %v2175 = vpop.trf.xlu0
          %v2176 = vpop.trf.xlu0
          %v2177 = vpop.trf.xlu0
          %v2178 = vpop.trf.xlu0
          %v2179 = vpop.trf.xlu0
          %v2180 = vpop.trf.xlu0
          %2181 = vxpose.xlu0.b32.start [1/16] %v2110, 128
          %2182 = vxpose.xlu0.b32.cont [2/16] 0.0, 128
          %2183 = vxpose.xlu0.b32.cont [3/16] 0.0, 128
          %2184 = vxpose.xlu0.b32.cont [4/16] 0.0, 128
          %2185 = vxpose.xlu0.b32.cont [5/16] 0.0, 128
          %2186 = vxpose.xlu0.b32.cont [6/16] 0.0, 128
          %2187 = vxpose.xlu0.b32.cont [7/16] 0.0, 128
          %2188 = vxpose.xlu0.b32.cont [8/16] 0.0, 128
          %2189 = vxpose.xlu0.b32.cont [9/16] 0.0, 128
          %2190 = vxpose.xlu0.b32.cont [10/16] 0.0, 128
          %2191 = vxpose.xlu0.b32.cont [11/16] 0.0, 128
          %2192 = vxpose.xlu0.b32.cont [12/16] 0.0, 128
          %2193 = vxpose.xlu0.b32.cont [13/16] 0.0, 128
          %2194 = vxpose.xlu0.b32.cont [14/16] 0.0, 128
          %2195 = vxpose.xlu0.b32.cont [15/16] 0.0, 128
          %2196 = vxpose.xlu0.b32.end [16/16] 0.0, 128
          %v2197 = vpop.trf.xlu0
          %v2198 = vpop.trf.xlu0
          %v2199 = vpop.trf.xlu0
          %v2200 = vpop.trf.xlu0
          %v2201 = vpop.trf.xlu0
          %v2202 = vpop.trf.xlu0
          %v2203 = vpop.trf.xlu0
          %v2204 = vpop.trf.xlu0
          %v2205 = vpop.trf.xlu0
          %v2206 = vpop.trf.xlu0
          %v2207 = vpop.trf.xlu0
          %v2208 = vpop.trf.xlu0
          %v2209 = vpop.trf.xlu0
          %v2210 = vpop.trf.xlu0
          %v2211 = vpop.trf.xlu0
          %v2212 = vpop.trf.xlu0
          %2213 = vxpose.xlu0.b32.start [1/16] %v2112, 128
          %2214 = vxpose.xlu0.b32.cont [2/16] 0.0, 128
          %2215 = vxpose.xlu0.b32.cont [3/16] 0.0, 128
          %2216 = vxpose.xlu0.b32.cont [4/16] 0.0, 128
          %2217 = vxpose.xlu0.b32.cont [5/16] 0.0, 128
          %2218 = vxpose.xlu0.b32.cont [6/16] 0.0, 128
          %2219 = vxpose.xlu0.b32.cont [7/16] 0.0, 128
          %2220 = vxpose.xlu0.b32.cont [8/16] 0.0, 128
          %2221 = vxpose.xlu0.b32.cont [9/16] 0.0, 128
          %2222 = vxpose.xlu0.b32.cont [10/16] 0.0, 128
          %2223 = vxpose.xlu0.b32.cont [11/16] 0.0, 128
          %2224 = vxpose.xlu0.b32.cont [12/16] 0.0, 128
          %2225 = vxpose.xlu0.b32.cont [13/16] 0.0, 128
          %2226 = vxpose.xlu0.b32.cont [14/16] 0.0, 128
          %2227 = vxpose.xlu0.b32.cont [15/16] 0.0, 128
          %2228 = vxpose.xlu0.b32.end [16/16] 0.0, 128
          %v2229 = vpop.trf.xlu0
          %v2230 = vpop.trf.xlu0
          %v2231 = vpop.trf.xlu0
          %v2232 = vpop.trf.xlu0
          %v2233 = vpop.trf.xlu0
          %v2234 = vpop.trf.xlu0
          %v2235 = vpop.trf.xlu0
          %v2236 = vpop.trf.xlu0
          %v2237 = vpop.trf.xlu0
          %v2238 = vpop.trf.xlu0
          %v2239 = vpop.trf.xlu0
          %v2240 = vpop.trf.xlu0
          %v2241 = vpop.trf.xlu0
          %v2242 = vpop.trf.xlu0
          %v2243 = vpop.trf.xlu0
          %v2244 = vpop.trf.xlu0
          %2249 = vrot.lane.b32.xlu0 %v2133, 16
          %v2250 = vpop.permute.xlu0 %2249
          %2251 = vrot.lane.b32.xlu0 %v2165, 16
          %v2252 = vpop.permute.xlu0 %2251
          %2253 = vrot.lane.b32.xlu0 %v2197, 16
          %v2254 = vpop.permute.xlu0 %2253
          %2255 = vrot.lane.b32.xlu0 %v2229, 16
          %v2256 = vpop.permute.xlu0 %2255
          %vm2261 = vcmask 195712
          %2262 = vst.msk [vmem:[%s154 + $0x8] sm:$0xff] %vm2261, %v2250
          %2263 = vst.msk [vmem:[%s154 + $0x28] sm:$0xff] %vm2261, %v2252
          %2264 = vst.msk [vmem:[%s154 + $0x48] sm:$0xff] %vm2261, %v2254
          %2265 = vst.msk [vmem:[%s154 + $0x68] sm:$0xff] %vm2261, %v2256
          %v2266 = vld [vmem:[%s135 + $0x8] sm:$0xff]
          %v2267 = vld [vmem:[%s135 + $0x28] sm:$0xff]
          %v2268 = vld [vmem:[%s135 + $0x48] sm:$0xff]
          %v2269 = vld [vmem:[%s135 + $0x68] sm:$0xff]
          %2274 = vrot.lane.b32.xlu0 %v2266, 104
          %v2275 = vpop.permute.xlu0 %2274
          %2276 = vrot.lane.b32.xlu0 %v2267, 104
          %v2277 = vpop.permute.xlu0 %2276
          %2278 = vrot.lane.b32.xlu0 %v2268, 104
          %v2279 = vpop.permute.xlu0 %2278
          %2280 = vrot.lane.b32.xlu0 %v2269, 104
          %v2281 = vpop.permute.xlu0 %2280
          %2286 = vxpose.xlu0.b32.start [1/16] %v2275, 128
          %2287 = vxpose.xlu0.b32.cont [2/16] 0.0, 128
          %2288 = vxpose.xlu0.b32.cont [3/16] 0.0, 128
          %2289 = vxpose.xlu0.b32.cont [4/16] 0.0, 128
          %2290 = vxpose.xlu0.b32.cont [5/16] 0.0, 128
          %2291 = vxpose.xlu0.b32.cont [6/16] 0.0, 128
          %2292 = vxpose.xlu0.b32.cont [7/16] 0.0, 128
          %2293 = vxpose.xlu0.b32.cont [8/16] 0.0, 128
          %2294 = vxpose.xlu0.b32.cont [9/16] 0.0, 128
          %2295 = vxpose.xlu0.b32.cont [10/16] 0.0, 128
          %2296 = vxpose.xlu0.b32.cont [11/16] 0.0, 128
          %2297 = vxpose.xlu0.b32.cont [12/16] 0.0, 128
          %2298 = vxpose.xlu0.b32.cont [13/16] 0.0, 128
          %2299 = vxpose.xlu0.b32.cont [14/16] 0.0, 128
          %2300 = vxpose.xlu0.b32.cont [15/16] 0.0, 128
          %2301 = vxpose.xlu0.b32.end [16/16] 0.0, 128
          %v2302 = vpop.trf.xlu0
          %v2303 = vpop.trf.xlu0
          %v2304 = vpop.trf.xlu0
          %v2305 = vpop.trf.xlu0
          %v2306 = vpop.trf.xlu0
          %v2307 = vpop.trf.xlu0
          %v2308 = vpop.trf.xlu0
          %v2309 = vpop.trf.xlu0
          %v2310 = vpop.trf.xlu0
          %v2311 = vpop.trf.xlu0
          %v2312 = vpop.trf.xlu0
          %v2313 = vpop.trf.xlu0
          %v2314 = vpop.trf.xlu0
          %v2315 = vpop.trf.xlu0
          %v2316 = vpop.trf.xlu0
          %v2317 = vpop.trf.xlu0
          %2318 = vxpose.xlu0.b32.start [1/16] %v2277, 128
          %2319 = vxpose.xlu0.b32.cont [2/16] 0.0, 128
          %2320 = vxpose.xlu0.b32.cont [3/16] 0.0, 128
          %2321 = vxpose.xlu0.b32.cont [4/16] 0.0, 128
          %2322 = vxpose.xlu0.b32.cont [5/16] 0.0, 128
          %2323 = vxpose.xlu0.b32.cont [6/16] 0.0, 128
          %2324 = vxpose.xlu0.b32.cont [7/16] 0.0, 128
          %2325 = vxpose.xlu0.b32.cont [8/16] 0.0, 128
          %2326 = vxpose.xlu0.b32.cont [9/16] 0.0, 128
          %2327 = vxpose.xlu0.b32.cont [10/16] 0.0, 128
          %2328 = vxpose.xlu0.b32.cont [11/16] 0.0, 128
          %2329 = vxpose.xlu0.b32.cont [12/16] 0.0, 128
          %2330 = vxpose.xlu0.b32.cont [13/16] 0.0, 128
          %2331 = vxpose.xlu0.b32.cont [14/16] 0.0, 128
          %2332 = vxpose.xlu0.b32.cont [15/16] 0.0, 128
          %2333 = vxpose.xlu0.b32.end [16/16] 0.0, 128
          %v2334 = vpop.trf.xlu0
          %v2335 = vpop.trf.xlu0
          %v2336 = vpop.trf.xlu0
          %v2337 = vpop.trf.xlu0
          %v2338 = vpop.trf.xlu0
          %v2339 = vpop.trf.xlu0
          %v2340 = vpop.trf.xlu0
          %v2341 = vpop.trf.xlu0
          %v2342 = vpop.trf.xlu0
          %v2343 = vpop.trf.xlu0
          %v2344 = vpop.trf.xlu0
          %v2345 = vpop.trf.xlu0
          %v2346 = vpop.trf.xlu0
          %v2347 = vpop.trf.xlu0
          %v2348 = vpop.trf.xlu0
          %v2349 = vpop.trf.xlu0
          %2350 = vxpose.xlu0.b32.start [1/16] %v2279, 128
          %2351 = vxpose.xlu0.b32.cont [2/16] 0.0, 128
          %2352 = vxpose.xlu0.b32.cont [3/16] 0.0, 128
          %2353 = vxpose.xlu0.b32.cont [4/16] 0.0, 128
          %2354 = vxpose.xlu0.b32.cont [5/16] 0.0, 128
          %2355 = vxpose.xlu0.b32.cont [6/16] 0.0, 128
          %2356 = vxpose.xlu0.b32.cont [7/16] 0.0, 128
          %2357 = vxpose.xlu0.b32.cont [8/16] 0.0, 128
          %2358 = vxpose.xlu0.b32.cont [9/16] 0.0, 128
          %2359 = vxpose.xlu0.b32.cont [10/16] 0.0, 128
          %2360 = vxpose.xlu0.b32.cont [11/16] 0.0, 128
          %2361 = vxpose.xlu0.b32.cont [12/16] 0.0, 128
          %2362 = vxpose.xlu0.b32.cont [13/16] 0.0, 128
          %2363 = vxpose.xlu0.b32.cont [14/16] 0.0, 128
          %2364 = vxpose.xlu0.b32.cont [15/16] 0.0, 128
          %2365 = vxpose.xlu0.b32.end [16/16] 0.0, 128
          %v2366 = vpop.trf.xlu0
          %v2367 = vpop.trf.xlu0
          %v2368 = vpop.trf.xlu0
          %v2369 = vpop.trf.xlu0
          %v2370 = vpop.trf.xlu0
          %v2371 = vpop.trf.xlu0
          %v2372 = vpop.trf.xlu0
          %v2373 = vpop.trf.xlu0
          %v2374 = vpop.trf.xlu0
          %v2375 = vpop.trf.xlu0
          %v2376 = vpop.trf.xlu0
          %v2377 = vpop.trf.xlu0
          %v2378 = vpop.trf.xlu0
          %v2379 = vpop.trf.xlu0
          %v2380 = vpop.trf.xlu0
          %v2381 = vpop.trf.xlu0
          %2382 = vxpose.xlu0.b32.start [1/16] %v2281, 128
          %2383 = vxpose.xlu0.b32.cont [2/16] 0.0, 128
          %2384 = vxpose.xlu0.b32.cont [3/16] 0.0, 128
          %2385 = vxpose.xlu0.b32.cont [4/16] 0.0, 128
          %2386 = vxpose.xlu0.b32.cont [5/16] 0.0, 128
          %2387 = vxpose.xlu0.b32.cont [6/16] 0.0, 128
          %2388 = vxpose.xlu0.b32.cont [7/16] 0.0, 128
          %2389 = vxpose.xlu0.b32.cont [8/16] 0.0, 128
          %2390 = vxpose.xlu0.b32.cont [9/16] 0.0, 128
          %2391 = vxpose.xlu0.b32.cont [10/16] 0.0, 128
          %2392 = vxpose.xlu0.b32.cont [11/16] 0.0, 128
          %2393 = vxpose.xlu0.b32.cont [12/16] 0.0, 128
          %2394 = vxpose.xlu0.b32.cont [13/16] 0.0, 128
          %2395 = vxpose.xlu0.b32.cont [14/16] 0.0, 128
          %2396 = vxpose.xlu0.b32.cont [15/16] 0.0, 128
          %2397 = vxpose.xlu0.b32.end [16/16] 0.0, 128
          %v2398 = vpop.trf.xlu0
          %v2399 = vpop.trf.xlu0
          %v2400 = vpop.trf.xlu0
          %v2401 = vpop.trf.xlu0
          %v2402 = vpop.trf.xlu0
          %v2403 = vpop.trf.xlu0
          %v2404 = vpop.trf.xlu0
          %v2405 = vpop.trf.xlu0
          %v2406 = vpop.trf.xlu0
          %v2407 = vpop.trf.xlu0
          %v2408 = vpop.trf.xlu0
          %v2409 = vpop.trf.xlu0
          %v2410 = vpop.trf.xlu0
          %v2411 = vpop.trf.xlu0
          %v2412 = vpop.trf.xlu0
          %v2413 = vpop.trf.xlu0
          %2418 = vrot.lane.b32.xlu0 %v2302, 24
          %v2419 = vpop.permute.xlu0 %2418
          %2420 = vrot.lane.b32.xlu0 %v2334, 24
          %v2421 = vpop.permute.xlu0 %2420
          %2422 = vrot.lane.b32.xlu0 %v2366, 24
          %v2423 = vpop.permute.xlu0 %2422
          %2424 = vrot.lane.b32.xlu0 %v2398, 24
          %v2425 = vpop.permute.xlu0 %2424
          %vm2430 = vcmask 261312
          %2431 = vst.msk [vmem:[%s154 + $0x8] sm:$0xff] %vm2430, %v2419
          %2432 = vst.msk [vmem:[%s154 + $0x28] sm:$0xff] %vm2430, %v2421
          %2433 = vst.msk [vmem:[%s154 + $0x48] sm:$0xff] %vm2430, %v2423
          %2434 = vst.msk [vmem:[%s154 + $0x68] sm:$0xff] %vm2430, %v2425
        $region44: #{tpu_custom_call.1} parent=23 // pred_fallthru
          _
        %s2435 = sadd.s32 %s1295, 2
        %s2436 = smul.u32 %s2435, 3
        %p2437 = scmp.gt.s32.totalorder %s2436, 4
        %p2438 = scmp.lt.s32.totalorder %s2436, 8
        %p2439 = pnand %p2437, %p2438
        %p2440 = pneg %p2439
        // Predicated region
        $region45: #{tpu_custom_call.1} parent=23 // pred_check
          _
        $region46: #{tpu_custom_call.1} parent=23 // pred_check_branch
          %2442 = sbr.rel (%p2439) target = $region48
        $region47: #{tpu_custom_call.1} parent=23 // pred_region
          %v2443 = vld [vmem:[%s135 + $0x10] sm:$0xff]
          %v2444 = vld [vmem:[%s135 + $0x30] sm:$0xff]
          %v2445 = vld [vmem:[%s135 + $0x50] sm:$0xff]
          %v2446 = vld [vmem:[%s135 + $0x70] sm:$0xff]
          %vm2447 = vcmask 195712
          %2448 = vst.msk [vmem:[%s154 + $0x10] sm:$0xff] %vm2447, %v2443
          %2449 = vst.msk [vmem:[%s154 + $0x30] sm:$0xff] %vm2447, %v2444
          %2450 = vst.msk [vmem:[%s154 + $0x50] sm:$0xff] %vm2447, %v2445
          %2451 = vst.msk [vmem:[%s154 + $0x70] sm:$0xff] %vm2447, %v2446
          %v2452 = vld [vmem:[%s135 + $0x10] sm:$0xff]
          %v2453 = vld [vmem:[%s135 + $0x30] sm:$0xff]
          %v2454 = vld [vmem:[%s135 + $0x50] sm:$0xff]
          %v2455 = vld [vmem:[%s135 + $0x70] sm:$0xff]
          %2456 = vxpose.xlu0.b32.start [1/16] %v2452, 128
          %2457 = vxpose.xlu0.b32.cont [2/16] 0.0, 128
          %2458 = vxpose.xlu0.b32.cont [3/16] 0.0, 128
          %2459 = vxpose.xlu0.b32.cont [4/16] 0.0, 128
          %2460 = vxpose.xlu0.b32.cont [5/16] 0.0, 128
          %2461 = vxpose.xlu0.b32.cont [6/16] 0.0, 128
          %2462 = vxpose.xlu0.b32.cont [7/16] 0.0, 128
          %2463 = vxpose.xlu0.b32.cont [8/16] 0.0, 128
          %2464 = vxpose.xlu0.b32.cont [9/16] 0.0, 128
          %2465 = vxpose.xlu0.b32.cont [10/16] 0.0, 128
          %2466 = vxpose.xlu0.b32.cont [11/16] 0.0, 128
          %2467 = vxpose.xlu0.b32.cont [12/16] 0.0, 128
          %2468 = vxpose.xlu0.b32.cont [13/16] 0.0, 128
          %2469 = vxpose.xlu0.b32.cont [14/16] 0.0, 128
          %2470 = vxpose.xlu0.b32.cont [15/16] 0.0, 128
          %2471 = vxpose.xlu0.b32.end [16/16] 0.0, 128
          %v2472 = vpop.trf.xlu0
          %v2473 = vpop.trf.xlu0
          %v2474 = vpop.trf.xlu0
          %v2475 = vpop.trf.xlu0
          %v2476 = vpop.trf.xlu0
          %v2477 = vpop.trf.xlu0
          %v2478 = vpop.trf.xlu0
          %v2479 = vpop.trf.xlu0
          %v2480 = vpop.trf.xlu0
          %v2481 = vpop.trf.xlu0
          %v2482 = vpop.trf.xlu0
          %v2483 = vpop.trf.xlu0
          %v2484 = vpop.trf.xlu0
          %v2485 = vpop.trf.xlu0
          %v2486 = vpop.trf.xlu0
          %v2487 = vpop.trf.xlu0
          %2488 = vxpose.xlu0.b32.start [1/16] %v2453, 128
          %2489 = vxpose.xlu0.b32.cont [2/16] 0.0, 128
          %2490 = vxpose.xlu0.b32.cont [3/16] 0.0, 128
          %2491 = vxpose.xlu0.b32.cont [4/16] 0.0, 128
          %2492 = vxpose.xlu0.b32.cont [5/16] 0.0, 128
          %2493 = vxpose.xlu0.b32.cont [6/16] 0.0, 128
          %2494 = vxpose.xlu0.b32.cont [7/16] 0.0, 128
          %2495 = vxpose.xlu0.b32.cont [8/16] 0.0, 128
          %2496 = vxpose.xlu0.b32.cont [9/16] 0.0, 128
          %2497 = vxpose.xlu0.b32.cont [10/16] 0.0, 128
          %2498 = vxpose.xlu0.b32.cont [11/16] 0.0, 128
          %2499 = vxpose.xlu0.b32.cont [12/16] 0.0, 128
          %2500 = vxpose.xlu0.b32.cont [13/16] 0.0, 128
          %2501 = vxpose.xlu0.b32.cont [14/16] 0.0, 128
          %2502 = vxpose.xlu0.b32.cont [15/16] 0.0, 128
          %2503 = vxpose.xlu0.b32.end [16/16] 0.0, 128
          %v2504 = vpop.trf.xlu0
          %v2505 = vpop.trf.xlu0
          %v2506 = vpop.trf.xlu0
          %v2507 = vpop.trf.xlu0
          %v2508 = vpop.trf.xlu0
          %v2509 = vpop.trf.xlu0
          %v2510 = vpop.trf.xlu0
          %v2511 = vpop.trf.xlu0
          %v2512 = vpop.trf.xlu0
          %v2513 = vpop.trf.xlu0
          %v2514 = vpop.trf.xlu0
          %v2515 = vpop.trf.xlu0
          %v2516 = vpop.trf.xlu0
          %v2517 = vpop.trf.xlu0
          %v2518 = vpop.trf.xlu0
          %v2519 = vpop.trf.xlu0
          %2520 = vxpose.xlu0.b32.start [1/16] %v2454, 128
          %2521 = vxpose.xlu0.b32.cont [2/16] 0.0, 128
          %2522 = vxpose.xlu0.b32.cont [3/16] 0.0, 128
          %2523 = vxpose.xlu0.b32.cont [4/16] 0.0, 128
          %2524 = vxpose.xlu0.b32.cont [5/16] 0.0, 128
          %2525 = vxpose.xlu0.b32.cont [6/16] 0.0, 128
          %2526 = vxpose.xlu0.b32.cont [7/16] 0.0, 128
          %2527 = vxpose.xlu0.b32.cont [8/16] 0.0, 128
          %2528 = vxpose.xlu0.b32.cont [9/16] 0.0, 128
          %2529 = vxpose.xlu0.b32.cont [10/16] 0.0, 128
          %2530 = vxpose.xlu0.b32.cont [11/16] 0.0, 128
          %2531 = vxpose.xlu0.b32.cont [12/16] 0.0, 128
          %2532 = vxpose.xlu0.b32.cont [13/16] 0.0, 128
          %2533 = vxpose.xlu0.b32.cont [14/16] 0.0, 128
          %2534 = vxpose.xlu0.b32.cont [15/16] 0.0, 128
          %2535 = vxpose.xlu0.b32.end [16/16] 0.0, 128
          %v2536 = vpop.trf.xlu0
          %v2537 = vpop.trf.xlu0
          %v2538 = vpop.trf.xlu0
          %v2539 = vpop.trf.xlu0
          %v2540 = vpop.trf.xlu0
          %v2541 = vpop.trf.xlu0
          %v2542 = vpop.trf.xlu0
          %v2543 = vpop.trf.xlu0
          %v2544 = vpop.trf.xlu0
          %v2545 = vpop.trf.xlu0
          %v2546 = vpop.trf.xlu0
          %v2547 = vpop.trf.xlu0
          %v2548 = vpop.trf.xlu0
          %v2549 = vpop.trf.xlu0
          %v2550 = vpop.trf.xlu0
          %v2551 = vpop.trf.xlu0
          %2552 = vxpose.xlu0.b32.start [1/16] %v2455, 128
          %2553 = vxpose.xlu0.b32.cont [2/16] 0.0, 128
          %2554 = vxpose.xlu0.b32.cont [3/16] 0.0, 128
          %2555 = vxpose.xlu0.b32.cont [4/16] 0.0, 128
          %2556 = vxpose.xlu0.b32.cont [5/16] 0.0, 128
          %2557 = vxpose.xlu0.b32.cont [6/16] 0.0, 128
          %2558 = vxpose.xlu0.b32.cont [7/16] 0.0, 128
          %2559 = vxpose.xlu0.b32.cont [8/16] 0.0, 128
          %2560 = vxpose.xlu0.b32.cont [9/16] 0.0, 128
          %2561 = vxpose.xlu0.b32.cont [10/16] 0.0, 128
          %2562 = vxpose.xlu0.b32.cont [11/16] 0.0, 128
          %2563 = vxpose.xlu0.b32.cont [12/16] 0.0, 128
          %2564 = vxpose.xlu0.b32.cont [13/16] 0.0, 128
          %2565 = vxpose.xlu0.b32.cont [14/16] 0.0, 128
          %2566 = vxpose.xlu0.b32.cont [15/16] 0.0, 128
          %2567 = vxpose.xlu0.b32.end [16/16] 0.0, 128
          %v2568 = vpop.trf.xlu0
          %v2569 = vpop.trf.xlu0
          %v2570 = vpop.trf.xlu0
          %v2571 = vpop.trf.xlu0
          %v2572 = vpop.trf.xlu0
          %v2573 = vpop.trf.xlu0
          %v2574 = vpop.trf.xlu0
          %v2575 = vpop.trf.xlu0
          %v2576 = vpop.trf.xlu0
          %v2577 = vpop.trf.xlu0
          %v2578 = vpop.trf.xlu0
          %v2579 = vpop.trf.xlu0
          %v2580 = vpop.trf.xlu0
          %v2581 = vpop.trf.xlu0
          %v2582 = vpop.trf.xlu0
          %v2583 = vpop.trf.xlu0
          %vm2584 = vcmask 64512
          %2585 = vst.msk [vmem:[%s154 + $0x10] sm:$0xff] %vm2584, %v2472
          %2586 = vst.msk [vmem:[%s154 + $0x30] sm:$0xff] %vm2584, %v2504
          %2587 = vst.msk [vmem:[%s154 + $0x50] sm:$0xff] %vm2584, %v2536
          %2588 = vst.msk [vmem:[%s154 + $0x70] sm:$0xff] %vm2584, %v2568
          %v2589 = vld [vmem:[%s135 + $0x10] sm:$0xff]
          %v2590 = vld [vmem:[%s135 + $0x30] sm:$0xff]
          %v2591 = vld [vmem:[%s135 + $0x50] sm:$0xff]
          %v2592 = vld [vmem:[%s135 + $0x70] sm:$0xff]
          %2597 = vrot.lane.b32.xlu0 %v2589, 120
          %v2598 = vpop.permute.xlu0 %2597
          %2599 = vrot.lane.b32.xlu0 %v2590, 120
          %v2600 = vpop.permute.xlu0 %2599
          %2601 = vrot.lane.b32.xlu0 %v2591, 120
          %v2602 = vpop.permute.xlu0 %2601
          %2603 = vrot.lane.b32.xlu0 %v2592, 120
          %v2604 = vpop.permute.xlu0 %2603
          %2609 = vxpose.xlu0.b32.start [1/16] %v2598, 128
          %2610 = vxpose.xlu0.b32.cont [2/16] 0.0, 128
          %2611 = vxpose.xlu0.b32.cont [3/16] 0.0, 128
          %2612 = vxpose.xlu0.b32.cont [4/16] 0.0, 128
          %2613 = vxpose.xlu0.b32.cont [5/16] 0.0, 128
          %2614 = vxpose.xlu0.b32.cont [6/16] 0.0, 128
          %2615 = vxpose.xlu0.b32.cont [7/16] 0.0, 128
          %2616 = vxpose.xlu0.b32.cont [8/16] 0.0, 128
          %2617 = vxpose.xlu0.b32.cont [9/16] 0.0, 128
          %2618 = vxpose.xlu0.b32.cont [10/16] 0.0, 128
          %2619 = vxpose.xlu0.b32.cont [11/16] 0.0, 128
          %2620 = vxpose.xlu0.b32.cont [12/16] 0.0, 128
          %2621 = vxpose.xlu0.b32.cont [13/16] 0.0, 128
          %2622 = vxpose.xlu0.b32.cont [14/16] 0.0, 128
          %2623 = vxpose.xlu0.b32.cont [15/16] 0.0, 128
          %2624 = vxpose.xlu0.b32.end [16/16] 0.0, 128
          %v2625 = vpop.trf.xlu0
          %v2626 = vpop.trf.xlu0
          %v2627 = vpop.trf.xlu0
          %v2628 = vpop.trf.xlu0
          %v2629 = vpop.trf.xlu0
          %v2630 = vpop.trf.xlu0
          %v2631 = vpop.trf.xlu0
          %v2632 = vpop.trf.xlu0
          %v2633 = vpop.trf.xlu0
          %v2634 = vpop.trf.xlu0
          %v2635 = vpop.trf.xlu0
          %v2636 = vpop.trf.xlu0
          %v2637 = vpop.trf.xlu0
          %v2638 = vpop.trf.xlu0
          %v2639 = vpop.trf.xlu0
          %v2640 = vpop.trf.xlu0
          %2641 = vxpose.xlu0.b32.start [1/16] %v2600, 128
          %2642 = vxpose.xlu0.b32.cont [2/16] 0.0, 128
          %2643 = vxpose.xlu0.b32.cont [3/16] 0.0, 128
          %2644 = vxpose.xlu0.b32.cont [4/16] 0.0, 128
          %2645 = vxpose.xlu0.b32.cont [5/16] 0.0, 128
          %2646 = vxpose.xlu0.b32.cont [6/16] 0.0, 128
          %2647 = vxpose.xlu0.b32.cont [7/16] 0.0, 128
          %2648 = vxpose.xlu0.b32.cont [8/16] 0.0, 128
          %2649 = vxpose.xlu0.b32.cont [9/16] 0.0, 128
          %2650 = vxpose.xlu0.b32.cont [10/16] 0.0, 128
          %2651 = vxpose.xlu0.b32.cont [11/16] 0.0, 128
          %2652 = vxpose.xlu0.b32.cont [12/16] 0.0, 128
          %2653 = vxpose.xlu0.b32.cont [13/16] 0.0, 128
          %2654 = vxpose.xlu0.b32.cont [14/16] 0.0, 128
          %2655 = vxpose.xlu0.b32.cont [15/16] 0.0, 128
          %2656 = vxpose.xlu0.b32.end [16/16] 0.0, 128
          %v2657 = vpop.trf.xlu0
          %v2658 = vpop.trf.xlu0
          %v2659 = vpop.trf.xlu0
          %v2660 = vpop.trf.xlu0
          %v2661 = vpop.trf.xlu0
          %v2662 = vpop.trf.xlu0
          %v2663 = vpop.trf.xlu0
          %v2664 = vpop.trf.xlu0
          %v2665 = vpop.trf.xlu0
          %v2666 = vpop.trf.xlu0
          %v2667 = vpop.trf.xlu0
          %v2668 = vpop.trf.xlu0
          %v2669 = vpop.trf.xlu0
          %v2670 = vpop.trf.xlu0
          %v2671 = vpop.trf.xlu0
          %v2672 = vpop.trf.xlu0
          %2673 = vxpose.xlu0.b32.start [1/16] %v2602, 128
          %2674 = vxpose.xlu0.b32.cont [2/16] 0.0, 128
          %2675 = vxpose.xlu0.b32.cont [3/16] 0.0, 128
          %2676 = vxpose.xlu0.b32.cont [4/16] 0.0, 128
          %2677 = vxpose.xlu0.b32.cont [5/16] 0.0, 128
          %2678 = vxpose.xlu0.b32.cont [6/16] 0.0, 128
          %2679 = vxpose.xlu0.b32.cont [7/16] 0.0, 128
          %2680 = vxpose.xlu0.b32.cont [8/16] 0.0, 128
          %2681 = vxpose.xlu0.b32.cont [9/16] 0.0, 128
          %2682 = vxpose.xlu0.b32.cont [10/16] 0.0, 128
          %2683 = vxpose.xlu0.b32.cont [11/16] 0.0, 128
          %2684 = vxpose.xlu0.b32.cont [12/16] 0.0, 128
          %2685 = vxpose.xlu0.b32.cont [13/16] 0.0, 128
          %2686 = vxpose.xlu0.b32.cont [14/16] 0.0, 128
          %2687 = vxpose.xlu0.b32.cont [15/16] 0.0, 128
          %2688 = vxpose.xlu0.b32.end [16/16] 0.0, 128
          %v2689 = vpop.trf.xlu0
          %v2690 = vpop.trf.xlu0
          %v2691 = vpop.trf.xlu0
          %v2692 = vpop.trf.xlu0
          %v2693 = vpop.trf.xlu0
          %v2694 = vpop.trf.xlu0
          %v2695 = vpop.trf.xlu0
          %v2696 = vpop.trf.xlu0
          %v2697 = vpop.trf.xlu0
          %v2698 = vpop.trf.xlu0
          %v2699 = vpop.trf.xlu0
          %v2700 = vpop.trf.xlu0
          %v2701 = vpop.trf.xlu0
          %v2702 = vpop.trf.xlu0
          %v2703 = vpop.trf.xlu0
          %v2704 = vpop.trf.xlu0
          %2705 = vxpose.xlu0.b32.start [1/16] %v2604, 128
          %2706 = vxpose.xlu0.b32.cont [2/16] 0.0, 128
          %2707 = vxpose.xlu0.b32.cont [3/16] 0.0, 128
          %2708 = vxpose.xlu0.b32.cont [4/16] 0.0, 128
          %2709 = vxpose.xlu0.b32.cont [5/16] 0.0, 128
          %2710 = vxpose.xlu0.b32.cont [6/16] 0.0, 128
          %2711 = vxpose.xlu0.b32.cont [7/16] 0.0, 128
          %2712 = vxpose.xlu0.b32.cont [8/16] 0.0, 128
          %2713 = vxpose.xlu0.b32.cont [9/16] 0.0, 128
          %2714 = vxpose.xlu0.b32.cont [10/16] 0.0, 128
          %2715 = vxpose.xlu0.b32.cont [11/16] 0.0, 128
          %2716 = vxpose.xlu0.b32.cont [12/16] 0.0, 128
          %2717 = vxpose.xlu0.b32.cont [13/16] 0.0, 128
          %2718 = vxpose.xlu0.b32.cont [14/16] 0.0, 128
          %2719 = vxpose.xlu0.b32.cont [15/16] 0.0, 128
          %2720 = vxpose.xlu0.b32.end [16/16] 0.0, 128
          %v2721 = vpop.trf.xlu0
          %v2722 = vpop.trf.xlu0
          %v2723 = vpop.trf.xlu0
          %v2724 = vpop.trf.xlu0
          %v2725 = vpop.trf.xlu0
          %v2726 = vpop.trf.xlu0
          %v2727 = vpop.trf.xlu0
          %v2728 = vpop.trf.xlu0
          %v2729 = vpop.trf.xlu0
          %v2730 = vpop.trf.xlu0
          %v2731 = vpop.trf.xlu0
          %v2732 = vpop.trf.xlu0
          %v2733 = vpop.trf.xlu0
          %v2734 = vpop.trf.xlu0
          %v2735 = vpop.trf.xlu0
          %v2736 = vpop.trf.xlu0
          %2741 = vrot.lane.b32.xlu0 %v2625, 8
          %v2742 = vpop.permute.xlu0 %2741
          %2743 = vrot.lane.b32.xlu0 %v2657, 8
          %v2744 = vpop.permute.xlu0 %2743
          %2745 = vrot.lane.b32.xlu0 %v2689, 8
          %v2746 = vpop.permute.xlu0 %2745
          %2747 = vrot.lane.b32.xlu0 %v2721, 8
          %v2748 = vpop.permute.xlu0 %2747
          %vm2753 = vcmask 130112
          %2754 = vst.msk [vmem:[%s154 + $0x10] sm:$0xff] %vm2753, %v2742
          %2755 = vst.msk [vmem:[%s154 + $0x30] sm:$0xff] %vm2753, %v2744
          %2756 = vst.msk [vmem:[%s154 + $0x50] sm:$0xff] %vm2753, %v2746
          %2757 = vst.msk [vmem:[%s154 + $0x70] sm:$0xff] %vm2753, %v2748
          %v2758 = vld [vmem:[%s135 + $0x10] sm:$0xff]
          %v2759 = vld [vmem:[%s135 + $0x30] sm:$0xff]
          %v2760 = vld [vmem:[%s135 + $0x50] sm:$0xff]
          %v2761 = vld [vmem:[%s135 + $0x70] sm:$0xff]
          %2766 = vrot.lane.b32.xlu0 %v2758, 104
          %v2767 = vpop.permute.xlu0 %2766
          %2768 = vrot.lane.b32.xlu0 %v2759, 104
          %v2769 = vpop.permute.xlu0 %2768
          %2770 = vrot.lane.b32.xlu0 %v2760, 104
          %v2771 = vpop.permute.xlu0 %2770
          %2772 = vrot.lane.b32.xlu0 %v2761, 104
          %v2773 = vpop.permute.xlu0 %2772
          %2778 = vxpose.xlu0.b32.start [1/16] %v2767, 128
          %2779 = vxpose.xlu0.b32.cont [2/16] 0.0, 128
          %2780 = vxpose.xlu0.b32.cont [3/16] 0.0, 128
          %2781 = vxpose.xlu0.b32.cont [4/16] 0.0, 128
          %2782 = vxpose.xlu0.b32.cont [5/16] 0.0, 128
          %2783 = vxpose.xlu0.b32.cont [6/16] 0.0, 128
          %2784 = vxpose.xlu0.b32.cont [7/16] 0.0, 128
          %2785 = vxpose.xlu0.b32.cont [8/16] 0.0, 128
          %2786 = vxpose.xlu0.b32.cont [9/16] 0.0, 128
          %2787 = vxpose.xlu0.b32.cont [10/16] 0.0, 128
          %2788 = vxpose.xlu0.b32.cont [11/16] 0.0, 128
          %2789 = vxpose.xlu0.b32.cont [12/16] 0.0, 128
          %2790 = vxpose.xlu0.b32.cont [13/16] 0.0, 128
          %2791 = vxpose.xlu0.b32.cont [14/16] 0.0, 128
          %2792 = vxpose.xlu0.b32.cont [15/16] 0.0, 128
          %2793 = vxpose.xlu0.b32.end [16/16] 0.0, 128
          %v2794 = vpop.trf.xlu0
          %v2795 = vpop.trf.xlu0
          %v2796 = vpop.trf.xlu0
          %v2797 = vpop.trf.xlu0
          %v2798 = vpop.trf.xlu0
          %v2799 = vpop.trf.xlu0
          %v2800 = vpop.trf.xlu0
          %v2801 = vpop.trf.xlu0
          %v2802 = vpop.trf.xlu0
          %v2803 = vpop.trf.xlu0
          %v2804 = vpop.trf.xlu0
          %v2805 = vpop.trf.xlu0
          %v2806 = vpop.trf.xlu0
          %v2807 = vpop.trf.xlu0
          %v2808 = vpop.trf.xlu0
          %v2809 = vpop.trf.xlu0
          %2810 = vxpose.xlu0.b32.start [1/16] %v2769, 128
          %2811 = vxpose.xlu0.b32.cont [2/16] 0.0, 128
          %2812 = vxpose.xlu0.b32.cont [3/16] 0.0, 128
          %2813 = vxpose.xlu0.b32.cont [4/16] 0.0, 128
          %2814 = vxpose.xlu0.b32.cont [5/16] 0.0, 128
          %2815 = vxpose.xlu0.b32.cont [6/16] 0.0, 128
          %2816 = vxpose.xlu0.b32.cont [7/16] 0.0, 128
          %2817 = vxpose.xlu0.b32.cont [8/16] 0.0, 128
          %2818 = vxpose.xlu0.b32.cont [9/16] 0.0, 128
          %2819 = vxpose.xlu0.b32.cont [10/16] 0.0, 128
          %2820 = vxpose.xlu0.b32.cont [11/16] 0.0, 128
          %2821 = vxpose.xlu0.b32.cont [12/16] 0.0, 128
          %2822 = vxpose.xlu0.b32.cont [13/16] 0.0, 128
          %2823 = vxpose.xlu0.b32.cont [14/16] 0.0, 128
          %2824 = vxpose.xlu0.b32.cont [15/16] 0.0, 128
          %2825 = vxpose.xlu0.b32.end [16/16] 0.0, 128
          %v2826 = vpop.trf.xlu0
          %v2827 = vpop.trf.xlu0
          %v2828 = vpop.trf.xlu0
          %v2829 = vpop.trf.xlu0
          %v2830 = vpop.trf.xlu0
          %v2831 = vpop.trf.xlu0
          %v2832 = vpop.trf.xlu0
          %v2833 = vpop.trf.xlu0
          %v2834 = vpop.trf.xlu0
          %v2835 = vpop.trf.xlu0
          %v2836 = vpop.trf.xlu0
          %v2837 = vpop.trf.xlu0
          %v2838 = vpop.trf.xlu0
          %v2839 = vpop.trf.xlu0
          %v2840 = vpop.trf.xlu0
          %v2841 = vpop.trf.xlu0
          %2842 = vxpose.xlu0.b32.start [1/16] %v2771, 128
          %2843 = vxpose.xlu0.b32.cont [2/16] 0.0, 128
          %2844 = vxpose.xlu0.b32.cont [3/16] 0.0, 128
          %2845 = vxpose.xlu0.b32.cont [4/16] 0.0, 128
          %2846 = vxpose.xlu0.b32.cont [5/16] 0.0, 128
          %2847 = vxpose.xlu0.b32.cont [6/16] 0.0, 128
          %2848 = vxpose.xlu0.b32.cont [7/16] 0.0, 128
          %2849 = vxpose.xlu0.b32.cont [8/16] 0.0, 128
          %2850 = vxpose.xlu0.b32.cont [9/16] 0.0, 128
          %2851 = vxpose.xlu0.b32.cont [10/16] 0.0, 128
          %2852 = vxpose.xlu0.b32.cont [11/16] 0.0, 128
          %2853 = vxpose.xlu0.b32.cont [12/16] 0.0, 128
          %2854 = vxpose.xlu0.b32.cont [13/16] 0.0, 128
          %2855 = vxpose.xlu0.b32.cont [14/16] 0.0, 128
          %2856 = vxpose.xlu0.b32.cont [15/16] 0.0, 128
          %2857 = vxpose.xlu0.b32.end [16/16] 0.0, 128
          %v2858 = vpop.trf.xlu0
          %v2859 = vpop.trf.xlu0
          %v2860 = vpop.trf.xlu0
          %v2861 = vpop.trf.xlu0
          %v2862 = vpop.trf.xlu0
          %v2863 = vpop.trf.xlu0
          %v2864 = vpop.trf.xlu0
          %v2865 = vpop.trf.xlu0
          %v2866 = vpop.trf.xlu0
          %v2867 = vpop.trf.xlu0
          %v2868 = vpop.trf.xlu0
          %v2869 = vpop.trf.xlu0
          %v2870 = vpop.trf.xlu0
          %v2871 = vpop.trf.xlu0
          %v2872 = vpop.trf.xlu0
          %v2873 = vpop.trf.xlu0
          %2874 = vxpose.xlu0.b32.start [1/16] %v2773, 128
          %2875 = vxpose.xlu0.b32.cont [2/16] 0.0, 128
          %2876 = vxpose.xlu0.b32.cont [3/16] 0.0, 128
          %2877 = vxpose.xlu0.b32.cont [4/16] 0.0, 128
          %2878 = vxpose.xlu0.b32.cont [5/16] 0.0, 128
          %2879 = vxpose.xlu0.b32.cont [6/16] 0.0, 128
          %2880 = vxpose.xlu0.b32.cont [7/16] 0.0, 128
          %2881 = vxpose.xlu0.b32.cont [8/16] 0.0, 128
          %2882 = vxpose.xlu0.b32.cont [9/16] 0.0, 128
          %2883 = vxpose.xlu0.b32.cont [10/16] 0.0, 128
          %2884 = vxpose.xlu0.b32.cont [11/16] 0.0, 128
          %2885 = vxpose.xlu0.b32.cont [12/16] 0.0, 128
          %2886 = vxpose.xlu0.b32.cont [13/16] 0.0, 128
          %2887 = vxpose.xlu0.b32.cont [14/16] 0.0, 128
          %2888 = vxpose.xlu0.b32.cont [15/16] 0.0, 128
          %2889 = vxpose.xlu0.b32.end [16/16] 0.0, 128
          %v2890 = vpop.trf.xlu0
          %v2891 = vpop.trf.xlu0
          %v2892 = vpop.trf.xlu0
          %v2893 = vpop.trf.xlu0
          %v2894 = vpop.trf.xlu0
          %v2895 = vpop.trf.xlu0
          %v2896 = vpop.trf.xlu0
          %v2897 = vpop.trf.xlu0
          %v2898 = vpop.trf.xlu0
          %v2899 = vpop.trf.xlu0
          %v2900 = vpop.trf.xlu0
          %v2901 = vpop.trf.xlu0
          %v2902 = vpop.trf.xlu0
          %v2903 = vpop.trf.xlu0
          %v2904 = vpop.trf.xlu0
          %v2905 = vpop.trf.xlu0
          %2910 = vrot.lane.b32.xlu0 %v2794, 24
          %v2911 = vpop.permute.xlu0 %2910
          %2912 = vrot.lane.b32.xlu0 %v2826, 24
          %v2913 = vpop.permute.xlu0 %2912
          %2914 = vrot.lane.b32.xlu0 %v2858, 24
          %v2915 = vpop.permute.xlu0 %2914
          %2916 = vrot.lane.b32.xlu0 %v2890, 24
          %v2917 = vpop.permute.xlu0 %2916
          %vm2922 = vcmask 261312
          %2923 = vst.msk [vmem:[%s154 + $0x10] sm:$0xff] %vm2922, %v2911
          %2924 = vst.msk [vmem:[%s154 + $0x30] sm:$0xff] %vm2922, %v2913
          %2925 = vst.msk [vmem:[%s154 + $0x50] sm:$0xff] %vm2922, %v2915
          %2926 = vst.msk [vmem:[%s154 + $0x70] sm:$0xff] %vm2922, %v2917
        $region48: #{tpu_custom_call.1} parent=23 // pred_fallthru
          _
        // Predicated region
        $region49: #{tpu_custom_call.1} parent=23 // pred_check
          %p2927 = pneg %p2439
        $region50: #{tpu_custom_call.1} parent=23 // pred_check_branch
          %2929 = sbr.rel (%p2927) target = $region52
        $region51: #{tpu_custom_call.1} parent=23 // pred_region
          %v2930 = vld [vmem:[%s135 + $0x10] sm:$0xff]
          %v2931 = vld [vmem:[%s135 + $0x30] sm:$0xff]
          %v2932 = vld [vmem:[%s135 + $0x50] sm:$0xff]
          %v2933 = vld [vmem:[%s135 + $0x70] sm:$0xff]
          %2934 = vxpose.xlu0.b32.start [1/16] %v2930, 128
          %2935 = vxpose.xlu0.b32.cont [2/16] 0.0, 128
          %2936 = vxpose.xlu0.b32.cont [3/16] 0.0, 128
          %2937 = vxpose.xlu0.b32.cont [4/16] 0.0, 128
          %2938 = vxpose.xlu0.b32.cont [5/16] 0.0, 128
          %2939 = vxpose.xlu0.b32.cont [6/16] 0.0, 128
          %2940 = vxpose.xlu0.b32.cont [7/16] 0.0, 128
          %2941 = vxpose.xlu0.b32.cont [8/16] 0.0, 128
          %2942 = vxpose.xlu0.b32.cont [9/16] 0.0, 128
          %2943 = vxpose.xlu0.b32.cont [10/16] 0.0, 128
          %2944 = vxpose.xlu0.b32.cont [11/16] 0.0, 128
          %2945 = vxpose.xlu0.b32.cont [12/16] 0.0, 128
          %2946 = vxpose.xlu0.b32.cont [13/16] 0.0, 128
          %2947 = vxpose.xlu0.b32.cont [14/16] 0.0, 128
          %2948 = vxpose.xlu0.b32.cont [15/16] 0.0, 128
          %2949 = vxpose.xlu0.b32.end [16/16] 0.0, 128
          %v2950 = vpop.trf.xlu0
          %v2951 = vpop.trf.xlu0
          %v2952 = vpop.trf.xlu0
          %v2953 = vpop.trf.xlu0
          %v2954 = vpop.trf.xlu0
          %v2955 = vpop.trf.xlu0
          %v2956 = vpop.trf.xlu0
          %v2957 = vpop.trf.xlu0
          %v2958 = vpop.trf.xlu0
          %v2959 = vpop.trf.xlu0
          %v2960 = vpop.trf.xlu0
          %v2961 = vpop.trf.xlu0
          %v2962 = vpop.trf.xlu0
          %v2963 = vpop.trf.xlu0
          %v2964 = vpop.trf.xlu0
          %v2965 = vpop.trf.xlu0
          %2966 = vxpose.xlu0.b32.start [1/16] %v2931, 128
          %2967 = vxpose.xlu0.b32.cont [2/16] 0.0, 128
          %2968 = vxpose.xlu0.b32.cont [3/16] 0.0, 128
          %2969 = vxpose.xlu0.b32.cont [4/16] 0.0, 128
          %2970 = vxpose.xlu0.b32.cont [5/16] 0.0, 128
          %2971 = vxpose.xlu0.b32.cont [6/16] 0.0, 128
          %2972 = vxpose.xlu0.b32.cont [7/16] 0.0, 128
          %2973 = vxpose.xlu0.b32.cont [8/16] 0.0, 128
          %2974 = vxpose.xlu0.b32.cont [9/16] 0.0, 128
          %2975 = vxpose.xlu0.b32.cont [10/16] 0.0, 128
          %2976 = vxpose.xlu0.b32.cont [11/16] 0.0, 128
          %2977 = vxpose.xlu0.b32.cont [12/16] 0.0, 128
          %2978 = vxpose.xlu0.b32.cont [13/16] 0.0, 128
          %2979 = vxpose.xlu0.b32.cont [14/16] 0.0, 128
          %2980 = vxpose.xlu0.b32.cont [15/16] 0.0, 128
          %2981 = vxpose.xlu0.b32.end [16/16] 0.0, 128
          %v2982 = vpop.trf.xlu0
          %v2983 = vpop.trf.xlu0
          %v2984 = vpop.trf.xlu0
          %v2985 = vpop.trf.xlu0
          %v2986 = vpop.trf.xlu0
          %v2987 = vpop.trf.xlu0
          %v2988 = vpop.trf.xlu0
          %v2989 = vpop.trf.xlu0
          %v2990 = vpop.trf.xlu0
          %v2991 = vpop.trf.xlu0
          %v2992 = vpop.trf.xlu0
          %v2993 = vpop.trf.xlu0
          %v2994 = vpop.trf.xlu0
          %v2995 = vpop.trf.xlu0
          %v2996 = vpop.trf.xlu0
          %v2997 = vpop.trf.xlu0
          %2998 = vxpose.xlu0.b32.start [1/16] %v2932, 128
          %2999 = vxpose.xlu0.b32.cont [2/16] 0.0, 128
          %3000 = vxpose.xlu0.b32.cont [3/16] 0.0, 128
          %3001 = vxpose.xlu0.b32.cont [4/16] 0.0, 128
          %3002 = vxpose.xlu0.b32.cont [5/16] 0.0, 128
          %3003 = vxpose.xlu0.b32.cont [6/16] 0.0, 128
          %3004 = vxpose.xlu0.b32.cont [7/16] 0.0, 128
          %3005 = vxpose.xlu0.b32.cont [8/16] 0.0, 128
          %3006 = vxpose.xlu0.b32.cont [9/16] 0.0, 128
          %3007 = vxpose.xlu0.b32.cont [10/16] 0.0, 128
          %3008 = vxpose.xlu0.b32.cont [11/16] 0.0, 128
          %3009 = vxpose.xlu0.b32.cont [12/16] 0.0, 128
          %3010 = vxpose.xlu0.b32.cont [13/16] 0.0, 128
          %3011 = vxpose.xlu0.b32.cont [14/16] 0.0, 128
          %3012 = vxpose.xlu0.b32.cont [15/16] 0.0, 128
          %3013 = vxpose.xlu0.b32.end [16/16] 0.0, 128
          %v3014 = vpop.trf.xlu0
          %v3015 = vpop.trf.xlu0
          %v3016 = vpop.trf.xlu0
          %v3017 = vpop.trf.xlu0
          %v3018 = vpop.trf.xlu0
          %v3019 = vpop.trf.xlu0
          %v3020 = vpop.trf.xlu0
          %v3021 = vpop.trf.xlu0
          %v3022 = vpop.trf.xlu0
          %v3023 = vpop.trf.xlu0
          %v3024 = vpop.trf.xlu0
          %v3025 = vpop.trf.xlu0
          %v3026 = vpop.trf.xlu0
          %v3027 = vpop.trf.xlu0
          %v3028 = vpop.trf.xlu0
          %v3029 = vpop.trf.xlu0
          %3030 = vxpose.xlu0.b32.start [1/16] %v2933, 128
          %3031 = vxpose.xlu0.b32.cont [2/16] 0.0, 128
          %3032 = vxpose.xlu0.b32.cont [3/16] 0.0, 128
          %3033 = vxpose.xlu0.b32.cont [4/16] 0.0, 128
          %3034 = vxpose.xlu0.b32.cont [5/16] 0.0, 128
          %3035 = vxpose.xlu0.b32.cont [6/16] 0.0, 128
          %3036 = vxpose.xlu0.b32.cont [7/16] 0.0, 128
          %3037 = vxpose.xlu0.b32.cont [8/16] 0.0, 128
          %3038 = vxpose.xlu0.b32.cont [9/16] 0.0, 128
          %3039 = vxpose.xlu0.b32.cont [10/16] 0.0, 128
          %3040 = vxpose.xlu0.b32.cont [11/16] 0.0, 128
          %3041 = vxpose.xlu0.b32.cont [12/16] 0.0, 128
          %3042 = vxpose.xlu0.b32.cont [13/16] 0.0, 128
          %3043 = vxpose.xlu0.b32.cont [14/16] 0.0, 128
          %3044 = vxpose.xlu0.b32.cont [15/16] 0.0, 128
          %3045 = vxpose.xlu0.b32.end [16/16] 0.0, 128
          %v3046 = vpop.trf.xlu0
          %v3047 = vpop.trf.xlu0
          %v3048 = vpop.trf.xlu0
          %v3049 = vpop.trf.xlu0
          %v3050 = vpop.trf.xlu0
          %v3051 = vpop.trf.xlu0
          %v3052 = vpop.trf.xlu0
          %v3053 = vpop.trf.xlu0
          %v3054 = vpop.trf.xlu0
          %v3055 = vpop.trf.xlu0
          %v3056 = vpop.trf.xlu0
          %v3057 = vpop.trf.xlu0
          %v3058 = vpop.trf.xlu0
          %v3059 = vpop.trf.xlu0
          %v3060 = vpop.trf.xlu0
          %v3061 = vpop.trf.xlu0
          %vm3062 = vcmask 64512
          %3063 = vst.msk [vmem:[%s154 + $0x10] sm:$0xff] %vm3062, %v2950
          %3064 = vst.msk [vmem:[%s154 + $0x30] sm:$0xff] %vm3062, %v2982
          %3065 = vst.msk [vmem:[%s154 + $0x50] sm:$0xff] %vm3062, %v3014
          %3066 = vst.msk [vmem:[%s154 + $0x70] sm:$0xff] %vm3062, %v3046
          %v3067 = vld [vmem:[%s135 + $0x10] sm:$0xff]
          %v3068 = vld [vmem:[%s135 + $0x30] sm:$0xff]
          %v3069 = vld [vmem:[%s135 + $0x50] sm:$0xff]
          %v3070 = vld [vmem:[%s135 + $0x70] sm:$0xff]
          %3075 = vrot.lane.b32.xlu0 %v3067, 120
          %v3076 = vpop.permute.xlu0 %3075
          %3077 = vrot.lane.b32.xlu0 %v3068, 120
          %v3078 = vpop.permute.xlu0 %3077
          %3079 = vrot.lane.b32.xlu0 %v3069, 120
          %v3080 = vpop.permute.xlu0 %3079
          %3081 = vrot.lane.b32.xlu0 %v3070, 120
          %v3082 = vpop.permute.xlu0 %3081
          %3087 = vxpose.xlu0.b32.start [1/16] %v3076, 128
          %3088 = vxpose.xlu0.b32.cont [2/16] 0.0, 128
          %3089 = vxpose.xlu0.b32.cont [3/16] 0.0, 128
          %3090 = vxpose.xlu0.b32.cont [4/16] 0.0, 128
          %3091 = vxpose.xlu0.b32.cont [5/16] 0.0, 128
          %3092 = vxpose.xlu0.b32.cont [6/16] 0.0, 128
          %3093 = vxpose.xlu0.b32.cont [7/16] 0.0, 128
          %3094 = vxpose.xlu0.b32.cont [8/16] 0.0, 128
          %3095 = vxpose.xlu0.b32.cont [9/16] 0.0, 128
          %3096 = vxpose.xlu0.b32.cont [10/16] 0.0, 128
          %3097 = vxpose.xlu0.b32.cont [11/16] 0.0, 128
          %3098 = vxpose.xlu0.b32.cont [12/16] 0.0, 128
          %3099 = vxpose.xlu0.b32.cont [13/16] 0.0, 128
          %3100 = vxpose.xlu0.b32.cont [14/16] 0.0, 128
          %3101 = vxpose.xlu0.b32.cont [15/16] 0.0, 128
          %3102 = vxpose.xlu0.b32.end [16/16] 0.0, 128
          %v3103 = vpop.trf.xlu0
          %v3104 = vpop.trf.xlu0
          %v3105 = vpop.trf.xlu0
          %v3106 = vpop.trf.xlu0
          %v3107 = vpop.trf.xlu0
          %v3108 = vpop.trf.xlu0
          %v3109 = vpop.trf.xlu0
          %v3110 = vpop.trf.xlu0
          %v3111 = vpop.trf.xlu0
          %v3112 = vpop.trf.xlu0
          %v3113 = vpop.trf.xlu0
          %v3114 = vpop.trf.xlu0
          %v3115 = vpop.trf.xlu0
          %v3116 = vpop.trf.xlu0
          %v3117 = vpop.trf.xlu0
          %v3118 = vpop.trf.xlu0
          %3119 = vxpose.xlu0.b32.start [1/16] %v3078, 128
          %3120 = vxpose.xlu0.b32.cont [2/16] 0.0, 128
          %3121 = vxpose.xlu0.b32.cont [3/16] 0.0, 128
          %3122 = vxpose.xlu0.b32.cont [4/16] 0.0, 128
          %3123 = vxpose.xlu0.b32.cont [5/16] 0.0, 128
          %3124 = vxpose.xlu0.b32.cont [6/16] 0.0, 128
          %3125 = vxpose.xlu0.b32.cont [7/16] 0.0, 128
          %3126 = vxpose.xlu0.b32.cont [8/16] 0.0, 128
          %3127 = vxpose.xlu0.b32.cont [9/16] 0.0, 128
          %3128 = vxpose.xlu0.b32.cont [10/16] 0.0, 128
          %3129 = vxpose.xlu0.b32.cont [11/16] 0.0, 128
          %3130 = vxpose.xlu0.b32.cont [12/16] 0.0, 128
          %3131 = vxpose.xlu0.b32.cont [13/16] 0.0, 128
          %3132 = vxpose.xlu0.b32.cont [14/16] 0.0, 128
          %3133 = vxpose.xlu0.b32.cont [15/16] 0.0, 128
          %3134 = vxpose.xlu0.b32.end [16/16] 0.0, 128
          %v3135 = vpop.trf.xlu0
          %v3136 = vpop.trf.xlu0
          %v3137 = vpop.trf.xlu0
          %v3138 = vpop.trf.xlu0
          %v3139 = vpop.trf.xlu0
          %v3140 = vpop.trf.xlu0
          %v3141 = vpop.trf.xlu0
          %v3142 = vpop.trf.xlu0
          %v3143 = vpop.trf.xlu0
          %v3144 = vpop.trf.xlu0
          %v3145 = vpop.trf.xlu0
          %v3146 = vpop.trf.xlu0
          %v3147 = vpop.trf.xlu0
          %v3148 = vpop.trf.xlu0
          %v3149 = vpop.trf.xlu0
          %v3150 = vpop.trf.xlu0
          %3151 = vxpose.xlu0.b32.start [1/16] %v3080, 128
          %3152 = vxpose.xlu0.b32.cont [2/16] 0.0, 128
          %3153 = vxpose.xlu0.b32.cont [3/16] 0.0, 128
          %3154 = vxpose.xlu0.b32.cont [4/16] 0.0, 128
          %3155 = vxpose.xlu0.b32.cont [5/16] 0.0, 128
          %3156 = vxpose.xlu0.b32.cont [6/16] 0.0, 128
          %3157 = vxpose.xlu0.b32.cont [7/16] 0.0, 128
          %3158 = vxpose.xlu0.b32.cont [8/16] 0.0, 128
          %3159 = vxpose.xlu0.b32.cont [9/16] 0.0, 128
          %3160 = vxpose.xlu0.b32.cont [10/16] 0.0, 128
          %3161 = vxpose.xlu0.b32.cont [11/16] 0.0, 128
          %3162 = vxpose.xlu0.b32.cont [12/16] 0.0, 128
          %3163 = vxpose.xlu0.b32.cont [13/16] 0.0, 128
          %3164 = vxpose.xlu0.b32.cont [14/16] 0.0, 128
          %3165 = vxpose.xlu0.b32.cont [15/16] 0.0, 128
          %3166 = vxpose.xlu0.b32.end [16/16] 0.0, 128
          %v3167 = vpop.trf.xlu0
          %v3168 = vpop.trf.xlu0
          %v3169 = vpop.trf.xlu0
          %v3170 = vpop.trf.xlu0
          %v3171 = vpop.trf.xlu0
          %v3172 = vpop.trf.xlu0
          %v3173 = vpop.trf.xlu0
          %v3174 = vpop.trf.xlu0
          %v3175 = vpop.trf.xlu0
          %v3176 = vpop.trf.xlu0
          %v3177 = vpop.trf.xlu0
          %v3178 = vpop.trf.xlu0
          %v3179 = vpop.trf.xlu0
          %v3180 = vpop.trf.xlu0
          %v3181 = vpop.trf.xlu0
          %v3182 = vpop.trf.xlu0
          %3183 = vxpose.xlu0.b32.start [1/16] %v3082, 128
          %3184 = vxpose.xlu0.b32.cont [2/16] 0.0, 128
          %3185 = vxpose.xlu0.b32.cont [3/16] 0.0, 128
          %3186 = vxpose.xlu0.b32.cont [4/16] 0.0, 128
          %3187 = vxpose.xlu0.b32.cont [5/16] 0.0, 128
          %3188 = vxpose.xlu0.b32.cont [6/16] 0.0, 128
          %3189 = vxpose.xlu0.b32.cont [7/16] 0.0, 128
          %3190 = vxpose.xlu0.b32.cont [8/16] 0.0, 128
          %3191 = vxpose.xlu0.b32.cont [9/16] 0.0, 128
          %3192 = vxpose.xlu0.b32.cont [10/16] 0.0, 128
          %3193 = vxpose.xlu0.b32.cont [11/16] 0.0, 128
          %3194 = vxpose.xlu0.b32.cont [12/16] 0.0, 128
          %3195 = vxpose.xlu0.b32.cont [13/16] 0.0, 128
          %3196 = vxpose.xlu0.b32.cont [14/16] 0.0, 128
          %3197 = vxpose.xlu0.b32.cont [15/16] 0.0, 128
          %3198 = vxpose.xlu0.b32.end [16/16] 0.0, 128
          %v3199 = vpop.trf.xlu0
          %v3200 = vpop.trf.xlu0
          %v3201 = vpop.trf.xlu0
          %v3202 = vpop.trf.xlu0
          %v3203 = vpop.trf.xlu0
          %v3204 = vpop.trf.xlu0
          %v3205 = vpop.trf.xlu0
          %v3206 = vpop.trf.xlu0
          %v3207 = vpop.trf.xlu0
          %v3208 = vpop.trf.xlu0
          %v3209 = vpop.trf.xlu0
          %v3210 = vpop.trf.xlu0
          %v3211 = vpop.trf.xlu0
          %v3212 = vpop.trf.xlu0
          %v3213 = vpop.trf.xlu0
          %v3214 = vpop.trf.xlu0
          %3219 = vrot.lane.b32.xlu0 %v3103, 8
          %v3220 = vpop.permute.xlu0 %3219
          %3221 = vrot.lane.b32.xlu0 %v3135, 8
          %v3222 = vpop.permute.xlu0 %3221
          %3223 = vrot.lane.b32.xlu0 %v3167, 8
          %v3224 = vpop.permute.xlu0 %3223
          %3225 = vrot.lane.b32.xlu0 %v3199, 8
          %v3226 = vpop.permute.xlu0 %3225
          %vm3231 = vcmask 130112
          %3232 = vst.msk [vmem:[%s154 + $0x10] sm:$0xff] %vm3231, %v3220
          %3233 = vst.msk [vmem:[%s154 + $0x30] sm:$0xff] %vm3231, %v3222
          %3234 = vst.msk [vmem:[%s154 + $0x50] sm:$0xff] %vm3231, %v3224
          %3235 = vst.msk [vmem:[%s154 + $0x70] sm:$0xff] %vm3231, %v3226
          %v3236 = vld [vmem:[%s135 + $0x10] sm:$0xff]
          %v3237 = vld [vmem:[%s135 + $0x30] sm:$0xff]
          %v3238 = vld [vmem:[%s135 + $0x50] sm:$0xff]
          %v3239 = vld [vmem:[%s135 + $0x70] sm:$0xff]
          %3244 = vrot.lane.b32.xlu0 %v3236, 112
          %v3245 = vpop.permute.xlu0 %3244
          %3246 = vrot.lane.b32.xlu0 %v3237, 112
          %v3247 = vpop.permute.xlu0 %3246
          %3248 = vrot.lane.b32.xlu0 %v3238, 112
          %v3249 = vpop.permute.xlu0 %3248
          %3250 = vrot.lane.b32.xlu0 %v3239, 112
          %v3251 = vpop.permute.xlu0 %3250
          %3256 = vxpose.xlu0.b32.start [1/16] %v3245, 128
          %3257 = vxpose.xlu0.b32.cont [2/16] 0.0, 128
          %3258 = vxpose.xlu0.b32.cont [3/16] 0.0, 128
          %3259 = vxpose.xlu0.b32.cont [4/16] 0.0, 128
          %3260 = vxpose.xlu0.b32.cont [5/16] 0.0, 128
          %3261 = vxpose.xlu0.b32.cont [6/16] 0.0, 128
          %3262 = vxpose.xlu0.b32.cont [7/16] 0.0, 128
          %3263 = vxpose.xlu0.b32.cont [8/16] 0.0, 128
          %3264 = vxpose.xlu0.b32.cont [9/16] 0.0, 128
          %3265 = vxpose.xlu0.b32.cont [10/16] 0.0, 128
          %3266 = vxpose.xlu0.b32.cont [11/16] 0.0, 128
          %3267 = vxpose.xlu0.b32.cont [12/16] 0.0, 128
          %3268 = vxpose.xlu0.b32.cont [13/16] 0.0, 128
          %3269 = vxpose.xlu0.b32.cont [14/16] 0.0, 128
          %3270 = vxpose.xlu0.b32.cont [15/16] 0.0, 128
          %3271 = vxpose.xlu0.b32.end [16/16] 0.0, 128
          %v3272 = vpop.trf.xlu0
          %v3273 = vpop.trf.xlu0
          %v3274 = vpop.trf.xlu0
          %v3275 = vpop.trf.xlu0
          %v3276 = vpop.trf.xlu0
          %v3277 = vpop.trf.xlu0
          %v3278 = vpop.trf.xlu0
          %v3279 = vpop.trf.xlu0
          %v3280 = vpop.trf.xlu0
          %v3281 = vpop.trf.xlu0
          %v3282 = vpop.trf.xlu0
          %v3283 = vpop.trf.xlu0
          %v3284 = vpop.trf.xlu0
          %v3285 = vpop.trf.xlu0
          %v3286 = vpop.trf.xlu0
          %v3287 = vpop.trf.xlu0
          %3288 = vxpose.xlu0.b32.start [1/16] %v3247, 128
          %3289 = vxpose.xlu0.b32.cont [2/16] 0.0, 128
          %3290 = vxpose.xlu0.b32.cont [3/16] 0.0, 128
          %3291 = vxpose.xlu0.b32.cont [4/16] 0.0, 128
          %3292 = vxpose.xlu0.b32.cont [5/16] 0.0, 128
          %3293 = vxpose.xlu0.b32.cont [6/16] 0.0, 128
          %3294 = vxpose.xlu0.b32.cont [7/16] 0.0, 128
          %3295 = vxpose.xlu0.b32.cont [8/16] 0.0, 128
          %3296 = vxpose.xlu0.b32.cont [9/16] 0.0, 128
          %3297 = vxpose.xlu0.b32.cont [10/16] 0.0, 128
          %3298 = vxpose.xlu0.b32.cont [11/16] 0.0, 128
          %3299 = vxpose.xlu0.b32.cont [12/16] 0.0, 128
          %3300 = vxpose.xlu0.b32.cont [13/16] 0.0, 128
          %3301 = vxpose.xlu0.b32.cont [14/16] 0.0, 128
          %3302 = vxpose.xlu0.b32.cont [15/16] 0.0, 128
          %3303 = vxpose.xlu0.b32.end [16/16] 0.0, 128
          %v3304 = vpop.trf.xlu0
          %v3305 = vpop.trf.xlu0
          %v3306 = vpop.trf.xlu0
          %v3307 = vpop.trf.xlu0
          %v3308 = vpop.trf.xlu0
          %v3309 = vpop.trf.xlu0
          %v3310 = vpop.trf.xlu0
          %v3311 = vpop.trf.xlu0
          %v3312 = vpop.trf.xlu0
          %v3313 = vpop.trf.xlu0
          %v3314 = vpop.trf.xlu0
          %v3315 = vpop.trf.xlu0
          %v3316 = vpop.trf.xlu0
          %v3317 = vpop.trf.xlu0
          %v3318 = vpop.trf.xlu0
          %v3319 = vpop.trf.xlu0
          %3320 = vxpose.xlu0.b32.start [1/16] %v3249, 128
          %3321 = vxpose.xlu0.b32.cont [2/16] 0.0, 128
          %3322 = vxpose.xlu0.b32.cont [3/16] 0.0, 128
          %3323 = vxpose.xlu0.b32.cont [4/16] 0.0, 128
          %3324 = vxpose.xlu0.b32.cont [5/16] 0.0, 128
          %3325 = vxpose.xlu0.b32.cont [6/16] 0.0, 128
          %3326 = vxpose.xlu0.b32.cont [7/16] 0.0, 128
          %3327 = vxpose.xlu0.b32.cont [8/16] 0.0, 128
          %3328 = vxpose.xlu0.b32.cont [9/16] 0.0, 128
          %3329 = vxpose.xlu0.b32.cont [10/16] 0.0, 128
          %3330 = vxpose.xlu0.b32.cont [11/16] 0.0, 128
          %3331 = vxpose.xlu0.b32.cont [12/16] 0.0, 128
          %3332 = vxpose.xlu0.b32.cont [13/16] 0.0, 128
          %3333 = vxpose.xlu0.b32.cont [14/16] 0.0, 128
          %3334 = vxpose.xlu0.b32.cont [15/16] 0.0, 128
          %3335 = vxpose.xlu0.b32.end [16/16] 0.0, 128
          %v3336 = vpop.trf.xlu0
          %v3337 = vpop.trf.xlu0
          %v3338 = vpop.trf.xlu0
          %v3339 = vpop.trf.xlu0
          %v3340 = vpop.trf.xlu0
          %v3341 = vpop.trf.xlu0
          %v3342 = vpop.trf.xlu0
          %v3343 = vpop.trf.xlu0
          %v3344 = vpop.trf.xlu0
          %v3345 = vpop.trf.xlu0
          %v3346 = vpop.trf.xlu0
          %v3347 = vpop.trf.xlu0
          %v3348 = vpop.trf.xlu0
          %v3349 = vpop.trf.xlu0
          %v3350 = vpop.trf.xlu0
          %v3351 = vpop.trf.xlu0
          %3352 = vxpose.xlu0.b32.start [1/16] %v3251, 128
          %3353 = vxpose.xlu0.b32.cont [2/16] 0.0, 128
          %3354 = vxpose.xlu0.b32.cont [3/16] 0.0, 128
          %3355 = vxpose.xlu0.b32.cont [4/16] 0.0, 128
          %3356 = vxpose.xlu0.b32.cont [5/16] 0.0, 128
          %3357 = vxpose.xlu0.b32.cont [6/16] 0.0, 128
          %3358 = vxpose.xlu0.b32.cont [7/16] 0.0, 128
          %3359 = vxpose.xlu0.b32.cont [8/16] 0.0, 128
          %3360 = vxpose.xlu0.b32.cont [9/16] 0.0, 128
          %3361 = vxpose.xlu0.b32.cont [10/16] 0.0, 128
          %3362 = vxpose.xlu0.b32.cont [11/16] 0.0, 128
          %3363 = vxpose.xlu0.b32.cont [12/16] 0.0, 128
          %3364 = vxpose.xlu0.b32.cont [13/16] 0.0, 128
          %3365 = vxpose.xlu0.b32.cont [14/16] 0.0, 128
          %3366 = vxpose.xlu0.b32.cont [15/16] 0.0, 128
          %3367 = vxpose.xlu0.b32.end [16/16] 0.0, 128
          %v3368 = vpop.trf.xlu0
          %v3369 = vpop.trf.xlu0
          %v3370 = vpop.trf.xlu0
          %v3371 = vpop.trf.xlu0
          %v3372 = vpop.trf.xlu0
          %v3373 = vpop.trf.xlu0
          %v3374 = vpop.trf.xlu0
          %v3375 = vpop.trf.xlu0
          %v3376 = vpop.trf.xlu0
          %v3377 = vpop.trf.xlu0
          %v3378 = vpop.trf.xlu0
          %v3379 = vpop.trf.xlu0
          %v3380 = vpop.trf.xlu0
          %v3381 = vpop.trf.xlu0
          %v3382 = vpop.trf.xlu0
          %v3383 = vpop.trf.xlu0
          %3388 = vrot.lane.b32.xlu0 %v3272, 16
          %v3389 = vpop.permute.xlu0 %3388
          %3390 = vrot.lane.b32.xlu0 %v3304, 16
          %v3391 = vpop.permute.xlu0 %3390
          %3392 = vrot.lane.b32.xlu0 %v3336, 16
          %v3393 = vpop.permute.xlu0 %3392
          %3394 = vrot.lane.b32.xlu0 %v3368, 16
          %v3395 = vpop.permute.xlu0 %3394
          %vm3400 = vcmask 195712
          %3401 = vst.msk [vmem:[%s154 + $0x10] sm:$0xff] %vm3400, %v3389
          %3402 = vst.msk [vmem:[%s154 + $0x30] sm:$0xff] %vm3400, %v3391
          %3403 = vst.msk [vmem:[%s154 + $0x50] sm:$0xff] %vm3400, %v3393
          %3404 = vst.msk [vmem:[%s154 + $0x70] sm:$0xff] %vm3400, %v3395
          %v3405 = vld [vmem:[%s135 + $0x10] sm:$0xff]
          %v3406 = vld [vmem:[%s135 + $0x30] sm:$0xff]
          %v3407 = vld [vmem:[%s135 + $0x50] sm:$0xff]
          %v3408 = vld [vmem:[%s135 + $0x70] sm:$0xff]
          %3413 = vrot.lane.b32.xlu0 %v3405, 104
          %v3414 = vpop.permute.xlu0 %3413
          %3415 = vrot.lane.b32.xlu0 %v3406, 104
          %v3416 = vpop.permute.xlu0 %3415
          %3417 = vrot.lane.b32.xlu0 %v3407, 104
          %v3418 = vpop.permute.xlu0 %3417
          %3419 = vrot.lane.b32.xlu0 %v3408, 104
          %v3420 = vpop.permute.xlu0 %3419
          %3425 = vxpose.xlu0.b32.start [1/16] %v3414, 128
          %3426 = vxpose.xlu0.b32.cont [2/16] 0.0, 128
          %3427 = vxpose.xlu0.b32.cont [3/16] 0.0, 128
          %3428 = vxpose.xlu0.b32.cont [4/16] 0.0, 128
          %3429 = vxpose.xlu0.b32.cont [5/16] 0.0, 128
          %3430 = vxpose.xlu0.b32.cont [6/16] 0.0, 128
          %3431 = vxpose.xlu0.b32.cont [7/16] 0.0, 128
          %3432 = vxpose.xlu0.b32.cont [8/16] 0.0, 128
          %3433 = vxpose.xlu0.b32.cont [9/16] 0.0, 128
          %3434 = vxpose.xlu0.b32.cont [10/16] 0.0, 128
          %3435 = vxpose.xlu0.b32.cont [11/16] 0.0, 128
          %3436 = vxpose.xlu0.b32.cont [12/16] 0.0, 128
          %3437 = vxpose.xlu0.b32.cont [13/16] 0.0, 128
          %3438 = vxpose.xlu0.b32.cont [14/16] 0.0, 128
          %3439 = vxpose.xlu0.b32.cont [15/16] 0.0, 128
          %3440 = vxpose.xlu0.b32.end [16/16] 0.0, 128
          %v3441 = vpop.trf.xlu0
          %v3442 = vpop.trf.xlu0
          %v3443 = vpop.trf.xlu0
          %v3444 = vpop.trf.xlu0
          %v3445 = vpop.trf.xlu0
          %v3446 = vpop.trf.xlu0
          %v3447 = vpop.trf.xlu0
          %v3448 = vpop.trf.xlu0
          %v3449 = vpop.trf.xlu0
          %v3450 = vpop.trf.xlu0
          %v3451 = vpop.trf.xlu0
          %v3452 = vpop.trf.xlu0
          %v3453 = vpop.trf.xlu0
          %v3454 = vpop.trf.xlu0
          %v3455 = vpop.trf.xlu0
          %v3456 = vpop.trf.xlu0
          %3457 = vxpose.xlu0.b32.start [1/16] %v3416, 128
          %3458 = vxpose.xlu0.b32.cont [2/16] 0.0, 128
          %3459 = vxpose.xlu0.b32.cont [3/16] 0.0, 128
          %3460 = vxpose.xlu0.b32.cont [4/16] 0.0, 128
          %3461 = vxpose.xlu0.b32.cont [5/16] 0.0, 128
          %3462 = vxpose.xlu0.b32.cont [6/16] 0.0, 128
          %3463 = vxpose.xlu0.b32.cont [7/16] 0.0, 128
          %3464 = vxpose.xlu0.b32.cont [8/16] 0.0, 128
          %3465 = vxpose.xlu0.b32.cont [9/16] 0.0, 128
          %3466 = vxpose.xlu0.b32.cont [10/16] 0.0, 128
          %3467 = vxpose.xlu0.b32.cont [11/16] 0.0, 128
          %3468 = vxpose.xlu0.b32.cont [12/16] 0.0, 128
          %3469 = vxpose.xlu0.b32.cont [13/16] 0.0, 128
          %3470 = vxpose.xlu0.b32.cont [14/16] 0.0, 128
          %3471 = vxpose.xlu0.b32.cont [15/16] 0.0, 128
          %3472 = vxpose.xlu0.b32.end [16/16] 0.0, 128
          %v3473 = vpop.trf.xlu0
          %v3474 = vpop.trf.xlu0
          %v3475 = vpop.trf.xlu0
          %v3476 = vpop.trf.xlu0
          %v3477 = vpop.trf.xlu0
          %v3478 = vpop.trf.xlu0
          %v3479 = vpop.trf.xlu0
          %v3480 = vpop.trf.xlu0
          %v3481 = vpop.trf.xlu0
          %v3482 = vpop.trf.xlu0
          %v3483 = vpop.trf.xlu0
          %v3484 = vpop.trf.xlu0
          %v3485 = vpop.trf.xlu0
          %v3486 = vpop.trf.xlu0
          %v3487 = vpop.trf.xlu0
          %v3488 = vpop.trf.xlu0
          %3489 = vxpose.xlu0.b32.start [1/16] %v3418, 128
          %3490 = vxpose.xlu0.b32.cont [2/16] 0.0, 128
          %3491 = vxpose.xlu0.b32.cont [3/16] 0.0, 128
          %3492 = vxpose.xlu0.b32.cont [4/16] 0.0, 128
          %3493 = vxpose.xlu0.b32.cont [5/16] 0.0, 128
          %3494 = vxpose.xlu0.b32.cont [6/16] 0.0, 128
          %3495 = vxpose.xlu0.b32.cont [7/16] 0.0, 128
          %3496 = vxpose.xlu0.b32.cont [8/16] 0.0, 128
          %3497 = vxpose.xlu0.b32.cont [9/16] 0.0, 128
          %3498 = vxpose.xlu0.b32.cont [10/16] 0.0, 128
          %3499 = vxpose.xlu0.b32.cont [11/16] 0.0, 128
          %3500 = vxpose.xlu0.b32.cont [12/16] 0.0, 128
          %3501 = vxpose.xlu0.b32.cont [13/16] 0.0, 128
          %3502 = vxpose.xlu0.b32.cont [14/16] 0.0, 128
          %3503 = vxpose.xlu0.b32.cont [15/16] 0.0, 128
          %3504 = vxpose.xlu0.b32.end [16/16] 0.0, 128
          %v3505 = vpop.trf.xlu0
          %v3506 = vpop.trf.xlu0
          %v3507 = vpop.trf.xlu0
          %v3508 = vpop.trf.xlu0
          %v3509 = vpop.trf.xlu0
          %v3510 = vpop.trf.xlu0
          %v3511 = vpop.trf.xlu0
          %v3512 = vpop.trf.xlu0
          %v3513 = vpop.trf.xlu0
          %v3514 = vpop.trf.xlu0
          %v3515 = vpop.trf.xlu0
          %v3516 = vpop.trf.xlu0
          %v3517 = vpop.trf.xlu0
          %v3518 = vpop.trf.xlu0
          %v3519 = vpop.trf.xlu0
          %v3520 = vpop.trf.xlu0
          %3521 = vxpose.xlu0.b32.start [1/16] %v3420, 128
          %3522 = vxpose.xlu0.b32.cont [2/16] 0.0, 128
          %3523 = vxpose.xlu0.b32.cont [3/16] 0.0, 128
          %3524 = vxpose.xlu0.b32.cont [4/16] 0.0, 128
          %3525 = vxpose.xlu0.b32.cont [5/16] 0.0, 128
          %3526 = vxpose.xlu0.b32.cont [6/16] 0.0, 128
          %3527 = vxpose.xlu0.b32.cont [7/16] 0.0, 128
          %3528 = vxpose.xlu0.b32.cont [8/16] 0.0, 128
          %3529 = vxpose.xlu0.b32.cont [9/16] 0.0, 128
          %3530 = vxpose.xlu0.b32.cont [10/16] 0.0, 128
          %3531 = vxpose.xlu0.b32.cont [11/16] 0.0, 128
          %3532 = vxpose.xlu0.b32.cont [12/16] 0.0, 128
          %3533 = vxpose.xlu0.b32.cont [13/16] 0.0, 128
          %3534 = vxpose.xlu0.b32.cont [14/16] 0.0, 128
          %3535 = vxpose.xlu0.b32.cont [15/16] 0.0, 128
          %3536 = vxpose.xlu0.b32.end [16/16] 0.0, 128
          %v3537 = vpop.trf.xlu0
          %v3538 = vpop.trf.xlu0
          %v3539 = vpop.trf.xlu0
          %v3540 = vpop.trf.xlu0
          %v3541 = vpop.trf.xlu0
          %v3542 = vpop.trf.xlu0
          %v3543 = vpop.trf.xlu0
          %v3544 = vpop.trf.xlu0
          %v3545 = vpop.trf.xlu0
          %v3546 = vpop.trf.xlu0
          %v3547 = vpop.trf.xlu0
          %v3548 = vpop.trf.xlu0
          %v3549 = vpop.trf.xlu0
          %v3550 = vpop.trf.xlu0
          %v3551 = vpop.trf.xlu0
          %v3552 = vpop.trf.xlu0
          %3557 = vrot.lane.b32.xlu0 %v3441, 24
          %v3558 = vpop.permute.xlu0 %3557
          %3559 = vrot.lane.b32.xlu0 %v3473, 24
          %v3560 = vpop.permute.xlu0 %3559
          %3561 = vrot.lane.b32.xlu0 %v3505, 24
          %v3562 = vpop.permute.xlu0 %3561
          %3563 = vrot.lane.b32.xlu0 %v3537, 24
          %v3564 = vpop.permute.xlu0 %3563
          %vm3569 = vcmask 261312
          %3570 = vst.msk [vmem:[%s154 + $0x10] sm:$0xff] %vm3569, %v3558
          %3571 = vst.msk [vmem:[%s154 + $0x30] sm:$0xff] %vm3569, %v3560
          %3572 = vst.msk [vmem:[%s154 + $0x50] sm:$0xff] %vm3569, %v3562
          %3573 = vst.msk [vmem:[%s154 + $0x70] sm:$0xff] %vm3569, %v3564
        $region52: #{tpu_custom_call.1} parent=23 // pred_fallthru
          _
        %s3574 = sadd.s32 %s1295, 3
        %s3575 = smul.u32 %s3574, 3
        %p3576 = scmp.gt.s32.totalorder %s3575, 4
        %p3577 = scmp.lt.s32.totalorder %s3575, 8
        %p3578 = pnand %p3576, %p3577
        %p3579 = pneg %p3578
        // Predicated region
        $region53: #{tpu_custom_call.1} parent=23 // pred_check
          _
        $region54: #{tpu_custom_call.1} parent=23 // pred_check_branch
          %3581 = sbr.rel (%p3578) target = $region56
        $region55: #{tpu_custom_call.1} parent=23 // pred_region
          %v3582 = vld [vmem:[%s135 + $0x18] sm:$0xff]
          %v3583 = vld [vmem:[%s135 + $0x38] sm:$0xff]
          %v3584 = vld [vmem:[%s135 + $0x58] sm:$0xff]
          %v3585 = vld [vmem:[%s135 + $0x78] sm:$0xff]
          %vm3586 = vcmask 195712
          %3587 = vst.msk [vmem:[%s154 + $0x18] sm:$0xff] %vm3586, %v3582
          %3588 = vst.msk [vmem:[%s154 + $0x38] sm:$0xff] %vm3586, %v3583
          %3589 = vst.msk [vmem:[%s154 + $0x58] sm:$0xff] %vm3586, %v3584
          %3590 = vst.msk [vmem:[%s154 + $0x78] sm:$0xff] %vm3586, %v3585
          %v3591 = vld [vmem:[%s135 + $0x18] sm:$0xff]
          %v3592 = vld [vmem:[%s135 + $0x38] sm:$0xff]
          %v3593 = vld [vmem:[%s135 + $0x58] sm:$0xff]
          %v3594 = vld [vmem:[%s135 + $0x78] sm:$0xff]
          %3595 = vxpose.xlu0.b32.start [1/16] %v3591, 128
          %3596 = vxpose.xlu0.b32.cont [2/16] 0.0, 128
          %3597 = vxpose.xlu0.b32.cont [3/16] 0.0, 128
          %3598 = vxpose.xlu0.b32.cont [4/16] 0.0, 128
          %3599 = vxpose.xlu0.b32.cont [5/16] 0.0, 128
          %3600 = vxpose.xlu0.b32.cont [6/16] 0.0, 128
          %3601 = vxpose.xlu0.b32.cont [7/16] 0.0, 128
          %3602 = vxpose.xlu0.b32.cont [8/16] 0.0, 128
          %3603 = vxpose.xlu0.b32.cont [9/16] 0.0, 128
          %3604 = vxpose.xlu0.b32.cont [10/16] 0.0, 128
          %3605 = vxpose.xlu0.b32.cont [11/16] 0.0, 128
          %3606 = vxpose.xlu0.b32.cont [12/16] 0.0, 128
          %3607 = vxpose.xlu0.b32.cont [13/16] 0.0, 128
          %3608 = vxpose.xlu0.b32.cont [14/16] 0.0, 128
          %3609 = vxpose.xlu0.b32.cont [15/16] 0.0, 128
          %3610 = vxpose.xlu0.b32.end [16/16] 0.0, 128
          %v3611 = vpop.trf.xlu0
          %v3612 = vpop.trf.xlu0
          %v3613 = vpop.trf.xlu0
          %v3614 = vpop.trf.xlu0
          %v3615 = vpop.trf.xlu0
          %v3616 = vpop.trf.xlu0
          %v3617 = vpop.trf.xlu0
          %v3618 = vpop.trf.xlu0
          %v3619 = vpop.trf.xlu0
          %v3620 = vpop.trf.xlu0
          %v3621 = vpop.trf.xlu0
          %v3622 = vpop.trf.xlu0
          %v3623 = vpop.trf.xlu0
          %v3624 = vpop.trf.xlu0
          %v3625 = vpop.trf.xlu0
          %v3626 = vpop.trf.xlu0
          %3627 = vxpose.xlu0.b32.start [1/16] %v3592, 128
          %3628 = vxpose.xlu0.b32.cont [2/16] 0.0, 128
          %3629 = vxpose.xlu0.b32.cont [3/16] 0.0, 128
          %3630 = vxpose.xlu0.b32.cont [4/16] 0.0, 128
          %3631 = vxpose.xlu0.b32.cont [5/16] 0.0, 128
          %3632 = vxpose.xlu0.b32.cont [6/16] 0.0, 128
          %3633 = vxpose.xlu0.b32.cont [7/16] 0.0, 128
          %3634 = vxpose.xlu0.b32.cont [8/16] 0.0, 128
          %3635 = vxpose.xlu0.b32.cont [9/16] 0.0, 128
          %3636 = vxpose.xlu0.b32.cont [10/16] 0.0, 128
          %3637 = vxpose.xlu0.b32.cont [11/16] 0.0, 128
          %3638 = vxpose.xlu0.b32.cont [12/16] 0.0, 128
          %3639 = vxpose.xlu0.b32.cont [13/16] 0.0, 128
          %3640 = vxpose.xlu0.b32.cont [14/16] 0.0, 128
          %3641 = vxpose.xlu0.b32.cont [15/16] 0.0, 128
          %3642 = vxpose.xlu0.b32.end [16/16] 0.0, 128
          %v3643 = vpop.trf.xlu0
          %v3644 = vpop.trf.xlu0
          %v3645 = vpop.trf.xlu0
          %v3646 = vpop.trf.xlu0
          %v3647 = vpop.trf.xlu0
          %v3648 = vpop.trf.xlu0
          %v3649 = vpop.trf.xlu0
          %v3650 = vpop.trf.xlu0
          %v3651 = vpop.trf.xlu0
          %v3652 = vpop.trf.xlu0
          %v3653 = vpop.trf.xlu0
          %v3654 = vpop.trf.xlu0
          %v3655 = vpop.trf.xlu0
          %v3656 = vpop.trf.xlu0
          %v3657 = vpop.trf.xlu0
          %v3658 = vpop.trf.xlu0
          %3659 = vxpose.xlu0.b32.start [1/16] %v3593, 128
          %3660 = vxpose.xlu0.b32.cont [2/16] 0.0, 128
          %3661 = vxpose.xlu0.b32.cont [3/16] 0.0, 128
          %3662 = vxpose.xlu0.b32.cont [4/16] 0.0, 128
          %3663 = vxpose.xlu0.b32.cont [5/16] 0.0, 128
          %3664 = vxpose.xlu0.b32.cont [6/16] 0.0, 128
          %3665 = vxpose.xlu0.b32.cont [7/16] 0.0, 128
          %3666 = vxpose.xlu0.b32.cont [8/16] 0.0, 128
          %3667 = vxpose.xlu0.b32.cont [9/16] 0.0, 128
          %3668 = vxpose.xlu0.b32.cont [10/16] 0.0, 128
          %3669 = vxpose.xlu0.b32.cont [11/16] 0.0, 128
          %3670 = vxpose.xlu0.b32.cont [12/16] 0.0, 128
          %3671 = vxpose.xlu0.b32.cont [13/16] 0.0, 128
          %3672 = vxpose.xlu0.b32.cont [14/16] 0.0, 128
          %3673 = vxpose.xlu0.b32.cont [15/16] 0.0, 128
          %3674 = vxpose.xlu0.b32.end [16/16] 0.0, 128
          %v3675 = vpop.trf.xlu0
          %v3676 = vpop.trf.xlu0
          %v3677 = vpop.trf.xlu0
          %v3678 = vpop.trf.xlu0
          %v3679 = vpop.trf.xlu0
          %v3680 = vpop.trf.xlu0
          %v3681 = vpop.trf.xlu0
          %v3682 = vpop.trf.xlu0
          %v3683 = vpop.trf.xlu0
          %v3684 = vpop.trf.xlu0
          %v3685 = vpop.trf.xlu0
          %v3686 = vpop.trf.xlu0
          %v3687 = vpop.trf.xlu0
          %v3688 = vpop.trf.xlu0
          %v3689 = vpop.trf.xlu0
          %v3690 = vpop.trf.xlu0
          %3691 = vxpose.xlu0.b32.start [1/16] %v3594, 128
          %3692 = vxpose.xlu0.b32.cont [2/16] 0.0, 128
          %3693 = vxpose.xlu0.b32.cont [3/16] 0.0, 128
          %3694 = vxpose.xlu0.b32.cont [4/16] 0.0, 128
          %3695 = vxpose.xlu0.b32.cont [5/16] 0.0, 128
          %3696 = vxpose.xlu0.b32.cont [6/16] 0.0, 128
          %3697 = vxpose.xlu0.b32.cont [7/16] 0.0, 128
          %3698 = vxpose.xlu0.b32.cont [8/16] 0.0, 128
          %3699 = vxpose.xlu0.b32.cont [9/16] 0.0, 128
          %3700 = vxpose.xlu0.b32.cont [10/16] 0.0, 128
          %3701 = vxpose.xlu0.b32.cont [11/16] 0.0, 128
          %3702 = vxpose.xlu0.b32.cont [12/16] 0.0, 128
          %3703 = vxpose.xlu0.b32.cont [13/16] 0.0, 128
          %3704 = vxpose.xlu0.b32.cont [14/16] 0.0, 128
          %3705 = vxpose.xlu0.b32.cont [15/16] 0.0, 128
          %3706 = vxpose.xlu0.b32.end [16/16] 0.0, 128
          %v3707 = vpop.trf.xlu0
          %v3708 = vpop.trf.xlu0
          %v3709 = vpop.trf.xlu0
          %v3710 = vpop.trf.xlu0
          %v3711 = vpop.trf.xlu0
          %v3712 = vpop.trf.xlu0
          %v3713 = vpop.trf.xlu0
          %v3714 = vpop.trf.xlu0
          %v3715 = vpop.trf.xlu0
          %v3716 = vpop.trf.xlu0
          %v3717 = vpop.trf.xlu0
          %v3718 = vpop.trf.xlu0
          %v3719 = vpop.trf.xlu0
          %v3720 = vpop.trf.xlu0
          %v3721 = vpop.trf.xlu0
          %v3722 = vpop.trf.xlu0
          %vm3723 = vcmask 64512
          %3724 = vst.msk [vmem:[%s154 + $0x18] sm:$0xff] %vm3723, %v3611
          %3725 = vst.msk [vmem:[%s154 + $0x38] sm:$0xff] %vm3723, %v3643
          %3726 = vst.msk [vmem:[%s154 + $0x58] sm:$0xff] %vm3723, %v3675
          %3727 = vst.msk [vmem:[%s154 + $0x78] sm:$0xff] %vm3723, %v3707
          %v3728 = vld [vmem:[%s135 + $0x18] sm:$0xff]
          %v3729 = vld [vmem:[%s135 + $0x38] sm:$0xff]
          %v3730 = vld [vmem:[%s135 + $0x58] sm:$0xff]
          %v3731 = vld [vmem:[%s135 + $0x78] sm:$0xff]
          %3736 = vrot.lane.b32.xlu0 %v3728, 120
          %v3737 = vpop.permute.xlu0 %3736
          %3738 = vrot.lane.b32.xlu0 %v3729, 120
          %v3739 = vpop.permute.xlu0 %3738
          %3740 = vrot.lane.b32.xlu0 %v3730, 120
          %v3741 = vpop.permute.xlu0 %3740
          %3742 = vrot.lane.b32.xlu0 %v3731, 120
          %v3743 = vpop.permute.xlu0 %3742
          %3748 = vxpose.xlu0.b32.start [1/16] %v3737, 128
          %3749 = vxpose.xlu0.b32.cont [2/16] 0.0, 128
          %3750 = vxpose.xlu0.b32.cont [3/16] 0.0, 128
          %3751 = vxpose.xlu0.b32.cont [4/16] 0.0, 128
          %3752 = vxpose.xlu0.b32.cont [5/16] 0.0, 128
          %3753 = vxpose.xlu0.b32.cont [6/16] 0.0, 128
          %3754 = vxpose.xlu0.b32.cont [7/16] 0.0, 128
          %3755 = vxpose.xlu0.b32.cont [8/16] 0.0, 128
          %3756 = vxpose.xlu0.b32.cont [9/16] 0.0, 128
          %3757 = vxpose.xlu0.b32.cont [10/16] 0.0, 128
          %3758 = vxpose.xlu0.b32.cont [11/16] 0.0, 128
          %3759 = vxpose.xlu0.b32.cont [12/16] 0.0, 128
          %3760 = vxpose.xlu0.b32.cont [13/16] 0.0, 128
          %3761 = vxpose.xlu0.b32.cont [14/16] 0.0, 128
          %3762 = vxpose.xlu0.b32.cont [15/16] 0.0, 128
          %3763 = vxpose.xlu0.b32.end [16/16] 0.0, 128
          %v3764 = vpop.trf.xlu0
          %v3765 = vpop.trf.xlu0
          %v3766 = vpop.trf.xlu0
          %v3767 = vpop.trf.xlu0
          %v3768 = vpop.trf.xlu0
          %v3769 = vpop.trf.xlu0
          %v3770 = vpop.trf.xlu0
          %v3771 = vpop.trf.xlu0
          %v3772 = vpop.trf.xlu0
          %v3773 = vpop.trf.xlu0
          %v3774 = vpop.trf.xlu0
          %v3775 = vpop.trf.xlu0
          %v3776 = vpop.trf.xlu0
          %v3777 = vpop.trf.xlu0
          %v3778 = vpop.trf.xlu0
          %v3779 = vpop.trf.xlu0
          %3780 = vxpose.xlu0.b32.start [1/16] %v3739, 128
          %3781 = vxpose.xlu0.b32.cont [2/16] 0.0, 128
          %3782 = vxpose.xlu0.b32.cont [3/16] 0.0, 128
          %3783 = vxpose.xlu0.b32.cont [4/16] 0.0, 128
          %3784 = vxpose.xlu0.b32.cont [5/16] 0.0, 128
          %3785 = vxpose.xlu0.b32.cont [6/16] 0.0, 128
          %3786 = vxpose.xlu0.b32.cont [7/16] 0.0, 128
          %3787 = vxpose.xlu0.b32.cont [8/16] 0.0, 128
          %3788 = vxpose.xlu0.b32.cont [9/16] 0.0, 128
          %3789 = vxpose.xlu0.b32.cont [10/16] 0.0, 128
          %3790 = vxpose.xlu0.b32.cont [11/16] 0.0, 128
          %3791 = vxpose.xlu0.b32.cont [12/16] 0.0, 128
          %3792 = vxpose.xlu0.b32.cont [13/16] 0.0, 128
          %3793 = vxpose.xlu0.b32.cont [14/16] 0.0, 128
          %3794 = vxpose.xlu0.b32.cont [15/16] 0.0, 128
          %3795 = vxpose.xlu0.b32.end [16/16] 0.0, 128
          %v3796 = vpop.trf.xlu0
          %v3797 = vpop.trf.xlu0
          %v3798 = vpop.trf.xlu0
          %v3799 = vpop.trf.xlu0
          %v3800 = vpop.trf.xlu0
          %v3801 = vpop.trf.xlu0
          %v3802 = vpop.trf.xlu0
          %v3803 = vpop.trf.xlu0
          %v3804 = vpop.trf.xlu0
          %v3805 = vpop.trf.xlu0
          %v3806 = vpop.trf.xlu0
          %v3807 = vpop.trf.xlu0
          %v3808 = vpop.trf.xlu0
          %v3809 = vpop.trf.xlu0
          %v3810 = vpop.trf.xlu0
          %v3811 = vpop.trf.xlu0
          %3812 = vxpose.xlu0.b32.start [1/16] %v3741, 128
          %3813 = vxpose.xlu0.b32.cont [2/16] 0.0, 128
          %3814 = vxpose.xlu0.b32.cont [3/16] 0.0, 128
          %3815 = vxpose.xlu0.b32.cont [4/16] 0.0, 128
          %3816 = vxpose.xlu0.b32.cont [5/16] 0.0, 128
          %3817 = vxpose.xlu0.b32.cont [6/16] 0.0, 128
          %3818 = vxpose.xlu0.b32.cont [7/16] 0.0, 128
          %3819 = vxpose.xlu0.b32.cont [8/16] 0.0, 128
          %3820 = vxpose.xlu0.b32.cont [9/16] 0.0, 128
          %3821 = vxpose.xlu0.b32.cont [10/16] 0.0, 128
          %3822 = vxpose.xlu0.b32.cont [11/16] 0.0, 128
          %3823 = vxpose.xlu0.b32.cont [12/16] 0.0, 128
          %3824 = vxpose.xlu0.b32.cont [13/16] 0.0, 128
          %3825 = vxpose.xlu0.b32.cont [14/16] 0.0, 128
          %3826 = vxpose.xlu0.b32.cont [15/16] 0.0, 128
          %3827 = vxpose.xlu0.b32.end [16/16] 0.0, 128
          %v3828 = vpop.trf.xlu0
          %v3829 = vpop.trf.xlu0
          %v3830 = vpop.trf.xlu0
          %v3831 = vpop.trf.xlu0
          %v3832 = vpop.trf.xlu0
          %v3833 = vpop.trf.xlu0
          %v3834 = vpop.trf.xlu0
          %v3835 = vpop.trf.xlu0
          %v3836 = vpop.trf.xlu0
          %v3837 = vpop.trf.xlu0
          %v3838 = vpop.trf.xlu0
          %v3839 = vpop.trf.xlu0
          %v3840 = vpop.trf.xlu0
          %v3841 = vpop.trf.xlu0
          %v3842 = vpop.trf.xlu0
          %v3843 = vpop.trf.xlu0
          %3844 = vxpose.xlu0.b32.start [1/16] %v3743, 128
          %3845 = vxpose.xlu0.b32.cont [2/16] 0.0, 128
          %3846 = vxpose.xlu0.b32.cont [3/16] 0.0, 128
          %3847 = vxpose.xlu0.b32.cont [4/16] 0.0, 128
          %3848 = vxpose.xlu0.b32.cont [5/16] 0.0, 128
          %3849 = vxpose.xlu0.b32.cont [6/16] 0.0, 128
          %3850 = vxpose.xlu0.b32.cont [7/16] 0.0, 128
          %3851 = vxpose.xlu0.b32.cont [8/16] 0.0, 128
          %3852 = vxpose.xlu0.b32.cont [9/16] 0.0, 128
          %3853 = vxpose.xlu0.b32.cont [10/16] 0.0, 128
          %3854 = vxpose.xlu0.b32.cont [11/16] 0.0, 128
          %3855 = vxpose.xlu0.b32.cont [12/16] 0.0, 128
          %3856 = vxpose.xlu0.b32.cont [13/16] 0.0, 128
          %3857 = vxpose.xlu0.b32.cont [14/16] 0.0, 128
          %3858 = vxpose.xlu0.b32.cont [15/16] 0.0, 128
          %3859 = vxpose.xlu0.b32.end [16/16] 0.0, 128
          %v3860 = vpop.trf.xlu0
          %v3861 = vpop.trf.xlu0
          %v3862 = vpop.trf.xlu0
          %v3863 = vpop.trf.xlu0
          %v3864 = vpop.trf.xlu0
          %v3865 = vpop.trf.xlu0
          %v3866 = vpop.trf.xlu0
          %v3867 = vpop.trf.xlu0
          %v3868 = vpop.trf.xlu0
          %v3869 = vpop.trf.xlu0
          %v3870 = vpop.trf.xlu0
          %v3871 = vpop.trf.xlu0
          %v3872 = vpop.trf.xlu0
          %v3873 = vpop.trf.xlu0
          %v3874 = vpop.trf.xlu0
          %v3875 = vpop.trf.xlu0
          %3880 = vrot.lane.b32.xlu0 %v3764, 8
          %v3881 = vpop.permute.xlu0 %3880
          %3882 = vrot.lane.b32.xlu0 %v3796, 8
          %v3883 = vpop.permute.xlu0 %3882
          %3884 = vrot.lane.b32.xlu0 %v3828, 8
          %v3885 = vpop.permute.xlu0 %3884
          %3886 = vrot.lane.b32.xlu0 %v3860, 8
          %v3887 = vpop.permute.xlu0 %3886
          %vm3892 = vcmask 130112
          %3893 = vst.msk [vmem:[%s154 + $0x18] sm:$0xff] %vm3892, %v3881
          %3894 = vst.msk [vmem:[%s154 + $0x38] sm:$0xff] %vm3892, %v3883
          %3895 = vst.msk [vmem:[%s154 + $0x58] sm:$0xff] %vm3892, %v3885
          %3896 = vst.msk [vmem:[%s154 + $0x78] sm:$0xff] %vm3892, %v3887
          %v3897 = vld [vmem:[%s135 + $0x18] sm:$0xff]
          %v3898 = vld [vmem:[%s135 + $0x38] sm:$0xff]
          %v3899 = vld [vmem:[%s135 + $0x58] sm:$0xff]
          %v3900 = vld [vmem:[%s135 + $0x78] sm:$0xff]
          %3905 = vrot.lane.b32.xlu0 %v3897, 104
          %v3906 = vpop.permute.xlu0 %3905
          %3907 = vrot.lane.b32.xlu0 %v3898, 104
          %v3908 = vpop.permute.xlu0 %3907
          %3909 = vrot.lane.b32.xlu0 %v3899, 104
          %v3910 = vpop.permute.xlu0 %3909
          %3911 = vrot.lane.b32.xlu0 %v3900, 104
          %v3912 = vpop.permute.xlu0 %3911
          %3917 = vxpose.xlu0.b32.start [1/16] %v3906, 128
          %3918 = vxpose.xlu0.b32.cont [2/16] 0.0, 128
          %3919 = vxpose.xlu0.b32.cont [3/16] 0.0, 128
          %3920 = vxpose.xlu0.b32.cont [4/16] 0.0, 128
          %3921 = vxpose.xlu0.b32.cont [5/16] 0.0, 128
          %3922 = vxpose.xlu0.b32.cont [6/16] 0.0, 128
          %3923 = vxpose.xlu0.b32.cont [7/16] 0.0, 128
          %3924 = vxpose.xlu0.b32.cont [8/16] 0.0, 128
          %3925 = vxpose.xlu0.b32.cont [9/16] 0.0, 128
          %3926 = vxpose.xlu0.b32.cont [10/16] 0.0, 128
          %3927 = vxpose.xlu0.b32.cont [11/16] 0.0, 128
          %3928 = vxpose.xlu0.b32.cont [12/16] 0.0, 128
          %3929 = vxpose.xlu0.b32.cont [13/16] 0.0, 128
          %3930 = vxpose.xlu0.b32.cont [14/16] 0.0, 128
          %3931 = vxpose.xlu0.b32.cont [15/16] 0.0, 128
          %3932 = vxpose.xlu0.b32.end [16/16] 0.0, 128
          %v3933 = vpop.trf.xlu0
          %v3934 = vpop.trf.xlu0
          %v3935 = vpop.trf.xlu0
          %v3936 = vpop.trf.xlu0
          %v3937 = vpop.trf.xlu0
          %v3938 = vpop.trf.xlu0
          %v3939 = vpop.trf.xlu0
          %v3940 = vpop.trf.xlu0
          %v3941 = vpop.trf.xlu0
          %v3942 = vpop.trf.xlu0
          %v3943 = vpop.trf.xlu0
          %v3944 = vpop.trf.xlu0
          %v3945 = vpop.trf.xlu0
          %v3946 = vpop.trf.xlu0
          %v3947 = vpop.trf.xlu0
          %v3948 = vpop.trf.xlu0
          %3949 = vxpose.xlu0.b32.start [1/16] %v3908, 128
          %3950 = vxpose.xlu0.b32.cont [2/16] 0.0, 128
          %3951 = vxpose.xlu0.b32.cont [3/16] 0.0, 128
          %3952 = vxpose.xlu0.b32.cont [4/16] 0.0, 128
          %3953 = vxpose.xlu0.b32.cont [5/16] 0.0, 128
          %3954 = vxpose.xlu0.b32.cont [6/16] 0.0, 128
          %3955 = vxpose.xlu0.b32.cont [7/16] 0.0, 128
          %3956 = vxpose.xlu0.b32.cont [8/16] 0.0, 128
          %3957 = vxpose.xlu0.b32.cont [9/16] 0.0, 128
          %3958 = vxpose.xlu0.b32.cont [10/16] 0.0, 128
          %3959 = vxpose.xlu0.b32.cont [11/16] 0.0, 128
          %3960 = vxpose.xlu0.b32.cont [12/16] 0.0, 128
          %3961 = vxpose.xlu0.b32.cont [13/16] 0.0, 128
          %3962 = vxpose.xlu0.b32.cont [14/16] 0.0, 128
          %3963 = vxpose.xlu0.b32.cont [15/16] 0.0, 128
          %3964 = vxpose.xlu0.b32.end [16/16] 0.0, 128
          %v3965 = vpop.trf.xlu0
          %v3966 = vpop.trf.xlu0
          %v3967 = vpop.trf.xlu0
          %v3968 = vpop.trf.xlu0
          %v3969 = vpop.trf.xlu0
          %v3970 = vpop.trf.xlu0
          %v3971 = vpop.trf.xlu0
          %v3972 = vpop.trf.xlu0
          %v3973 = vpop.trf.xlu0
          %v3974 = vpop.trf.xlu0
          %v3975 = vpop.trf.xlu0
          %v3976 = vpop.trf.xlu0
          %v3977 = vpop.trf.xlu0
          %v3978 = vpop.trf.xlu0
          %v3979 = vpop.trf.xlu0
          %v3980 = vpop.trf.xlu0
          %3981 = vxpose.xlu0.b32.start [1/16] %v3910, 128
          %3982 = vxpose.xlu0.b32.cont [2/16] 0.0, 128
          %3983 = vxpose.xlu0.b32.cont [3/16] 0.0, 128
          %3984 = vxpose.xlu0.b32.cont [4/16] 0.0, 128
          %3985 = vxpose.xlu0.b32.cont [5/16] 0.0, 128
          %3986 = vxpose.xlu0.b32.cont [6/16] 0.0, 128
          %3987 = vxpose.xlu0.b32.cont [7/16] 0.0, 128
          %3988 = vxpose.xlu0.b32.cont [8/16] 0.0, 128
          %3989 = vxpose.xlu0.b32.cont [9/16] 0.0, 128
          %3990 = vxpose.xlu0.b32.cont [10/16] 0.0, 128
          %3991 = vxpose.xlu0.b32.cont [11/16] 0.0, 128
          %3992 = vxpose.xlu0.b32.cont [12/16] 0.0, 128
          %3993 = vxpose.xlu0.b32.cont [13/16] 0.0, 128
          %3994 = vxpose.xlu0.b32.cont [14/16] 0.0, 128
          %3995 = vxpose.xlu0.b32.cont [15/16] 0.0, 128
          %3996 = vxpose.xlu0.b32.end [16/16] 0.0, 128
          %v3997 = vpop.trf.xlu0
          %v3998 = vpop.trf.xlu0
          %v3999 = vpop.trf.xlu0
          %v4000 = vpop.trf.xlu0
          %v4001 = vpop.trf.xlu0
          %v4002 = vpop.trf.xlu0
          %v4003 = vpop.trf.xlu0
          %v4004 = vpop.trf.xlu0
          %v4005 = vpop.trf.xlu0
          %v4006 = vpop.trf.xlu0
          %v4007 = vpop.trf.xlu0
          %v4008 = vpop.trf.xlu0
          %v4009 = vpop.trf.xlu0
          %v4010 = vpop.trf.xlu0
          %v4011 = vpop.trf.xlu0
          %v4012 = vpop.trf.xlu0
          %4013 = vxpose.xlu0.b32.start [1/16] %v3912, 128
          %4014 = vxpose.xlu0.b32.cont [2/16] 0.0, 128
          %4015 = vxpose.xlu0.b32.cont [3/16] 0.0, 128
          %4016 = vxpose.xlu0.b32.cont [4/16] 0.0, 128
          %4017 = vxpose.xlu0.b32.cont [5/16] 0.0, 128
          %4018 = vxpose.xlu0.b32.cont [6/16] 0.0, 128
          %4019 = vxpose.xlu0.b32.cont [7/16] 0.0, 128
          %4020 = vxpose.xlu0.b32.cont [8/16] 0.0, 128
          %4021 = vxpose.xlu0.b32.cont [9/16] 0.0, 128
          %4022 = vxpose.xlu0.b32.cont [10/16] 0.0, 128
          %4023 = vxpose.xlu0.b32.cont [11/16] 0.0, 128
          %4024 = vxpose.xlu0.b32.cont [12/16] 0.0, 128
          %4025 = vxpose.xlu0.b32.cont [13/16] 0.0, 128
          %4026 = vxpose.xlu0.b32.cont [14/16] 0.0, 128
          %4027 = vxpose.xlu0.b32.cont [15/16] 0.0, 128
          %4028 = vxpose.xlu0.b32.end [16/16] 0.0, 128
          %v4029 = vpop.trf.xlu0
          %v4030 = vpop.trf.xlu0
          %v4031 = vpop.trf.xlu0
          %v4032 = vpop.trf.xlu0
          %v4033 = vpop.trf.xlu0
          %v4034 = vpop.trf.xlu0
          %v4035 = vpop.trf.xlu0
          %v4036 = vpop.trf.xlu0
          %v4037 = vpop.trf.xlu0
          %v4038 = vpop.trf.xlu0
          %v4039 = vpop.trf.xlu0
          %v4040 = vpop.trf.xlu0
          %v4041 = vpop.trf.xlu0
          %v4042 = vpop.trf.xlu0
          %v4043 = vpop.trf.xlu0
          %v4044 = vpop.trf.xlu0
          %4049 = vrot.lane.b32.xlu0 %v3933, 24
          %v4050 = vpop.permute.xlu0 %4049
          %4051 = vrot.lane.b32.xlu0 %v3965, 24
          %v4052 = vpop.permute.xlu0 %4051
          %4053 = vrot.lane.b32.xlu0 %v3997, 24
          %v4054 = vpop.permute.xlu0 %4053
          %4055 = vrot.lane.b32.xlu0 %v4029, 24
          %v4056 = vpop.permute.xlu0 %4055
          %vm4061 = vcmask 261312
          %4062 = vst.msk [vmem:[%s154 + $0x18] sm:$0xff] %vm4061, %v4050
          %4063 = vst.msk [vmem:[%s154 + $0x38] sm:$0xff] %vm4061, %v4052
          %4064 = vst.msk [vmem:[%s154 + $0x58] sm:$0xff] %vm4061, %v4054
          %4065 = vst.msk [vmem:[%s154 + $0x78] sm:$0xff] %vm4061, %v4056
        $region56: #{tpu_custom_call.1} parent=23 // pred_fallthru
          _
        // Predicated region
        $region57: #{tpu_custom_call.1} parent=23 // pred_check
          %p4066 = pneg %p3578
        $region58: #{tpu_custom_call.1} parent=23 // pred_check_branch
          %4068 = sbr.rel (%p4066) target = $region60
        $region59: #{tpu_custom_call.1} parent=23 // pred_region
          %v4069 = vld [vmem:[%s135 + $0x18] sm:$0xff]
          %v4070 = vld [vmem:[%s135 + $0x38] sm:$0xff]
          %v4071 = vld [vmem:[%s135 + $0x58] sm:$0xff]
          %v4072 = vld [vmem:[%s135 + $0x78] sm:$0xff]
          %4073 = vxpose.xlu0.b32.start [1/16] %v4069, 128
          %4074 = vxpose.xlu0.b32.cont [2/16] 0.0, 128
          %4075 = vxpose.xlu0.b32.cont [3/16] 0.0, 128
          %4076 = vxpose.xlu0.b32.cont [4/16] 0.0, 128
          %4077 = vxpose.xlu0.b32.cont [5/16] 0.0, 128
          %4078 = vxpose.xlu0.b32.cont [6/16] 0.0, 128
          %4079 = vxpose.xlu0.b32.cont [7/16] 0.0, 128
          %4080 = vxpose.xlu0.b32.cont [8/16] 0.0, 128
          %4081 = vxpose.xlu0.b32.cont [9/16] 0.0, 128
          %4082 = vxpose.xlu0.b32.cont [10/16] 0.0, 128
          %4083 = vxpose.xlu0.b32.cont [11/16] 0.0, 128
          %4084 = vxpose.xlu0.b32.cont [12/16] 0.0, 128
          %4085 = vxpose.xlu0.b32.cont [13/16] 0.0, 128
          %4086 = vxpose.xlu0.b32.cont [14/16] 0.0, 128
          %4087 = vxpose.xlu0.b32.cont [15/16] 0.0, 128
          %4088 = vxpose.xlu0.b32.end [16/16] 0.0, 128
          %v4089 = vpop.trf.xlu0
          %v4090 = vpop.trf.xlu0
          %v4091 = vpop.trf.xlu0
          %v4092 = vpop.trf.xlu0
          %v4093 = vpop.trf.xlu0
          %v4094 = vpop.trf.xlu0
          %v4095 = vpop.trf.xlu0
          %v4096 = vpop.trf.xlu0
          %v4097 = vpop.trf.xlu0
          %v4098 = vpop.trf.xlu0
          %v4099 = vpop.trf.xlu0
          %v4100 = vpop.trf.xlu0
          %v4101 = vpop.trf.xlu0
          %v4102 = vpop.trf.xlu0
          %v4103 = vpop.trf.xlu0
          %v4104 = vpop.trf.xlu0
          %4105 = vxpose.xlu0.b32.start [1/16] %v4070, 128
          %4106 = vxpose.xlu0.b32.cont [2/16] 0.0, 128
          %4107 = vxpose.xlu0.b32.cont [3/16] 0.0, 128
          %4108 = vxpose.xlu0.b32.cont [4/16] 0.0, 128
          %4109 = vxpose.xlu0.b32.cont [5/16] 0.0, 128
          %4110 = vxpose.xlu0.b32.cont [6/16] 0.0, 128
          %4111 = vxpose.xlu0.b32.cont [7/16] 0.0, 128
          %4112 = vxpose.xlu0.b32.cont [8/16] 0.0, 128
          %4113 = vxpose.xlu0.b32.cont [9/16] 0.0, 128
          %4114 = vxpose.xlu0.b32.cont [10/16] 0.0, 128
          %4115 = vxpose.xlu0.b32.cont [11/16] 0.0, 128
          %4116 = vxpose.xlu0.b32.cont [12/16] 0.0, 128
          %4117 = vxpose.xlu0.b32.cont [13/16] 0.0, 128
          %4118 = vxpose.xlu0.b32.cont [14/16] 0.0, 128
          %4119 = vxpose.xlu0.b32.cont [15/16] 0.0, 128
          %4120 = vxpose.xlu0.b32.end [16/16] 0.0, 128
          %v4121 = vpop.trf.xlu0
          %v4122 = vpop.trf.xlu0
          %v4123 = vpop.trf.xlu0
          %v4124 = vpop.trf.xlu0
          %v4125 = vpop.trf.xlu0
          %v4126 = vpop.trf.xlu0
          %v4127 = vpop.trf.xlu0
          %v4128 = vpop.trf.xlu0
          %v4129 = vpop.trf.xlu0
          %v4130 = vpop.trf.xlu0
          %v4131 = vpop.trf.xlu0
          %v4132 = vpop.trf.xlu0
          %v4133 = vpop.trf.xlu0
          %v4134 = vpop.trf.xlu0
          %v4135 = vpop.trf.xlu0
          %v4136 = vpop.trf.xlu0
          %4137 = vxpose.xlu0.b32.start [1/16] %v4071, 128
          %4138 = vxpose.xlu0.b32.cont [2/16] 0.0, 128
          %4139 = vxpose.xlu0.b32.cont [3/16] 0.0, 128
          %4140 = vxpose.xlu0.b32.cont [4/16] 0.0, 128
          %4141 = vxpose.xlu0.b32.cont [5/16] 0.0, 128
          %4142 = vxpose.xlu0.b32.cont [6/16] 0.0, 128
          %4143 = vxpose.xlu0.b32.cont [7/16] 0.0, 128
          %4144 = vxpose.xlu0.b32.cont [8/16] 0.0, 128
          %4145 = vxpose.xlu0.b32.cont [9/16] 0.0, 128
          %4146 = vxpose.xlu0.b32.cont [10/16] 0.0, 128
          %4147 = vxpose.xlu0.b32.cont [11/16] 0.0, 128
          %4148 = vxpose.xlu0.b32.cont [12/16] 0.0, 128
          %4149 = vxpose.xlu0.b32.cont [13/16] 0.0, 128
          %4150 = vxpose.xlu0.b32.cont [14/16] 0.0, 128
          %4151 = vxpose.xlu0.b32.cont [15/16] 0.0, 128
          %4152 = vxpose.xlu0.b32.end [16/16] 0.0, 128
          %v4153 = vpop.trf.xlu0
          %v4154 = vpop.trf.xlu0
          %v4155 = vpop.trf.xlu0
          %v4156 = vpop.trf.xlu0
          %v4157 = vpop.trf.xlu0
          %v4158 = vpop.trf.xlu0
          %v4159 = vpop.trf.xlu0
          %v4160 = vpop.trf.xlu0
          %v4161 = vpop.trf.xlu0
          %v4162 = vpop.trf.xlu0
          %v4163 = vpop.trf.xlu0
          %v4164 = vpop.trf.xlu0
          %v4165 = vpop.trf.xlu0
          %v4166 = vpop.trf.xlu0
          %v4167 = vpop.trf.xlu0
          %v4168 = vpop.trf.xlu0
          %4169 = vxpose.xlu0.b32.start [1/16] %v4072, 128
          %4170 = vxpose.xlu0.b32.cont [2/16] 0.0, 128
          %4171 = vxpose.xlu0.b32.cont [3/16] 0.0, 128
          %4172 = vxpose.xlu0.b32.cont [4/16] 0.0, 128
          %4173 = vxpose.xlu0.b32.cont [5/16] 0.0, 128
          %4174 = vxpose.xlu0.b32.cont [6/16] 0.0, 128
          %4175 = vxpose.xlu0.b32.cont [7/16] 0.0, 128
          %4176 = vxpose.xlu0.b32.cont [8/16] 0.0, 128
          %4177 = vxpose.xlu0.b32.cont [9/16] 0.0, 128
          %4178 = vxpose.xlu0.b32.cont [10/16] 0.0, 128
          %4179 = vxpose.xlu0.b32.cont [11/16] 0.0, 128
          %4180 = vxpose.xlu0.b32.cont [12/16] 0.0, 128
          %4181 = vxpose.xlu0.b32.cont [13/16] 0.0, 128
          %4182 = vxpose.xlu0.b32.cont [14/16] 0.0, 128
          %4183 = vxpose.xlu0.b32.cont [15/16] 0.0, 128
          %4184 = vxpose.xlu0.b32.end [16/16] 0.0, 128
          %v4185 = vpop.trf.xlu0
          %v4186 = vpop.trf.xlu0
          %v4187 = vpop.trf.xlu0
          %v4188 = vpop.trf.xlu0
          %v4189 = vpop.trf.xlu0
          %v4190 = vpop.trf.xlu0
          %v4191 = vpop.trf.xlu0
          %v4192 = vpop.trf.xlu0
          %v4193 = vpop.trf.xlu0
          %v4194 = vpop.trf.xlu0
          %v4195 = vpop.trf.xlu0
          %v4196 = vpop.trf.xlu0
          %v4197 = vpop.trf.xlu0
          %v4198 = vpop.trf.xlu0
          %v4199 = vpop.trf.xlu0
          %v4200 = vpop.trf.xlu0
          %vm4201 = vcmask 64512
          %4202 = vst.msk [vmem:[%s154 + $0x18] sm:$0xff] %vm4201, %v4089
          %4203 = vst.msk [vmem:[%s154 + $0x38] sm:$0xff] %vm4201, %v4121
          %4204 = vst.msk [vmem:[%s154 + $0x58] sm:$0xff] %vm4201, %v4153
          %4205 = vst.msk [vmem:[%s154 + $0x78] sm:$0xff] %vm4201, %v4185
          %v4206 = vld [vmem:[%s135 + $0x18] sm:$0xff]
          %v4207 = vld [vmem:[%s135 + $0x38] sm:$0xff]
          %v4208 = vld [vmem:[%s135 + $0x58] sm:$0xff]
          %v4209 = vld [vmem:[%s135 + $0x78] sm:$0xff]
          %4214 = vrot.lane.b32.xlu0 %v4206, 120
          %v4215 = vpop.permute.xlu0 %4214
          %4216 = vrot.lane.b32.xlu0 %v4207, 120
          %v4217 = vpop.permute.xlu0 %4216
          %4218 = vrot.lane.b32.xlu0 %v4208, 120
          %v4219 = vpop.permute.xlu0 %4218
          %4220 = vrot.lane.b32.xlu0 %v4209, 120
          %v4221 = vpop.permute.xlu0 %4220
          %4226 = vxpose.xlu0.b32.start [1/16] %v4215, 128
          %4227 = vxpose.xlu0.b32.cont [2/16] 0.0, 128
          %4228 = vxpose.xlu0.b32.cont [3/16] 0.0, 128
          %4229 = vxpose.xlu0.b32.cont [4/16] 0.0, 128
          %4230 = vxpose.xlu0.b32.cont [5/16] 0.0, 128
          %4231 = vxpose.xlu0.b32.cont [6/16] 0.0, 128
          %4232 = vxpose.xlu0.b32.cont [7/16] 0.0, 128
          %4233 = vxpose.xlu0.b32.cont [8/16] 0.0, 128
          %4234 = vxpose.xlu0.b32.cont [9/16] 0.0, 128
          %4235 = vxpose.xlu0.b32.cont [10/16] 0.0, 128
          %4236 = vxpose.xlu0.b32.cont [11/16] 0.0, 128
          %4237 = vxpose.xlu0.b32.cont [12/16] 0.0, 128
          %4238 = vxpose.xlu0.b32.cont [13/16] 0.0, 128
          %4239 = vxpose.xlu0.b32.cont [14/16] 0.0, 128
          %4240 = vxpose.xlu0.b32.cont [15/16] 0.0, 128
          %4241 = vxpose.xlu0.b32.end [16/16] 0.0, 128
          %v4242 = vpop.trf.xlu0
          %v4243 = vpop.trf.xlu0
          %v4244 = vpop.trf.xlu0
          %v4245 = vpop.trf.xlu0
          %v4246 = vpop.trf.xlu0
          %v4247 = vpop.trf.xlu0
          %v4248 = vpop.trf.xlu0
          %v4249 = vpop.trf.xlu0
          %v4250 = vpop.trf.xlu0
          %v4251 = vpop.trf.xlu0
          %v4252 = vpop.trf.xlu0
          %v4253 = vpop.trf.xlu0
          %v4254 = vpop.trf.xlu0
          %v4255 = vpop.trf.xlu0
          %v4256 = vpop.trf.xlu0
          %v4257 = vpop.trf.xlu0
          %4258 = vxpose.xlu0.b32.start [1/16] %v4217, 128
          %4259 = vxpose.xlu0.b32.cont [2/16] 0.0, 128
          %4260 = vxpose.xlu0.b32.cont [3/16] 0.0, 128
          %4261 = vxpose.xlu0.b32.cont [4/16] 0.0, 128
          %4262 = vxpose.xlu0.b32.cont [5/16] 0.0, 128
          %4263 = vxpose.xlu0.b32.cont [6/16] 0.0, 128
          %4264 = vxpose.xlu0.b32.cont [7/16] 0.0, 128
          %4265 = vxpose.xlu0.b32.cont [8/16] 0.0, 128
          %4266 = vxpose.xlu0.b32.cont [9/16] 0.0, 128
          %4267 = vxpose.xlu0.b32.cont [10/16] 0.0, 128
          %4268 = vxpose.xlu0.b32.cont [11/16] 0.0, 128
          %4269 = vxpose.xlu0.b32.cont [12/16] 0.0, 128
          %4270 = vxpose.xlu0.b32.cont [13/16] 0.0, 128
          %4271 = vxpose.xlu0.b32.cont [14/16] 0.0, 128
          %4272 = vxpose.xlu0.b32.cont [15/16] 0.0, 128
          %4273 = vxpose.xlu0.b32.end [16/16] 0.0, 128
          %v4274 = vpop.trf.xlu0
          %v4275 = vpop.trf.xlu0
          %v4276 = vpop.trf.xlu0
          %v4277 = vpop.trf.xlu0
          %v4278 = vpop.trf.xlu0
          %v4279 = vpop.trf.xlu0
          %v4280 = vpop.trf.xlu0
          %v4281 = vpop.trf.xlu0
          %v4282 = vpop.trf.xlu0
          %v4283 = vpop.trf.xlu0
          %v4284 = vpop.trf.xlu0
          %v4285 = vpop.trf.xlu0
          %v4286 = vpop.trf.xlu0
          %v4287 = vpop.trf.xlu0
          %v4288 = vpop.trf.xlu0
          %v4289 = vpop.trf.xlu0
          %4290 = vxpose.xlu0.b32.start [1/16] %v4219, 128
          %4291 = vxpose.xlu0.b32.cont [2/16] 0.0, 128
          %4292 = vxpose.xlu0.b32.cont [3/16] 0.0, 128
          %4293 = vxpose.xlu0.b32.cont [4/16] 0.0, 128
          %4294 = vxpose.xlu0.b32.cont [5/16] 0.0, 128
          %4295 = vxpose.xlu0.b32.cont [6/16] 0.0, 128
          %4296 = vxpose.xlu0.b32.cont [7/16] 0.0, 128
          %4297 = vxpose.xlu0.b32.cont [8/16] 0.0, 128
          %4298 = vxpose.xlu0.b32.cont [9/16] 0.0, 128
          %4299 = vxpose.xlu0.b32.cont [10/16] 0.0, 128
          %4300 = vxpose.xlu0.b32.cont [11/16] 0.0, 128
          %4301 = vxpose.xlu0.b32.cont [12/16] 0.0, 128
          %4302 = vxpose.xlu0.b32.cont [13/16] 0.0, 128
          %4303 = vxpose.xlu0.b32.cont [14/16] 0.0, 128
          %4304 = vxpose.xlu0.b32.cont [15/16] 0.0, 128
          %4305 = vxpose.xlu0.b32.end [16/16] 0.0, 128
          %v4306 = vpop.trf.xlu0
          %v4307 = vpop.trf.xlu0
          %v4308 = vpop.trf.xlu0
          %v4309 = vpop.trf.xlu0
          %v4310 = vpop.trf.xlu0
          %v4311 = vpop.trf.xlu0
          %v4312 = vpop.trf.xlu0
          %v4313 = vpop.trf.xlu0
          %v4314 = vpop.trf.xlu0
          %v4315 = vpop.trf.xlu0
          %v4316 = vpop.trf.xlu0
          %v4317 = vpop.trf.xlu0
          %v4318 = vpop.trf.xlu0
          %v4319 = vpop.trf.xlu0
          %v4320 = vpop.trf.xlu0
          %v4321 = vpop.trf.xlu0
          %4322 = vxpose.xlu0.b32.start [1/16] %v4221, 128
          %4323 = vxpose.xlu0.b32.cont [2/16] 0.0, 128
          %4324 = vxpose.xlu0.b32.cont [3/16] 0.0, 128
          %4325 = vxpose.xlu0.b32.cont [4/16] 0.0, 128
          %4326 = vxpose.xlu0.b32.cont [5/16] 0.0, 128
          %4327 = vxpose.xlu0.b32.cont [6/16] 0.0, 128
          %4328 = vxpose.xlu0.b32.cont [7/16] 0.0, 128
          %4329 = vxpose.xlu0.b32.cont [8/16] 0.0, 128
          %4330 = vxpose.xlu0.b32.cont [9/16] 0.0, 128
          %4331 = vxpose.xlu0.b32.cont [10/16] 0.0, 128
          %4332 = vxpose.xlu0.b32.cont [11/16] 0.0, 128
          %4333 = vxpose.xlu0.b32.cont [12/16] 0.0, 128
          %4334 = vxpose.xlu0.b32.cont [13/16] 0.0, 128
          %4335 = vxpose.xlu0.b32.cont [14/16] 0.0, 128
          %4336 = vxpose.xlu0.b32.cont [15/16] 0.0, 128
          %4337 = vxpose.xlu0.b32.end [16/16] 0.0, 128
          %v4338 = vpop.trf.xlu0
          %v4339 = vpop.trf.xlu0
          %v4340 = vpop.trf.xlu0
          %v4341 = vpop.trf.xlu0
          %v4342 = vpop.trf.xlu0
          %v4343 = vpop.trf.xlu0
          %v4344 = vpop.trf.xlu0
          %v4345 = vpop.trf.xlu0
          %v4346 = vpop.trf.xlu0
          %v4347 = vpop.trf.xlu0
          %v4348 = vpop.trf.xlu0
          %v4349 = vpop.trf.xlu0
          %v4350 = vpop.trf.xlu0
          %v4351 = vpop.trf.xlu0
          %v4352 = vpop.trf.xlu0
          %v4353 = vpop.trf.xlu0
          %4358 = vrot.lane.b32.xlu0 %v4242, 8
          %v4359 = vpop.permute.xlu0 %4358
          %4360 = vrot.lane.b32.xlu0 %v4274, 8
          %v4361 = vpop.permute.xlu0 %4360
          %4362 = vrot.lane.b32.xlu0 %v4306, 8
          %v4363 = vpop.permute.xlu0 %4362
          %4364 = vrot.lane.b32.xlu0 %v4338, 8
          %v4365 = vpop.permute.xlu0 %4364
          %vm4370 = vcmask 130112
          %4371 = vst.msk [vmem:[%s154 + $0x18] sm:$0xff] %vm4370, %v4359
          %4372 = vst.msk [vmem:[%s154 + $0x38] sm:$0xff] %vm4370, %v4361
          %4373 = vst.msk [vmem:[%s154 + $0x58] sm:$0xff] %vm4370, %v4363
          %4374 = vst.msk [vmem:[%s154 + $0x78] sm:$0xff] %vm4370, %v4365
          %v4375 = vld [vmem:[%s135 + $0x18] sm:$0xff]
          %v4376 = vld [vmem:[%s135 + $0x38] sm:$0xff]
          %v4377 = vld [vmem:[%s135 + $0x58] sm:$0xff]
          %v4378 = vld [vmem:[%s135 + $0x78] sm:$0xff]
          %4383 = vrot.lane.b32.xlu0 %v4375, 112
          %v4384 = vpop.permute.xlu0 %4383
          %4385 = vrot.lane.b32.xlu0 %v4376, 112
          %v4386 = vpop.permute.xlu0 %4385
          %4387 = vrot.lane.b32.xlu0 %v4377, 112
          %v4388 = vpop.permute.xlu0 %4387
          %4389 = vrot.lane.b32.xlu0 %v4378, 112
          %v4390 = vpop.permute.xlu0 %4389
          %4395 = vxpose.xlu0.b32.start [1/16] %v4384, 128
          %4396 = vxpose.xlu0.b32.cont [2/16] 0.0, 128
          %4397 = vxpose.xlu0.b32.cont [3/16] 0.0, 128
          %4398 = vxpose.xlu0.b32.cont [4/16] 0.0, 128
          %4399 = vxpose.xlu0.b32.cont [5/16] 0.0, 128
          %4400 = vxpose.xlu0.b32.cont [6/16] 0.0, 128
          %4401 = vxpose.xlu0.b32.cont [7/16] 0.0, 128
          %4402 = vxpose.xlu0.b32.cont [8/16] 0.0, 128
          %4403 = vxpose.xlu0.b32.cont [9/16] 0.0, 128
          %4404 = vxpose.xlu0.b32.cont [10/16] 0.0, 128
          %4405 = vxpose.xlu0.b32.cont [11/16] 0.0, 128
          %4406 = vxpose.xlu0.b32.cont [12/16] 0.0, 128
          %4407 = vxpose.xlu0.b32.cont [13/16] 0.0, 128
          %4408 = vxpose.xlu0.b32.cont [14/16] 0.0, 128
          %4409 = vxpose.xlu0.b32.cont [15/16] 0.0, 128
          %4410 = vxpose.xlu0.b32.end [16/16] 0.0, 128
          %v4411 = vpop.trf.xlu0
          %v4412 = vpop.trf.xlu0
          %v4413 = vpop.trf.xlu0
          %v4414 = vpop.trf.xlu0
          %v4415 = vpop.trf.xlu0
          %v4416 = vpop.trf.xlu0
          %v4417 = vpop.trf.xlu0
          %v4418 = vpop.trf.xlu0
          %v4419 = vpop.trf.xlu0
          %v4420 = vpop.trf.xlu0
          %v4421 = vpop.trf.xlu0
          %v4422 = vpop.trf.xlu0
          %v4423 = vpop.trf.xlu0
          %v4424 = vpop.trf.xlu0
          %v4425 = vpop.trf.xlu0
          %v4426 = vpop.trf.xlu0
          %4427 = vxpose.xlu0.b32.start [1/16] %v4386, 128
          %4428 = vxpose.xlu0.b32.cont [2/16] 0.0, 128
          %4429 = vxpose.xlu0.b32.cont [3/16] 0.0, 128
          %4430 = vxpose.xlu0.b32.cont [4/16] 0.0, 128
          %4431 = vxpose.xlu0.b32.cont [5/16] 0.0, 128
          %4432 = vxpose.xlu0.b32.cont [6/16] 0.0, 128
          %4433 = vxpose.xlu0.b32.cont [7/16] 0.0, 128
          %4434 = vxpose.xlu0.b32.cont [8/16] 0.0, 128
          %4435 = vxpose.xlu0.b32.cont [9/16] 0.0, 128
          %4436 = vxpose.xlu0.b32.cont [10/16] 0.0, 128
          %4437 = vxpose.xlu0.b32.cont [11/16] 0.0, 128
          %4438 = vxpose.xlu0.b32.cont [12/16] 0.0, 128
          %4439 = vxpose.xlu0.b32.cont [13/16] 0.0, 128
          %4440 = vxpose.xlu0.b32.cont [14/16] 0.0, 128
          %4441 = vxpose.xlu0.b32.cont [15/16] 0.0, 128
          %4442 = vxpose.xlu0.b32.end [16/16] 0.0, 128
          %v4443 = vpop.trf.xlu0
          %v4444 = vpop.trf.xlu0
          %v4445 = vpop.trf.xlu0
          %v4446 = vpop.trf.xlu0
          %v4447 = vpop.trf.xlu0
          %v4448 = vpop.trf.xlu0
          %v4449 = vpop.trf.xlu0
          %v4450 = vpop.trf.xlu0
          %v4451 = vpop.trf.xlu0
          %v4452 = vpop.trf.xlu0
          %v4453 = vpop.trf.xlu0
          %v4454 = vpop.trf.xlu0
          %v4455 = vpop.trf.xlu0
          %v4456 = vpop.trf.xlu0
          %v4457 = vpop.trf.xlu0
          %v4458 = vpop.trf.xlu0
          %4459 = vxpose.xlu0.b32.start [1/16] %v4388, 128
          %4460 = vxpose.xlu0.b32.cont [2/16] 0.0, 128
          %4461 = vxpose.xlu0.b32.cont [3/16] 0.0, 128
          %4462 = vxpose.xlu0.b32.cont [4/16] 0.0, 128
          %4463 = vxpose.xlu0.b32.cont [5/16] 0.0, 128
          %4464 = vxpose.xlu0.b32.cont [6/16] 0.0, 128
          %4465 = vxpose.xlu0.b32.cont [7/16] 0.0, 128
          %4466 = vxpose.xlu0.b32.cont [8/16] 0.0, 128
          %4467 = vxpose.xlu0.b32.cont [9/16] 0.0, 128
          %4468 = vxpose.xlu0.b32.cont [10/16] 0.0, 128
          %4469 = vxpose.xlu0.b32.cont [11/16] 0.0, 128
          %4470 = vxpose.xlu0.b32.cont [12/16] 0.0, 128
          %4471 = vxpose.xlu0.b32.cont [13/16] 0.0, 128
          %4472 = vxpose.xlu0.b32.cont [14/16] 0.0, 128
          %4473 = vxpose.xlu0.b32.cont [15/16] 0.0, 128
          %4474 = vxpose.xlu0.b32.end [16/16] 0.0, 128
          %v4475 = vpop.trf.xlu0
          %v4476 = vpop.trf.xlu0
          %v4477 = vpop.trf.xlu0
          %v4478 = vpop.trf.xlu0
          %v4479 = vpop.trf.xlu0
          %v4480 = vpop.trf.xlu0
          %v4481 = vpop.trf.xlu0
          %v4482 = vpop.trf.xlu0
          %v4483 = vpop.trf.xlu0
          %v4484 = vpop.trf.xlu0
          %v4485 = vpop.trf.xlu0
          %v4486 = vpop.trf.xlu0
          %v4487 = vpop.trf.xlu0
          %v4488 = vpop.trf.xlu0
          %v4489 = vpop.trf.xlu0
          %v4490 = vpop.trf.xlu0
          %4491 = vxpose.xlu0.b32.start [1/16] %v4390, 128
          %4492 = vxpose.xlu0.b32.cont [2/16] 0.0, 128
          %4493 = vxpose.xlu0.b32.cont [3/16] 0.0, 128
          %4494 = vxpose.xlu0.b32.cont [4/16] 0.0, 128
          %4495 = vxpose.xlu0.b32.cont [5/16] 0.0, 128
          %4496 = vxpose.xlu0.b32.cont [6/16] 0.0, 128
          %4497 = vxpose.xlu0.b32.cont [7/16] 0.0, 128
          %4498 = vxpose.xlu0.b32.cont [8/16] 0.0, 128
          %4499 = vxpose.xlu0.b32.cont [9/16] 0.0, 128
          %4500 = vxpose.xlu0.b32.cont [10/16] 0.0, 128
          %4501 = vxpose.xlu0.b32.cont [11/16] 0.0, 128
          %4502 = vxpose.xlu0.b32.cont [12/16] 0.0, 128
          %4503 = vxpose.xlu0.b32.cont [13/16] 0.0, 128
          %4504 = vxpose.xlu0.b32.cont [14/16] 0.0, 128
          %4505 = vxpose.xlu0.b32.cont [15/16] 0.0, 128
          %4506 = vxpose.xlu0.b32.end [16/16] 0.0, 128
          %v4507 = vpop.trf.xlu0
          %v4508 = vpop.trf.xlu0
          %v4509 = vpop.trf.xlu0
          %v4510 = vpop.trf.xlu0
          %v4511 = vpop.trf.xlu0
          %v4512 = vpop.trf.xlu0
          %v4513 = vpop.trf.xlu0
          %v4514 = vpop.trf.xlu0
          %v4515 = vpop.trf.xlu0
          %v4516 = vpop.trf.xlu0
          %v4517 = vpop.trf.xlu0
          %v4518 = vpop.trf.xlu0
          %v4519 = vpop.trf.xlu0
          %v4520 = vpop.trf.xlu0
          %v4521 = vpop.trf.xlu0
          %v4522 = vpop.trf.xlu0
          %4527 = vrot.lane.b32.xlu0 %v4411, 16
          %v4528 = vpop.permute.xlu0 %4527
          %4529 = vrot.lane.b32.xlu0 %v4443, 16
          %v4530 = vpop.permute.xlu0 %4529
          %4531 = vrot.lane.b32.xlu0 %v4475, 16
          %v4532 = vpop.permute.xlu0 %4531
          %4533 = vrot.lane.b32.xlu0 %v4507, 16
          %v4534 = vpop.permute.xlu0 %4533
          %vm4539 = vcmask 195712
          %4540 = vst.msk [vmem:[%s154 + $0x18] sm:$0xff] %vm4539, %v4528
          %4541 = vst.msk [vmem:[%s154 + $0x38] sm:$0xff] %vm4539, %v4530
          %4542 = vst.msk [vmem:[%s154 + $0x58] sm:$0xff] %vm4539, %v4532
          %4543 = vst.msk [vmem:[%s154 + $0x78] sm:$0xff] %vm4539, %v4534
          %v4544 = vld [vmem:[%s135 + $0x18] sm:$0xff]
          %v4545 = vld [vmem:[%s135 + $0x38] sm:$0xff]
          %v4546 = vld [vmem:[%s135 + $0x58] sm:$0xff]
          %v4547 = vld [vmem:[%s135 + $0x78] sm:$0xff]
          %4552 = vrot.lane.b32.xlu0 %v4544, 104
          %v4553 = vpop.permute.xlu0 %4552
          %4554 = vrot.lane.b32.xlu0 %v4545, 104
          %v4555 = vpop.permute.xlu0 %4554
          %4556 = vrot.lane.b32.xlu0 %v4546, 104
          %v4557 = vpop.permute.xlu0 %4556
          %4558 = vrot.lane.b32.xlu0 %v4547, 104
          %v4559 = vpop.permute.xlu0 %4558
          %4564 = vxpose.xlu0.b32.start [1/16] %v4553, 128
          %4565 = vxpose.xlu0.b32.cont [2/16] 0.0, 128
          %4566 = vxpose.xlu0.b32.cont [3/16] 0.0, 128
          %4567 = vxpose.xlu0.b32.cont [4/16] 0.0, 128
          %4568 = vxpose.xlu0.b32.cont [5/16] 0.0, 128
          %4569 = vxpose.xlu0.b32.cont [6/16] 0.0, 128
          %4570 = vxpose.xlu0.b32.cont [7/16] 0.0, 128
          %4571 = vxpose.xlu0.b32.cont [8/16] 0.0, 128
          %4572 = vxpose.xlu0.b32.cont [9/16] 0.0, 128
          %4573 = vxpose.xlu0.b32.cont [10/16] 0.0, 128
          %4574 = vxpose.xlu0.b32.cont [11/16] 0.0, 128
          %4575 = vxpose.xlu0.b32.cont [12/16] 0.0, 128
          %4576 = vxpose.xlu0.b32.cont [13/16] 0.0, 128
          %4577 = vxpose.xlu0.b32.cont [14/16] 0.0, 128
          %4578 = vxpose.xlu0.b32.cont [15/16] 0.0, 128
          %4579 = vxpose.xlu0.b32.end [16/16] 0.0, 128
          %v4580 = vpop.trf.xlu0
          %v4581 = vpop.trf.xlu0
          %v4582 = vpop.trf.xlu0
          %v4583 = vpop.trf.xlu0
          %v4584 = vpop.trf.xlu0
          %v4585 = vpop.trf.xlu0
          %v4586 = vpop.trf.xlu0
          %v4587 = vpop.trf.xlu0
          %v4588 = vpop.trf.xlu0
          %v4589 = vpop.trf.xlu0
          %v4590 = vpop.trf.xlu0
          %v4591 = vpop.trf.xlu0
          %v4592 = vpop.trf.xlu0
          %v4593 = vpop.trf.xlu0
          %v4594 = vpop.trf.xlu0
          %v4595 = vpop.trf.xlu0
          %4596 = vxpose.xlu0.b32.start [1/16] %v4555, 128
          %4597 = vxpose.xlu0.b32.cont [2/16] 0.0, 128
          %4598 = vxpose.xlu0.b32.cont [3/16] 0.0, 128
          %4599 = vxpose.xlu0.b32.cont [4/16] 0.0, 128
          %4600 = vxpose.xlu0.b32.cont [5/16] 0.0, 128
          %4601 = vxpose.xlu0.b32.cont [6/16] 0.0, 128
          %4602 = vxpose.xlu0.b32.cont [7/16] 0.0, 128
          %4603 = vxpose.xlu0.b32.cont [8/16] 0.0, 128
          %4604 = vxpose.xlu0.b32.cont [9/16] 0.0, 128
          %4605 = vxpose.xlu0.b32.cont [10/16] 0.0, 128
          %4606 = vxpose.xlu0.b32.cont [11/16] 0.0, 128
          %4607 = vxpose.xlu0.b32.cont [12/16] 0.0, 128
          %4608 = vxpose.xlu0.b32.cont [13/16] 0.0, 128
          %4609 = vxpose.xlu0.b32.cont [14/16] 0.0, 128
          %4610 = vxpose.xlu0.b32.cont [15/16] 0.0, 128
          %4611 = vxpose.xlu0.b32.end [16/16] 0.0, 128
          %v4612 = vpop.trf.xlu0
          %v4613 = vpop.trf.xlu0
          %v4614 = vpop.trf.xlu0
          %v4615 = vpop.trf.xlu0
          %v4616 = vpop.trf.xlu0
          %v4617 = vpop.trf.xlu0
          %v4618 = vpop.trf.xlu0
          %v4619 = vpop.trf.xlu0
          %v4620 = vpop.trf.xlu0
          %v4621 = vpop.trf.xlu0
          %v4622 = vpop.trf.xlu0
          %v4623 = vpop.trf.xlu0
          %v4624 = vpop.trf.xlu0
          %v4625 = vpop.trf.xlu0
          %v4626 = vpop.trf.xlu0
          %v4627 = vpop.trf.xlu0
          %4628 = vxpose.xlu0.b32.start [1/16] %v4557, 128
          %4629 = vxpose.xlu0.b32.cont [2/16] 0.0, 128
          %4630 = vxpose.xlu0.b32.cont [3/16] 0.0, 128
          %4631 = vxpose.xlu0.b32.cont [4/16] 0.0, 128
          %4632 = vxpose.xlu0.b32.cont [5/16] 0.0, 128
          %4633 = vxpose.xlu0.b32.cont [6/16] 0.0, 128
          %4634 = vxpose.xlu0.b32.cont [7/16] 0.0, 128
          %4635 = vxpose.xlu0.b32.cont [8/16] 0.0, 128
          %4636 = vxpose.xlu0.b32.cont [9/16] 0.0, 128
          %4637 = vxpose.xlu0.b32.cont [10/16] 0.0, 128
          %4638 = vxpose.xlu0.b32.cont [11/16] 0.0, 128
          %4639 = vxpose.xlu0.b32.cont [12/16] 0.0, 128
          %4640 = vxpose.xlu0.b32.cont [13/16] 0.0, 128
          %4641 = vxpose.xlu0.b32.cont [14/16] 0.0, 128
          %4642 = vxpose.xlu0.b32.cont [15/16] 0.0, 128
          %4643 = vxpose.xlu0.b32.end [16/16] 0.0, 128
          %v4644 = vpop.trf.xlu0
          %v4645 = vpop.trf.xlu0
          %v4646 = vpop.trf.xlu0
          %v4647 = vpop.trf.xlu0
          %v4648 = vpop.trf.xlu0
          %v4649 = vpop.trf.xlu0
          %v4650 = vpop.trf.xlu0
          %v4651 = vpop.trf.xlu0
          %v4652 = vpop.trf.xlu0
          %v4653 = vpop.trf.xlu0
          %v4654 = vpop.trf.xlu0
          %v4655 = vpop.trf.xlu0
          %v4656 = vpop.trf.xlu0
          %v4657 = vpop.trf.xlu0
          %v4658 = vpop.trf.xlu0
          %v4659 = vpop.trf.xlu0
          %4660 = vxpose.xlu0.b32.start [1/16] %v4559, 128
          %4661 = vxpose.xlu0.b32.cont [2/16] 0.0, 128
          %4662 = vxpose.xlu0.b32.cont [3/16] 0.0, 128
          %4663 = vxpose.xlu0.b32.cont [4/16] 0.0, 128
          %4664 = vxpose.xlu0.b32.cont [5/16] 0.0, 128
          %4665 = vxpose.xlu0.b32.cont [6/16] 0.0, 128
          %4666 = vxpose.xlu0.b32.cont [7/16] 0.0, 128
          %4667 = vxpose.xlu0.b32.cont [8/16] 0.0, 128
          %4668 = vxpose.xlu0.b32.cont [9/16] 0.0, 128
          %4669 = vxpose.xlu0.b32.cont [10/16] 0.0, 128
          %4670 = vxpose.xlu0.b32.cont [11/16] 0.0, 128
          %4671 = vxpose.xlu0.b32.cont [12/16] 0.0, 128
          %4672 = vxpose.xlu0.b32.cont [13/16] 0.0, 128
          %4673 = vxpose.xlu0.b32.cont [14/16] 0.0, 128
          %4674 = vxpose.xlu0.b32.cont [15/16] 0.0, 128
          %4675 = vxpose.xlu0.b32.end [16/16] 0.0, 128
          %v4676 = vpop.trf.xlu0
          %v4677 = vpop.trf.xlu0
          %v4678 = vpop.trf.xlu0
          %v4679 = vpop.trf.xlu0
          %v4680 = vpop.trf.xlu0
          %v4681 = vpop.trf.xlu0
          %v4682 = vpop.trf.xlu0
          %v4683 = vpop.trf.xlu0
          %v4684 = vpop.trf.xlu0
          %v4685 = vpop.trf.xlu0
          %v4686 = vpop.trf.xlu0
          %v4687 = vpop.trf.xlu0
          %v4688 = vpop.trf.xlu0
          %v4689 = vpop.trf.xlu0
          %v4690 = vpop.trf.xlu0
          %v4691 = vpop.trf.xlu0
          %4696 = vrot.lane.b32.xlu0 %v4580, 24
          %v4697 = vpop.permute.xlu0 %4696
          %4698 = vrot.lane.b32.xlu0 %v4612, 24
          %v4699 = vpop.permute.xlu0 %4698
          %4700 = vrot.lane.b32.xlu0 %v4644, 24
          %v4701 = vpop.permute.xlu0 %4700
          %4702 = vrot.lane.b32.xlu0 %v4676, 24
          %v4703 = vpop.permute.xlu0 %4702
          %vm4708 = vcmask 261312
          %4709 = vst.msk [vmem:[%s154 + $0x18] sm:$0xff] %vm4708, %v4697
          %4710 = vst.msk [vmem:[%s154 + $0x38] sm:$0xff] %vm4708, %v4699
          %4711 = vst.msk [vmem:[%s154 + $0x58] sm:$0xff] %vm4708, %v4701
          %4712 = vst.msk [vmem:[%s154 + $0x78] sm:$0xff] %vm4708, %v4703
        $region60: #{tpu_custom_call.1} parent=23 // pred_fallthru
          _
        %s4713 = sand.u32 %s68, 1
        %s4714 = scalar_lea.sflag [#allocation4], %s4713
        %s4715 = sand.u32 %s68, 1
        %s4716 = smul.addr %s4715, 128
        %s4717 = scalar_lea.vmem [#allocation5], %s4716
        // Predicated region
        $region61: #{tpu_custom_call.1} parent=23 // pred_check
          %p4718 = pneg %p78
        $region62: #{tpu_custom_call.1} parent=23 // pred_check_branch
          %4720 = sbr.rel (%p4718) target = $region64
        $region63: #{tpu_custom_call.1} parent=23 // pred_region
          %s4721 = smul.u32 4, %s23
          %4723 = vsyncadd %s4714, 0
          %s4724 = smul.addr %s22, 16
          %s4725 = sadd.s32 %s4721, %s4724
          %s4726 = smul.addr %s4725, 8
          %s4727 = scalar_lea.hbm %s1, %s4726
          %s4728 = sshll.u32 %s4717, 4
          %s4729 = int_to_ptr.vmem [resolvable:$true] %s4728
          %s4730 = sshll.u32 %s4727, 4
          %s4731 = int_to_ptr.hbm [resolvable:$true] %s4730
          %4736 = dma.vmem_to_hbm [thread:$0]  %s4729, 2048, %s4731, %s4714, 128, 128, 8
        $region64: #{tpu_custom_call.1} parent=23 // pred_fallthru
          _
      $region24: #{tpu_custom_call.1} parent=5 // pred_fallthru
        _
      %p4737 = scmp.le.s32.totalorder 2, %s13
      // Predicated region
      $region65: #{tpu_custom_call.1} parent=5 // pred_check
        %p4738 = pneg %p4737
      $region66: #{tpu_custom_call.1} parent=5 // pred_check_branch
        %4740 = sbr.rel (%p4738) target = $region68
      $region67: #{tpu_custom_call.1} parent=5 // pred_region
        %s4741 = ssub.s32 %s13, 2
        // Predicated region
        $region69: #{tpu_custom_call.1} parent=67 // pred_check
          %p4742 = pneg %p84
        $region70: #{tpu_custom_call.1} parent=67 // pred_check_branch
          %4744 = sbr.rel (%p4742) target = $region72
        $region71: #{tpu_custom_call.1} parent=67 // pred_region
          %s4745 = sand.u32 %s69, 1
          %s4746 = scalar_lea.sflag [#allocation4], %s4745
          %s4747 = sand.u32 %s69, 1
          %s4748 = smul.addr %s4747, 128
          %s4749 = scalar_lea.vmem [#allocation5], %s4748
          %4751 = dma.done %s4746, 2048
        $region72: #{tpu_custom_call.1} parent=67 // pred_fallthru
          _
      $region68: #{tpu_custom_call.1} parent=5 // pred_fallthru
        _
    $region6: #{tpu_custom_call.1} parent=1 // loop_footer
      %s17 = sadd.s32 1, %s13
    $region7: #{tpu_custom_call.1} parent=1 // loop_footer_branch
      %12 = sbr.rel target = $region3
    $region8: #{tpu_custom_call.1} parent=1 // loop_exit
      _
    %4752 = vsyncpa [#allocation3], 1
    %s4753 = scalar_lea.sflag [#allocation3], 1
    %4754 = vsyncpa %s4753, 1
    %4755 = vsyncpa [#allocation4], 1
    %s4756 = scalar_lea.sflag [#allocation4], 1
    %4757 = vsyncpa %s4756, 1

</llo_original>
